<compile_context>
chip_gen: v5e
topology: v5e:2x2
jax: 0.10.0
libtpu: 0.0.40
codegen_flags: <defaults>
</compile_context>

<pallas_src>
import jax
import jax.numpy as jnp
import numpy as np
from jax.experimental import pallas as pl
from jax.experimental.pallas import tpu as pltpu


# ----------------------------------------------------------------------------
# Fused kernel: 2-layer BiLSTM + attention softmax pooling + linear, per batch tile
# ----------------------------------------------------------------------------
def _make_kernel(T, TB, H):
    H2, H4, H8 = 2 * H, 4 * H, 8 * H
    unroll = True if T <= 16 else 4
    align = TB & (-TB)  # largest power-of-two divisor of TB (TB is a multiple of 8)
    bf16 = jnp.bfloat16
    f32 = jnp.float32

    def kernel(x_ref,
               wih0_ref, whh0f_ref, whh0b_ref, b0_ref,
               wih1_ref, whh1f_ref, whh1b_ref, b1_ref,
               watt_ref, linw_ref, linb_ref,
               y_ref,
               pre_ref, seqf_ref, seqb_ref, s_ref):
        """Refs (rows within a tile are flattened time-major: row = t*TB + local_batch):
           x_ref:      (T*TB, In)  f32
           wih0:       (In, 8H)    bf16   input->gates layer 0, cols = [fwd i,f,g,o | bwd i,f,g,o]
           whh{0,1}{f,b}: (H, 4H)  bf16   per-direction recurrent weights
           wih1:       (2H, 8H)    bf16   rows 0:H act on fwd hidden, H:2H on bwd hidden
           b{0,1}:     (1, 8H)     f32    b_ih + b_hh, both directions
           watt:       (2H, 1) f32, linw: (2H, O) f32, linb: (1, O) f32
           y_ref:      (TB, O)     f32
           pre_ref:    (T*TB, 8H)  f32 scratch (hoisted input projection)
           seqf/seqb:  (T*TB, H)   f32 scratch (per-direction hidden sequences)
           s_ref:      (T*TB, 1)   f32 scratch (attention logits)
        """

        def recurrence(whhf_ref, whhb_ref):
            whh_f = whhf_ref[...]          # (H, 4H) bf16, hoisted out of the time loop
            whh_b = whhb_ref[...]

            def step(t, carry):
                h_f, c_f, h_b, c_b = carry
                rf = pl.multiple_of(t * TB, align)              # forward rows (time t)
                rb = pl.multiple_of((T - 1 - t) * TB, align)    # backward rows (time T-1-t)
                rec_f = jnp.dot(h_f.astype(bf16), whh_f, preferred_element_type=f32)
                rec_b = jnp.dot(h_b.astype(bf16), whh_b, preferred_element_type=f32)
                g_f = pre_ref[pl.ds(rf, TB), 0:H4] + rec_f
                g_b = pre_ref[pl.ds(rb, TB), H4:H8] + rec_b

                def cell(g, c):
                    i = jax.nn.sigmoid(g[:, 0:H])
                    f = jax.nn.sigmoid(g[:, H:2 * H])
                    gg = jnp.tanh(g[:, 2 * H:3 * H])
                    o = jax.nn.sigmoid(g[:, 3 * H:4 * H])
                    c_new = f * c + i * gg
                    return o * jnp.tanh(c_new), c_new

                h_f, c_f = cell(g_f, c_f)
                h_b, c_b = cell(g_b, c_b)
                # Full-last-dim stores; backward hidden lands directly at time T-1-t.
                seqf_ref[pl.ds(rf, TB), :] = h_f
                seqb_ref[pl.ds(rb, TB), :] = h_b
                return h_f, c_f, h_b, c_b

            z = jnp.zeros((TB, H), f32)
            jax.lax.fori_loop(0, T, step, (z, z, z, z), unroll=unroll)

        # ---- Layer 0: hoisted input projection = ONE big bf16 MXU matmul over the sequence ----
        pre_ref[...] = (jnp.dot(x_ref[...].astype(bf16), wih0_ref[...],
                                preferred_element_type=f32) + b0_ref[...])
        recurrence(whh0f_ref, whh0b_ref)

        # ---- Layer 1: projection reads layer-0 output straight from VMEM (never hits HBM) ----
        # TODO(synk): for very long T, time-chunk pre_ref (per-direction chunk buffers) to
        # decouple VMEM from T on v7x's 64 MiB VMEM.
        pre_ref[...] = (jnp.dot(seqf_ref[...].astype(bf16), wih1_ref[0:H, :],
                                preferred_element_type=f32)
                        + jnp.dot(seqb_ref[...].astype(bf16), wih1_ref[H:H2, :],
                                  preferred_element_type=f32)
                        + b1_ref[...])
        recurrence(whh1f_ref, whh1b_ref)

        # ---- Attention logits: tanh(out) @ w, hoisted over the whole tile (internal scratch) ----
        s_ref[...] = (jnp.dot(jnp.tanh(seqf_ref[...]), watt_ref[0:H, :],
                              preferred_element_type=f32)
                      + jnp.dot(jnp.tanh(seqb_ref[...]), watt_ref[H:H2, :],
                                preferred_element_type=f32))

        # ---- Softmax over time + pooling + final linear, all in VMEM ----
        def max_step(t, m):
            r = pl.multiple_of(t * TB, align)
            return jnp.maximum(m, s_ref[pl.ds(r, TB), :])

        m = jax.lax.fori_loop(0, T, max_step,
                              jnp.full((TB, 1), -jnp.inf, f32), unroll=unroll)

        def pool_step(t, carry):
            denom, pf, pb = carry
            r = pl.multiple_of(t * TB, align)
            e = jnp.exp(s_ref[pl.ds(r, TB), :] - m)            # (TB, 1)
            pf = pf + e * seqf_ref[pl.ds(r, TB), :]
            pb = pb + e * seqb_ref[pl.ds(r, TB), :]
            return denom + e, pf, pb

        denom, pf, pb = jax.lax.fori_loop(
            0, T, pool_step,
            (jnp.zeros((TB, 1), f32), jnp.zeros((TB, H), f32), jnp.zeros((TB, H), f32)),
            unroll=unroll)

        inv = 1.0 / denom
        # TODO(synk): nn.Dropout(linear_dropout) is identity in eval mode; not applied.
        y_ref[...] = (jnp.dot(pf * inv, linw_ref[0:H, :], preferred_element_type=f32)
                      + jnp.dot(pb * inv, linw_ref[H:H2, :], preferred_element_type=f32)
                      + linb_ref[...])

    return kernel


# ----------------------------------------------------------------------------
# Wrapper
# ----------------------------------------------------------------------------
def att_blstm_forward(packed, x):
    """x: (B, T, input_size) float32 -> (B, output_size) float32."""
    B, T, In = x.shape
    wih0, whh0f, whh0b, b0 = packed["layers"][0]
    wih1, whh1f, whh1b, b1 = packed["layers"][1]
    H = whh0f.shape[0]
    assert H % 8 == 0, "hidden_dim must be a multiple of 8"
    H2, H4, H8 = 2 * H, 4 * H, 8 * H
    O = packed["lin_w"].shape[1]

    # ---- Batch tiling: pad to a multiple of 8; prefer one big tile (Bt=1) if it fits VMEM ----
    B_pad = ((B + 7) // 8) * 8

    def tile_bytes(tb):
        rows = T * tb
        by = 2 * rows * In * 4                 # x block (double-buffered by the pipeline)
        by += rows * H8 * 4                    # pre scratch
        by += 2 * rows * H * 4                 # seq_f / seq_b scratch
        by += rows * 128 * 4                   # logits scratch (lane-padded)
        by += 2 * tb * 128 * 4                 # y block (lane-padded, double-buffered)
        by += 2 * 2 * (In * H8 + H2 * H8 + 4 * H * H4)   # bf16 weights, both layers
        by += 4 * (2 * H8 + H2 * (1 + O) + O)            # f32 biases / attention / linear
        return by

    budget = 36 * 1024 * 1024                  # keep the tile well inside v7x's 64 MiB VMEM
    TB = None
    for tb in range(B_pad, 7, -8):             # largest multiple-of-8 divisor of B_pad that fits
        if B_pad % tb == 0 and tile_bytes(tb) <= budget:
            TB = tb
            break
    if TB is None:
        TB = 8  # TODO(synk): time-chunk pre_ref instead of shrinking TB for very long sequences
    Bt = B_pad // TB
    # TODO(synk): on v7x (2 TensorCores) prefer Bt a multiple of 2 so the "parallel" batch axis
    # actually shards across both cores.

    if B_pad != B:
        x = jnp.pad(x, ((0, B_pad - B), (0, 0), (0, 0)))

    # Pack input into per-batch-tile, time-major, flattened slabs: row = t*TB + local_batch.
    x_p = x.reshape(Bt, TB, T, In).transpose(0, 2, 1, 3).reshape(Bt, T * TB, In)

    kernel = _make_kernel(T, TB, H)

    flops = int(2 * B_pad * T * (In * H8)                 # layer-0 input projection
                + 2 * B_pad * T * (H2 * H8)               # layer-1 input projection
                + 2 * 2 * 2 * B_pad * T * (H * H4)        # recurrences (2 layers x 2 dirs)
                + 2 * B_pad * T * H2                      # attention logits
                + 2 * B_pad * H2 * O)                     # final linear
    transcendentals = int(B_pad * T * (2 * 2 * 5 * H + H2 + 1))
    bytes_accessed = int(4 * B_pad * T * In + 4 * B_pad * O
                         + 2 * (In * H8 + H2 * H8 + 4 * H * H4)
                         + 4 * (2 * H8 + H2 * (1 + O) + O))
    vmem_limit = int(min(64 * 1024 * 1024, max(32 * 1024 * 1024, 2 * tile_bytes(TB))))

    y = pl.pallas_call(
        kernel,
        out_shape=jax.ShapeDtypeStruct((B_pad, O), jnp.float32),
        grid_spec=pltpu.PrefetchScalarGridSpec(
            num_scalar_prefetch=0,
            grid=(Bt,),
            in_specs=[
                pl.BlockSpec((None, T * TB, In), lambda i: (i, 0, 0)),  # x tile
                pl.BlockSpec((In, H8), lambda i: (0, 0)),               # wih0 (bf16)
                pl.BlockSpec((H, H4), lambda i: (0, 0)),                # whh0 fwd (bf16)
                pl.BlockSpec((H, H4), lambda i: (0, 0)),                # whh0 bwd (bf16)
                pl.BlockSpec((1, H8), lambda i: (0, 0)),                # b0
                pl.BlockSpec((H2, H8), lambda i: (0, 0)),               # wih1 (bf16)
                pl.BlockSpec((H, H4), lambda i: (0, 0)),                # whh1 fwd (bf16)
                pl.BlockSpec((H, H4), lambda i: (0, 0)),                # whh1 bwd (bf16)
                pl.BlockSpec((1, H8), lambda i: (0, 0)),                # b1
                pl.BlockSpec((H2, 1), lambda i: (0, 0)),                # w_att
                pl.BlockSpec((H2, O), lambda i: (0, 0)),                # lin_w
                pl.BlockSpec((1, O), lambda i: (0, 0)),                 # lin_b
            ],
            out_specs=pl.BlockSpec((TB, O), lambda i: (i, 0)),
            scratch_shapes=[
                pltpu.VMEM((T * TB, H8), jnp.float32),   # pre
                pltpu.VMEM((T * TB, H), jnp.float32),    # seq fwd
                pltpu.VMEM((T * TB, H), jnp.float32),    # seq bwd
                pltpu.VMEM((T * TB, 1), jnp.float32),    # attention logits
            ]),
        compiler_params=pltpu.CompilerParams(
            dimension_semantics=("parallel",),
            vmem_limit_bytes=vmem_limit,
        ),
        cost_estimate=pl.CostEstimate(flops=flops,
                                      transcendentals=transcendentals,
                                      bytes_accessed=bytes_accessed),
    )(x_p, wih0, whh0f, whh0b, b0, wih1, whh1f, whh1b, b1,
      packed["w_att"], packed["lin_w"], packed["lin_b"])

    return y[:B]


# ----------------------------------------------------------------------------
# Parameters: raw (PyTorch-shaped) init + packing for the fused kernel
# ----------------------------------------------------------------------------
def init_params(key, input_size, hidden_dim, output_size):
    H = hidden_dim
    k_lstm = 1.0 / np.sqrt(H)
    keys = iter(jax.random.split(key, 32))
    raw = {"lstm": []}
    for layer in range(2):
        in_dim = input_size if layer == 0 else 2 * H
        layer_p = {}
        for d in ("f", "b"):
            wih = jax.random.uniform(next(keys), (4 * H, in_dim), jnp.float32, -k_lstm, k_lstm)
            whh = jax.random.uniform(next(keys), (4 * H, H), jnp.float32, -k_lstm, k_lstm)
            bih = jax.random.uniform(next(keys), (4 * H,), jnp.float32, -k_lstm, k_lstm)
            bhh = jax.random.uniform(next(keys), (4 * H,), jnp.float32, -k_lstm, k_lstm)
            layer_p[d] = (wih, whh, bih, bhh)
        raw["lstm"].append(layer_p)
    raw["w"] = jax.random.normal(next(keys), (2 * H, 1), jnp.float32) * np.sqrt(2.0 / (2 * H))
    k_lin = 1.0 / np.sqrt(2 * H)
    raw["lin_w"] = jax.random.uniform(next(keys), (output_size, 2 * H), jnp.float32, -k_lin, k_lin)
    raw["lin_b"] = jax.random.uniform(next(keys), (output_size,), jnp.float32, -k_lin, k_lin)
    return raw


def pack_params(raw, hidden_dim):
    """Pre-pack weights for the fused kernel. Heavy matmul operands are stored in bf16
    (MXU runs bf16 natively on all generations); gate math & accumulation stay f32."""
    H = hidden_dim
    packed = {"layers": []}
    for layer in range(2):
        wih_f, whh_f, bih_f, bhh_f = raw["lstm"][layer]["f"]
        wih_b, whh_b, bih_b, bhh_b = raw["lstm"][layer]["b"]
        wih_cat = jnp.concatenate([wih_f.T, wih_b.T], axis=1).astype(jnp.bfloat16)  # (in, 8H)
        whhf = whh_f.T.astype(jnp.bfloat16)                                         # (H, 4H)
        whhb = whh_b.T.astype(jnp.bfloat16)                                         # (H, 4H)
        b_cat = jnp.concatenate([bih_f + bhh_f, bih_b + bhh_b])[None, :].astype(jnp.float32)
        packed["layers"].append((wih_cat, whhf, whhb, b_cat))
    packed["w_att"] = raw["w"].astype(jnp.float32)               # (2H, 1)
    packed["lin_w"] = raw["lin_w"].T.astype(jnp.float32)         # (2H, O)
    packed["lin_b"] = raw["lin_b"][None, :].astype(jnp.float32)  # (1, O)
    return packed


# ----------------------------------------------------------------------------
# Pure-JAX f32 reference (uses the RAW PyTorch-shaped weights) for verification
# ----------------------------------------------------------------------------
def _lstm_dir_ref(x_tm, p):
    wih, whh, bih, bhh = p
    _, Bn, _ = x_tm.shape
    H = whh.shape[1]

    def step(carry, x_t):
        h, c = carry
        g = x_t @ wih.T + h @ whh.T + bih + bhh
        i = jax.nn.sigmoid(g[:, 0:H])
        f = jax.nn.sigmoid(g[:, H:2 * H])
        gg = jnp.tanh(g[:, 2 * H:3 * H])
        o = jax.nn.sigmoid(g[:, 3 * H:4 * H])
        c = f * c + i * gg
        h = o * jnp.tanh(c)
        return (h, c), h

    (_, _), hs = jax.lax.scan(step, (jnp.zeros((Bn, H)), jnp.zeros((Bn, H))), x_tm)
    return hs


def att_blstm_forward_ref(raw, x):
    h_tm = jnp.transpose(x, (1, 0, 2))
    for layer in range(2):
        p = raw["lstm"][layer]
        fwd = _lstm_dir_ref(h_tm, p["f"])
        bwd = _lstm_dir_ref(h_tm[::-1], p["b"])[::-1]
        h_tm = jnp.concatenate([fwd, bwd], axis=-1)
    out = jnp.transpose(h_tm, (1, 0, 2))                      # (B, T, 2H)
    M = jnp.tanh(out)
    scores = jnp.einsum("bth,ho->bto", M, raw["w"])           # (B, T, 1)
    alpha = jax.nn.softmax(scores, axis=1)
    pooled = jnp.sum(out * alpha, axis=1)                     # (B, 2H)
    return pooled @ raw["lin_w"].T + raw["lin_b"]


# ----------------------------------------------------------------------------
if __name__ == "__main__":
    B, T = 2, 8
    input_size, hidden_dim, output_size = 15, 32, 15

    key = jax.random.PRNGKey(0)
    k_param, k_x = jax.random.split(key)
    raw = init_params(k_param, input_size, hidden_dim, output_size)
    packed = pack_params(raw, hidden_dim)
    x = jax.random.normal(k_x, (B, T, input_size), dtype=jnp.float32)

    y = jax.jit(att_blstm_forward)(packed, x)
    y = jax.block_until_ready(y)

    y_ref = att_blstm_forward_ref(raw, x)
    # bf16 MXU operands (f32 accumulation) -> slightly looser tolerance than pure-f32.
    np.testing.assert_allclose(np.asarray(y), np.asarray(y_ref), rtol=2e-2, atol=2e-2)

    assert y.shape == (B, output_size)
    print("KERNEL_OK")
</pallas_src>

<mosaic_0001>
module attributes {stable_mosaic.version = 11 : i64} {
  func.func @kernel(%arg0: i32, %arg1: memref<1x64x15xf32, #tpu.memory_space<vmem>>, %arg2: memref<15x256xbf16, #tpu.memory_space<vmem>>, %arg3: memref<32x128xbf16, #tpu.memory_space<vmem>>, %arg4: memref<32x128xbf16, #tpu.memory_space<vmem>>, %arg5: memref<1x256xf32, #tpu.memory_space<vmem>>, %arg6: memref<64x256xbf16, #tpu.memory_space<vmem>>, %arg7: memref<32x128xbf16, #tpu.memory_space<vmem>>, %arg8: memref<32x128xbf16, #tpu.memory_space<vmem>>, %arg9: memref<1x256xf32, #tpu.memory_space<vmem>>, %arg10: memref<64x1xf32, #tpu.memory_space<vmem>>, %arg11: memref<64x15xf32, #tpu.memory_space<vmem>>, %arg12: memref<1x15xf32, #tpu.memory_space<vmem>>, %arg13: memref<8x15xf32, #tpu.memory_space<vmem>>, %arg14: memref<64x256xf32, #tpu.memory_space<vmem>>, %arg15: memref<64x32xf32, #tpu.memory_space<vmem>>, %arg16: memref<64x32xf32, #tpu.memory_space<vmem>>, %arg17: memref<64x1xf32, #tpu.memory_space<vmem>>) attributes {dimension_semantics = [#tpu.dimension_semantics<parallel>], iteration_bounds = array<i64: 1>, scalar_prefetch = 0 : i64, scratch_operands = 4 : i64, tpu.core_type = #tpu.core_type<tc>, window_params = [{transform_indices = @transform_0, window_bounds = array<i64: 1, 64, 15>}, {pipeline_mode = #tpu.pipeline_mode<synchronous>, transform_indices = @transform_1, window_bounds = array<i64: 15, 256>}, {pipeline_mode = #tpu.pipeline_mode<synchronous>, transform_indices = @transform_2, window_bounds = array<i64: 32, 128>}, {pipeline_mode = #tpu.pipeline_mode<synchronous>, transform_indices = @transform_3, window_bounds = array<i64: 32, 128>}, {pipeline_mode = #tpu.pipeline_mode<synchronous>, transform_indices = @transform_4, window_bounds = array<i64: 1, 256>}, {pipeline_mode = #tpu.pipeline_mode<synchronous>, transform_indices = @transform_5, window_bounds = array<i64: 64, 256>}, {pipeline_mode = #tpu.pipeline_mode<synchronous>, transform_indices = @transform_6, window_bounds = array<i64: 32, 128>}, {pipeline_mode = #tpu.pipeline_mode<synchronous>, transform_indices = @transform_7, window_bounds = array<i64: 32, 128>}, {pipeline_mode = #tpu.pipeline_mode<synchronous>, transform_indices = @transform_8, window_bounds = array<i64: 1, 256>}, {pipeline_mode = #tpu.pipeline_mode<synchronous>, transform_indices = @transform_9, window_bounds = array<i64: 64, 1>}, {pipeline_mode = #tpu.pipeline_mode<synchronous>, transform_indices = @transform_10, window_bounds = array<i64: 64, 15>}, {pipeline_mode = #tpu.pipeline_mode<synchronous>, transform_indices = @transform_11, window_bounds = array<i64: 1, 15>}, {transform_indices = @transform_12, window_bounds = array<i64: 8, 15>}]} {
    %c0 = arith.constant 0 : index
    %c0_0 = arith.constant 0 : index
    %c0_1 = arith.constant 0 : index
    %0 = vector.load %arg1[%c0, %c0_0, %c0_1] : memref<1x64x15xf32, #tpu.memory_space<vmem>>, vector<1x64x15xf32>
    %1 = vector.shape_cast %0 : vector<1x64x15xf32> to vector<64x15xf32>
    %2 = arith.truncf %1 : vector<64x15xf32> to vector<64x15xbf16>
    %c0_2 = arith.constant 0 : index
    %c0_3 = arith.constant 0 : index
    %3 = vector.load %arg2[%c0_2, %c0_3] : memref<15x256xbf16, #tpu.memory_space<vmem>>, vector<15x256xbf16>
    %cst = arith.constant dense<0.000000e+00> : vector<64x256xf32>
    %4 = tpu.matmul %2, %3, %cst {dimension_numbers = #tpu.dot_dimension_numbers<[1], [0], [0], [1], [0, 0, 1, 1], [], []>} : vector<64x15xbf16>, vector<15x256xbf16>, vector<64x256xf32> -> vector<64x256xf32>
    %c0_4 = arith.constant 0 : index
    %c0_5 = arith.constant 0 : index
    %5 = vector.load %arg5[%c0_4, %c0_5] : memref<1x256xf32, #tpu.memory_space<vmem>>, vector<1x256xf32>
    %6 = vector.broadcast %5 : vector<1x256xf32> to vector<64x256xf32>
    %7 = arith.addf %4, %6 : vector<64x256xf32>
    %c0_6 = arith.constant 0 : index
    %c0_7 = arith.constant 0 : index
    %8 = vector.load %arg14[%c0_6, %c0_7] : memref<64x256xf32, #tpu.memory_space<vmem>>, vector<64x256xf32>
    tpu.vector_store %arg14[%c0_6, %c0_7], %7 {strides = array<i32>} : memref<64x256xf32, #tpu.memory_space<vmem>>, vector<64x256xf32>,
    %c0_8 = arith.constant 0 : index
    %c0_9 = arith.constant 0 : index
    %9 = vector.load %arg3[%c0_8, %c0_9] : memref<32x128xbf16, #tpu.memory_space<vmem>>, vector<32x128xbf16>
    %c0_10 = arith.constant 0 : index
    %c0_11 = arith.constant 0 : index
    %10 = vector.load %arg4[%c0_10, %c0_11] : memref<32x128xbf16, #tpu.memory_space<vmem>>, vector<32x128xbf16>
    %cst_12 = arith.constant 0.000000e+00 : f32
    %11 = vector.broadcast %cst_12 : f32 to vector<8x32xf32>
    %c0_i32 = arith.constant 0 : i32
    %c8_i32 = arith.constant 8 : i32
    %12 = arith.muli %c0_i32, %c8_i32 : i32
    %13 = tpu.assume_multiple %12, 8 : i32
    %c7_i32 = arith.constant 7 : i32
    %14 = arith.subi %c7_i32, %c0_i32 : i32
    %c8_i32_13 = arith.constant 8 : i32
    %15 = arith.muli %14, %c8_i32_13 : i32
    %16 = tpu.assume_multiple %15, 8 : i32
    %17 = arith.truncf %11 : vector<8x32xf32> to vector<8x32xbf16>
    %cst_14 = arith.constant dense<0.000000e+00> : vector<8x128xf32>
    %18 = tpu.matmul %17, %9, %cst_14 {dimension_numbers = #tpu.dot_dimension_numbers<[1], [0], [0], [1], [0, 0, 1, 1], [], []>} : vector<8x32xbf16>, vector<32x128xbf16>, vector<8x128xf32> -> vector<8x128xf32>
    %19 = arith.truncf %11 : vector<8x32xf32> to vector<8x32xbf16>
    %cst_15 = arith.constant dense<0.000000e+00> : vector<8x128xf32>
    %20 = tpu.matmul %19, %10, %cst_15 {dimension_numbers = #tpu.dot_dimension_numbers<[1], [0], [0], [1], [0, 0, 1, 1], [], []>} : vector<8x32xbf16>, vector<32x128xbf16>, vector<8x128xf32> -> vector<8x128xf32>
    %21 = arith.index_cast %13 : i32 to index
    %c0_16 = arith.constant 0 : index
    %22 = vector.load %arg14[%21, %c0_16] : memref<64x256xf32, #tpu.memory_space<vmem>>, vector<8x128xf32>
    %23 = arith.addf %22, %18 : vector<8x128xf32>
    %24 = arith.index_cast %16 : i32 to index
    %c128 = arith.constant 128 : index
    %25 = vector.load %arg14[%24, %c128] : memref<64x256xf32, #tpu.memory_space<vmem>>, vector<8x128xf32>
    %26 = arith.addf %25, %20 : vector<8x128xf32>
    %27 = vector.extract_strided_slice %23 {offsets = [0, 0], sizes = [8, 32], strides = [1, 1]} : vector<8x128xf32> to vector<8x32xf32>
    %28 = arith.negf %27 : vector<8x32xf32>
    %29 = math.exp %28 : vector<8x32xf32>
    %cst_17 = arith.constant 1.000000e+00 : f32
    %30 = vector.broadcast %cst_17 : f32 to vector<8x32xf32>
    %31 = arith.addf %30, %29 : vector<8x32xf32>
    %32 = arith.divf %30, %31 : vector<8x32xf32>
    %33 = vector.extract_strided_slice %23 {offsets = [0, 32], sizes = [8, 32], strides = [1, 1]} : vector<8x128xf32> to vector<8x32xf32>
    %34 = arith.negf %33 : vector<8x32xf32>
    %35 = math.exp %34 : vector<8x32xf32>
    %cst_18 = arith.constant 1.000000e+00 : f32
    %36 = vector.broadcast %cst_18 : f32 to vector<8x32xf32>
    %37 = arith.addf %36, %35 : vector<8x32xf32>
    %38 = arith.divf %36, %37 : vector<8x32xf32>
    %39 = vector.extract_strided_slice %23 {offsets = [0, 64], sizes = [8, 32], strides = [1, 1]} : vector<8x128xf32> to vector<8x32xf32>
    %40 = math.tanh %39 : vector<8x32xf32>
    %41 = vector.extract_strided_slice %23 {offsets = [0, 96], sizes = [8, 32], strides = [1, 1]} : vector<8x128xf32> to vector<8x32xf32>
    %42 = arith.negf %41 : vector<8x32xf32>
    %43 = math.exp %42 : vector<8x32xf32>
    %cst_19 = arith.constant 1.000000e+00 : f32
    %44 = vector.broadcast %cst_19 : f32 to vector<8x32xf32>
    %45 = arith.addf %44, %43 : vector<8x32xf32>
    %46 = arith.divf %44, %45 : vector<8x32xf32>
    %47 = arith.mulf %38, %11 : vector<8x32xf32>
    %48 = arith.mulf %32, %40 : vector<8x32xf32>
    %49 = arith.addf %47, %48 : vector<8x32xf32>
    %50 = math.tanh %49 : vector<8x32xf32>
    %51 = arith.mulf %46, %50 : vector<8x32xf32>
    %52 = vector.extract_strided_slice %26 {offsets = [0, 0], sizes = [8, 32], strides = [1, 1]} : vector<8x128xf32> to vector<8x32xf32>
    %53 = arith.negf %52 : vector<8x32xf32>
    %54 = math.exp %53 : vector<8x32xf32>
    %cst_20 = arith.constant 1.000000e+00 : f32
    %55 = vector.broadcast %cst_20 : f32 to vector<8x32xf32>
    %56 = arith.addf %55, %54 : vector<8x32xf32>
    %57 = arith.divf %55, %56 : vector<8x32xf32>
    %58 = vector.extract_strided_slice %26 {offsets = [0, 32], sizes = [8, 32], strides = [1, 1]} : vector<8x128xf32> to vector<8x32xf32>
    %59 = arith.negf %58 : vector<8x32xf32>
    %60 = math.exp %59 : vector<8x32xf32>
    %cst_21 = arith.constant 1.000000e+00 : f32
    %61 = vector.broadcast %cst_21 : f32 to vector<8x32xf32>
    %62 = arith.addf %61, %60 : vector<8x32xf32>
    %63 = arith.divf %61, %62 : vector<8x32xf32>
    %64 = vector.extract_strided_slice %26 {offsets = [0, 64], sizes = [8, 32], strides = [1, 1]} : vector<8x128xf32> to vector<8x32xf32>
    %65 = math.tanh %64 : vector<8x32xf32>
    %66 = vector.extract_strided_slice %26 {offsets = [0, 96], sizes = [8, 32], strides = [1, 1]} : vector<8x128xf32> to vector<8x32xf32>
    %67 = arith.negf %66 : vector<8x32xf32>
    %68 = math.exp %67 : vector<8x32xf32>
    %cst_22 = arith.constant 1.000000e+00 : f32
    %69 = vector.broadcast %cst_22 : f32 to vector<8x32xf32>
    %70 = arith.addf %69, %68 : vector<8x32xf32>
    %71 = arith.divf %69, %70 : vector<8x32xf32>
    %72 = arith.mulf %63, %11 : vector<8x32xf32>
    %73 = arith.mulf %57, %65 : vector<8x32xf32>
    %74 = arith.addf %72, %73 : vector<8x32xf32>
    %75 = math.tanh %74 : vector<8x32xf32>
    %76 = arith.mulf %71, %75 : vector<8x32xf32>
    %77 = arith.index_cast %13 : i32 to index
    %c0_23 = arith.constant 0 : index
    %78 = vector.load %arg15[%77, %c0_23] : memref<64x32xf32, #tpu.memory_space<vmem>>, vector<8x32xf32>
    tpu.vector_store %arg15[%77, %c0_23], %51 {strides = array<i32>} : memref<64x32xf32, #tpu.memory_space<vmem>>, vector<8x32xf32>,
    %79 = arith.index_cast %16 : i32 to index
    %c0_24 = arith.constant 0 : index
    %80 = vector.load %arg16[%79, %c0_24] : memref<64x32xf32, #tpu.memory_space<vmem>>, vector<8x32xf32>
    tpu.vector_store %arg16[%79, %c0_24], %76 {strides = array<i32>} : memref<64x32xf32, #tpu.memory_space<vmem>>, vector<8x32xf32>,
    %c1_i32 = arith.constant 1 : i32
    %c8_i32_25 = arith.constant 8 : i32
    %81 = arith.muli %c1_i32, %c8_i32_25 : i32
    %82 = tpu.assume_multiple %81, 8 : i32
    %c7_i32_26 = arith.constant 7 : i32
    %83 = arith.subi %c7_i32_26, %c1_i32 : i32
    %c8_i32_27 = arith.constant 8 : i32
    %84 = arith.muli %83, %c8_i32_27 : i32
    %85 = tpu.assume_multiple %84, 8 : i32
    %86 = arith.truncf %51 : vector<8x32xf32> to vector<8x32xbf16>
    %cst_28 = arith.constant dense<0.000000e+00> : vector<8x128xf32>
    %87 = tpu.matmul %86, %9, %cst_28 {dimension_numbers = #tpu.dot_dimension_numbers<[1], [0], [0], [1], [0, 0, 1, 1], [], []>} : vector<8x32xbf16>, vector<32x128xbf16>, vector<8x128xf32> -> vector<8x128xf32>
    %88 = arith.truncf %76 : vector<8x32xf32> to vector<8x32xbf16>
    %cst_29 = arith.constant dense<0.000000e+00> : vector<8x128xf32>
    %89 = tpu.matmul %88, %10, %cst_29 {dimension_numbers = #tpu.dot_dimension_numbers<[1], [0], [0], [1], [0, 0, 1, 1], [], []>} : vector<8x32xbf16>, vector<32x128xbf16>, vector<8x128xf32> -> vector<8x128xf32>
    %90 = arith.index_cast %82 : i32 to index
    %c0_30 = arith.constant 0 : index
    %91 = vector.load %arg14[%90, %c0_30] : memref<64x256xf32, #tpu.memory_space<vmem>>, vector<8x128xf32>
    %92 = arith.addf %91, %87 : vector<8x128xf32>
    %93 = arith.index_cast %85 : i32 to index
    %c128_31 = arith.constant 128 : index
    %94 = vector.load %arg14[%93, %c128_31] : memref<64x256xf32, #tpu.memory_space<vmem>>, vector<8x128xf32>
    %95 = arith.addf %94, %89 : vector<8x128xf32>
    %96 = vector.extract_strided_slice %92 {offsets = [0, 0], sizes = [8, 32], strides = [1, 1]} : vector<8x128xf32> to vector<8x32xf32>
    %97 = arith.negf %96 : vector<8x32xf32>
    %98 = math.exp %97 : vector<8x32xf32>
    %cst_32 = arith.constant 1.000000e+00 : f32
    %99 = vector.broadcast %cst_32 : f32 to vector<8x32xf32>
    %100 = arith.addf %99, %98 : vector<8x32xf32>
    %101 = arith.divf %99, %100 : vector<8x32xf32>
    %102 = vector.extract_strided_slice %92 {offsets = [0, 32], sizes = [8, 32], strides = [1, 1]} : vector<8x128xf32> to vector<8x32xf32>
    %103 = arith.negf %102 : vector<8x32xf32>
    %104 = math.exp %103 : vector<8x32xf32>
    %cst_33 = arith.constant 1.000000e+00 : f32
    %105 = vector.broadcast %cst_33 : f32 to vector<8x32xf32>
    %106 = arith.addf %105, %104 : vector<8x32xf32>
    %107 = arith.divf %105, %106 : vector<8x32xf32>
    %108 = vector.extract_strided_slice %92 {offsets = [0, 64], sizes = [8, 32], strides = [1, 1]} : vector<8x128xf32> to vector<8x32xf32>
    %109 = math.tanh %108 : vector<8x32xf32>
    %110 = vector.extract_strided_slice %92 {offsets = [0, 96], sizes = [8, 32], strides = [1, 1]} : vector<8x128xf32> to vector<8x32xf32>
    %111 = arith.negf %110 : vector<8x32xf32>
    %112 = math.exp %111 : vector<8x32xf32>
    %cst_34 = arith.constant 1.000000e+00 : f32
    %113 = vector.broadcast %cst_34 : f32 to vector<8x32xf32>
    %114 = arith.addf %113, %112 : vector<8x32xf32>
    %115 = arith.divf %113, %114 : vector<8x32xf32>
    %116 = arith.mulf %107, %49 : vector<8x32xf32>
    %117 = arith.mulf %101, %109 : vector<8x32xf32>
    %118 = arith.addf %116, %117 : vector<8x32xf32>
    %119 = math.tanh %118 : vector<8x32xf32>
    %120 = arith.mulf %115, %119 : vector<8x32xf32>
    %121 = vector.extract_strided_slice %95 {offsets = [0, 0], sizes = [8, 32], strides = [1, 1]} : vector<8x128xf32> to vector<8x32xf32>
    %122 = arith.negf %121 : vector<8x32xf32>
    %123 = math.exp %122 : vector<8x32xf32>
    %cst_35 = arith.constant 1.000000e+00 : f32
    %124 = vector.broadcast %cst_35 : f32 to vector<8x32xf32>
    %125 = arith.addf %124, %123 : vector<8x32xf32>
    %126 = arith.divf %124, %125 : vector<8x32xf32>
    %127 = vector.extract_strided_slice %95 {offsets = [0, 32], sizes = [8, 32], strides = [1, 1]} : vector<8x128xf32> to vector<8x32xf32>
    %128 = arith.negf %127 : vector<8x32xf32>
    %129 = math.exp %128 : vector<8x32xf32>
    %cst_36 = arith.constant 1.000000e+00 : f32
    %130 = vector.broadcast %cst_36 : f32 to vector<8x32xf32>
    %131 = arith.addf %130, %129 : vector<8x32xf32>
    %132 = arith.divf %130, %131 : vector<8x32xf32>
    %133 = vector.extract_strided_slice %95 {offsets = [0, 64], sizes = [8, 32], strides = [1, 1]} : vector<8x128xf32> to vector<8x32xf32>
    %134 = math.tanh %133 : vector<8x32xf32>
    %135 = vector.extract_strided_slice %95 {offsets = [0, 96], sizes = [8, 32], strides = [1, 1]} : vector<8x128xf32> to vector<8x32xf32>
    %136 = arith.negf %135 : vector<8x32xf32>
    %137 = math.exp %136 : vector<8x32xf32>
    %cst_37 = arith.constant 1.000000e+00 : f32
    %138 = vector.broadcast %cst_37 : f32 to vector<8x32xf32>
    %139 = arith.addf %138, %137 : vector<8x32xf32>
    %140 = arith.divf %138, %139 : vector<8x32xf32>
    %141 = arith.mulf %132, %74 : vector<8x32xf32>
    %142 = arith.mulf %126, %134 : vector<8x32xf32>
    %143 = arith.addf %141, %142 : vector<8x32xf32>
    %144 = math.tanh %143 : vector<8x32xf32>
    %145 = arith.mulf %140, %144 : vector<8x32xf32>
    %146 = arith.index_cast %82 : i32 to index
    %c0_38 = arith.constant 0 : index
    %147 = vector.load %arg15[%146, %c0_38] : memref<64x32xf32, #tpu.memory_space<vmem>>, vector<8x32xf32>
    tpu.vector_store %arg15[%146, %c0_38], %120 {strides = array<i32>} : memref<64x32xf32, #tpu.memory_space<vmem>>, vector<8x32xf32>,
    %148 = arith.index_cast %85 : i32 to index
    %c0_39 = arith.constant 0 : index
    %149 = vector.load %arg16[%148, %c0_39] : memref<64x32xf32, #tpu.memory_space<vmem>>, vector<8x32xf32>
    tpu.vector_store %arg16[%148, %c0_39], %145 {strides = array<i32>} : memref<64x32xf32, #tpu.memory_space<vmem>>, vector<8x32xf32>,
    %c2_i32 = arith.constant 2 : i32
    %c8_i32_40 = arith.constant 8 : i32
    %150 = arith.muli %c2_i32, %c8_i32_40 : i32
    %151 = tpu.assume_multiple %150, 8 : i32
    %c7_i32_41 = arith.constant 7 : i32
    %152 = arith.subi %c7_i32_41, %c2_i32 : i32
    %c8_i32_42 = arith.constant 8 : i32
    %153 = arith.muli %152, %c8_i32_42 : i32
    %154 = tpu.assume_multiple %153, 8 : i32
    %155 = arith.truncf %120 : vector<8x32xf32> to vector<8x32xbf16>
    %cst_43 = arith.constant dense<0.000000e+00> : vector<8x128xf32>
    %156 = tpu.matmul %155, %9, %cst_43 {dimension_numbers = #tpu.dot_dimension_numbers<[1], [0], [0], [1], [0, 0, 1, 1], [], []>} : vector<8x32xbf16>, vector<32x128xbf16>, vector<8x128xf32> -> vector<8x128xf32>
    %157 = arith.truncf %145 : vector<8x32xf32> to vector<8x32xbf16>
    %cst_44 = arith.constant dense<0.000000e+00> : vector<8x128xf32>
    %158 = tpu.matmul %157, %10, %cst_44 {dimension_numbers = #tpu.dot_dimension_numbers<[1], [0], [0], [1], [0, 0, 1, 1], [], []>} : vector<8x32xbf16>, vector<32x128xbf16>, vector<8x128xf32> -> vector<8x128xf32>
    %159 = arith.index_cast %151 : i32 to index
    %c0_45 = arith.constant 0 : index
    %160 = vector.load %arg14[%159, %c0_45] : memref<64x256xf32, #tpu.memory_space<vmem>>, vector<8x128xf32>
    %161 = arith.addf %160, %156 : vector<8x128xf32>
    %162 = arith.index_cast %154 : i32 to index
    %c128_46 = arith.constant 128 : index
    %163 = vector.load %arg14[%162, %c128_46] : memref<64x256xf32, #tpu.memory_space<vmem>>, vector<8x128xf32>
    %164 = arith.addf %163, %158 : vector<8x128xf32>
    %165 = vector.extract_strided_slice %161 {offsets = [0, 0], sizes = [8, 32], strides = [1, 1]} : vector<8x128xf32> to vector<8x32xf32>
    %166 = arith.negf %165 : vector<8x32xf32>
    %167 = math.exp %166 : vector<8x32xf32>
    %cst_47 = arith.constant 1.000000e+00 : f32
    %168 = vector.broadcast %cst_47 : f32 to vector<8x32xf32>
    %169 = arith.addf %168, %167 : vector<8x32xf32>
    %170 = arith.divf %168, %169 : vector<8x32xf32>
    %171 = vector.extract_strided_slice %161 {offsets = [0, 32], sizes = [8, 32], strides = [1, 1]} : vector<8x128xf32> to vector<8x32xf32>
    %172 = arith.negf %171 : vector<8x32xf32>
    %173 = math.exp %172 : vector<8x32xf32>
    %cst_48 = arith.constant 1.000000e+00 : f32
    %174 = vector.broadcast %cst_48 : f32 to vector<8x32xf32>
    %175 = arith.addf %174, %173 : vector<8x32xf32>
    %176 = arith.divf %174, %175 : vector<8x32xf32>
    %177 = vector.extract_strided_slice %161 {offsets = [0, 64], sizes = [8, 32], strides = [1, 1]} : vector<8x128xf32> to vector<8x32xf32>
    %178 = math.tanh %177 : vector<8x32xf32>
    %179 = vector.extract_strided_slice %161 {offsets = [0, 96], sizes = [8, 32], strides = [1, 1]} : vector<8x128xf32> to vector<8x32xf32>
    %180 = arith.negf %179 : vector<8x32xf32>
    %181 = math.exp %180 : vector<8x32xf32>
    %cst_49 = arith.constant 1.000000e+00 : f32
    %182 = vector.broadcast %cst_49 : f32 to vector<8x32xf32>
    %183 = arith.addf %182, %181 : vector<8x32xf32>
    %184 = arith.divf %182, %183 : vector<8x32xf32>
    %185 = arith.mulf %176, %118 : vector<8x32xf32>
    %186 = arith.mulf %170, %178 : vector<8x32xf32>
    %187 = arith.addf %185, %186 : vector<8x32xf32>
    %188 = math.tanh %187 : vector<8x32xf32>
    %189 = arith.mulf %184, %188 : vector<8x32xf32>
    %190 = vector.extract_strided_slice %164 {offsets = [0, 0], sizes = [8, 32], strides = [1, 1]} : vector<8x128xf32> to vector<8x32xf32>
    %191 = arith.negf %190 : vector<8x32xf32>
    %192 = math.exp %191 : vector<8x32xf32>
    %cst_50 = arith.constant 1.000000e+00 : f32
    %193 = vector.broadcast %cst_50 : f32 to vector<8x32xf32>
    %194 = arith.addf %193, %192 : vector<8x32xf32>
    %195 = arith.divf %193, %194 : vector<8x32xf32>
    %196 = vector.extract_strided_slice %164 {offsets = [0, 32], sizes = [8, 32], strides = [1, 1]} : vector<8x128xf32> to vector<8x32xf32>
    %197 = arith.negf %196 : vector<8x32xf32>
    %198 = math.exp %197 : vector<8x32xf32>
    %cst_51 = arith.constant 1.000000e+00 : f32
    %199 = vector.broadcast %cst_51 : f32 to vector<8x32xf32>
    %200 = arith.addf %199, %198 : vector<8x32xf32>
    %201 = arith.divf %199, %200 : vector<8x32xf32>
    %202 = vector.extract_strided_slice %164 {offsets = [0, 64], sizes = [8, 32], strides = [1, 1]} : vector<8x128xf32> to vector<8x32xf32>
    %203 = math.tanh %202 : vector<8x32xf32>
    %204 = vector.extract_strided_slice %164 {offsets = [0, 96], sizes = [8, 32], strides = [1, 1]} : vector<8x128xf32> to vector<8x32xf32>
    %205 = arith.negf %204 : vector<8x32xf32>
    %206 = math.exp %205 : vector<8x32xf32>
    %cst_52 = arith.constant 1.000000e+00 : f32
    %207 = vector.broadcast %cst_52 : f32 to vector<8x32xf32>
    %208 = arith.addf %207, %206 : vector<8x32xf32>
    %209 = arith.divf %207, %208 : vector<8x32xf32>
    %210 = arith.mulf %201, %143 : vector<8x32xf32>
    %211 = arith.mulf %195, %203 : vector<8x32xf32>
    %212 = arith.addf %210, %211 : vector<8x32xf32>
    %213 = math.tanh %212 : vector<8x32xf32>
    %214 = arith.mulf %209, %213 : vector<8x32xf32>
    %215 = arith.index_cast %151 : i32 to index
    %c0_53 = arith.constant 0 : index
    %216 = vector.load %arg15[%215, %c0_53] : memref<64x32xf32, #tpu.memory_space<vmem>>, vector<8x32xf32>
    tpu.vector_store %arg15[%215, %c0_53], %189 {strides = array<i32>} : memref<64x32xf32, #tpu.memory_space<vmem>>, vector<8x32xf32>,
    %217 = arith.index_cast %154 : i32 to index
    %c0_54 = arith.constant 0 : index
    %218 = vector.load %arg16[%217, %c0_54] : memref<64x32xf32, #tpu.memory_space<vmem>>, vector<8x32xf32>
    tpu.vector_store %arg16[%217, %c0_54], %214 {strides = array<i32>} : memref<64x32xf32, #tpu.memory_space<vmem>>, vector<8x32xf32>,
    %c3_i32 = arith.constant 3 : i32
    %c8_i32_55 = arith.constant 8 : i32
    %219 = arith.muli %c3_i32, %c8_i32_55 : i32
    %220 = tpu.assume_multiple %219, 8 : i32
    %c7_i32_56 = arith.constant 7 : i32
    %221 = arith.subi %c7_i32_56, %c3_i32 : i32
    %c8_i32_57 = arith.constant 8 : i32
    %222 = arith.muli %221, %c8_i32_57 : i32
    %223 = tpu.assume_multiple %222, 8 : i32
    %224 = arith.truncf %189 : vector<8x32xf32> to vector<8x32xbf16>
    %cst_58 = arith.constant dense<0.000000e+00> : vector<8x128xf32>
    %225 = tpu.matmul %224, %9, %cst_58 {dimension_numbers = #tpu.dot_dimension_numbers<[1], [0], [0], [1], [0, 0, 1, 1], [], []>} : vector<8x32xbf16>, vector<32x128xbf16>, vector<8x128xf32> -> vector<8x128xf32>
    %226 = arith.truncf %214 : vector<8x32xf32> to vector<8x32xbf16>
    %cst_59 = arith.constant dense<0.000000e+00> : vector<8x128xf32>
    %227 = tpu.matmul %226, %10, %cst_59 {dimension_numbers = #tpu.dot_dimension_numbers<[1], [0], [0], [1], [0, 0, 1, 1], [], []>} : vector<8x32xbf16>, vector<32x128xbf16>, vector<8x128xf32> -> vector<8x128xf32>
    %228 = arith.index_cast %220 : i32 to index
    %c0_60 = arith.constant 0 : index
    %229 = vector.load %arg14[%228, %c0_60] : memref<64x256xf32, #tpu.memory_space<vmem>>, vector<8x128xf32>
    %230 = arith.addf %229, %225 : vector<8x128xf32>
    %231 = arith.index_cast %223 : i32 to index
    %c128_61 = arith.constant 128 : index
    %232 = vector.load %arg14[%231, %c128_61] : memref<64x256xf32, #tpu.memory_space<vmem>>, vector<8x128xf32>
    %233 = arith.addf %232, %227 : vector<8x128xf32>
    %234 = vector.extract_strided_slice %230 {offsets = [0, 0], sizes = [8, 32], strides = [1, 1]} : vector<8x128xf32> to vector<8x32xf32>
    %235 = arith.negf %234 : vector<8x32xf32>
    %236 = math.exp %235 : vector<8x32xf32>
    %cst_62 = arith.constant 1.000000e+00 : f32
    %237 = vector.broadcast %cst_62 : f32 to vector<8x32xf32>
    %238 = arith.addf %237, %236 : vector<8x32xf32>
    %239 = arith.divf %237, %238 : vector<8x32xf32>
    %240 = vector.extract_strided_slice %230 {offsets = [0, 32], sizes = [8, 32], strides = [1, 1]} : vector<8x128xf32> to vector<8x32xf32>
    %241 = arith.negf %240 : vector<8x32xf32>
    %242 = math.exp %241 : vector<8x32xf32>
    %cst_63 = arith.constant 1.000000e+00 : f32
    %243 = vector.broadcast %cst_63 : f32 to vector<8x32xf32>
    %244 = arith.addf %243, %242 : vector<8x32xf32>
    %245 = arith.divf %243, %244 : vector<8x32xf32>
    %246 = vector.extract_strided_slice %230 {offsets = [0, 64], sizes = [8, 32], strides = [1, 1]} : vector<8x128xf32> to vector<8x32xf32>
    %247 = math.tanh %246 : vector<8x32xf32>
    %248 = vector.extract_strided_slice %230 {offsets = [0, 96], sizes = [8, 32], strides = [1, 1]} : vector<8x128xf32> to vector<8x32xf32>
    %249 = arith.negf %248 : vector<8x32xf32>
    %250 = math.exp %249 : vector<8x32xf32>
    %cst_64 = arith.constant 1.000000e+00 : f32
    %251 = vector.broadcast %cst_64 : f32 to vector<8x32xf32>
    %252 = arith.addf %251, %250 : vector<8x32xf32>
    %253 = arith.divf %251, %252 : vector<8x32xf32>
    %254 = arith.mulf %245, %187 : vector<8x32xf32>
    %255 = arith.mulf %239, %247 : vector<8x32xf32>
    %256 = arith.addf %254, %255 : vector<8x32xf32>
    %257 = math.tanh %256 : vector<8x32xf32>
    %258 = arith.mulf %253, %257 : vector<8x32xf32>
    %259 = vector.extract_strided_slice %233 {offsets = [0, 0], sizes = [8, 32], strides = [1, 1]} : vector<8x128xf32> to vector<8x32xf32>
    %260 = arith.negf %259 : vector<8x32xf32>
    %261 = math.exp %260 : vector<8x32xf32>
    %cst_65 = arith.constant 1.000000e+00 : f32
    %262 = vector.broadcast %cst_65 : f32 to vector<8x32xf32>
    %263 = arith.addf %262, %261 : vector<8x32xf32>
    %264 = arith.divf %262, %263 : vector<8x32xf32>
    %265 = vector.extract_strided_slice %233 {offsets = [0, 32], sizes = [8, 32], strides = [1, 1]} : vector<8x128xf32> to vector<8x32xf32>
    %266 = arith.negf %265 : vector<8x32xf32>
    %267 = math.exp %266 : vector<8x32xf32>
    %cst_66 = arith.constant 1.000000e+00 : f32
    %268 = vector.broadcast %cst_66 : f32 to vector<8x32xf32>
    %269 = arith.addf %268, %267 : vector<8x32xf32>
    %270 = arith.divf %268, %269 : vector<8x32xf32>
    %271 = vector.extract_strided_slice %233 {offsets = [0, 64], sizes = [8, 32], strides = [1, 1]} : vector<8x128xf32> to vector<8x32xf32>
    %272 = math.tanh %271 : vector<8x32xf32>
    %273 = vector.extract_strided_slice %233 {offsets = [0, 96], sizes = [8, 32], strides = [1, 1]} : vector<8x128xf32> to vector<8x32xf32>
    %274 = arith.negf %273 : vector<8x32xf32>
    %275 = math.exp %274 : vector<8x32xf32>
    %cst_67 = arith.constant 1.000000e+00 : f32
    %276 = vector.broadcast %cst_67 : f32 to vector<8x32xf32>
    %277 = arith.addf %276, %275 : vector<8x32xf32>
    %278 = arith.divf %276, %277 : vector<8x32xf32>
    %279 = arith.mulf %270, %212 : vector<8x32xf32>
    %280 = arith.mulf %264, %272 : vector<8x32xf32>
    %281 = arith.addf %279, %280 : vector<8x32xf32>
    %282 = math.tanh %281 : vector<8x32xf32>
    %283 = arith.mulf %278, %282 : vector<8x32xf32>
    %284 = arith.index_cast %220 : i32 to index
    %c0_68 = arith.constant 0 : index
    %285 = vector.load %arg15[%284, %c0_68] : memref<64x32xf32, #tpu.memory_space<vmem>>, vector<8x32xf32>
    tpu.vector_store %arg15[%284, %c0_68], %258 {strides = array<i32>} : memref<64x32xf32, #tpu.memory_space<vmem>>, vector<8x32xf32>,
    %286 = arith.index_cast %223 : i32 to index
    %c0_69 = arith.constant 0 : index
    %287 = vector.load %arg16[%286, %c0_69] : memref<64x32xf32, #tpu.memory_space<vmem>>, vector<8x32xf32>
    tpu.vector_store %arg16[%286, %c0_69], %283 {strides = array<i32>} : memref<64x32xf32, #tpu.memory_space<vmem>>, vector<8x32xf32>,
    %c4_i32 = arith.constant 4 : i32
    %c8_i32_70 = arith.constant 8 : i32
    %288 = arith.muli %c4_i32, %c8_i32_70 : i32
    %289 = tpu.assume_multiple %288, 8 : i32
    %c7_i32_71 = arith.constant 7 : i32
    %290 = arith.subi %c7_i32_71, %c4_i32 : i32
    %c8_i32_72 = arith.constant 8 : i32
    %291 = arith.muli %290, %c8_i32_72 : i32
    %292 = tpu.assume_multiple %291, 8 : i32
    %293 = arith.truncf %258 : vector<8x32xf32> to vector<8x32xbf16>
    %cst_73 = arith.constant dense<0.000000e+00> : vector<8x128xf32>
    %294 = tpu.matmul %293, %9, %cst_73 {dimension_numbers = #tpu.dot_dimension_numbers<[1], [0], [0], [1], [0, 0, 1, 1], [], []>} : vector<8x32xbf16>, vector<32x128xbf16>, vector<8x128xf32> -> vector<8x128xf32>
    %295 = arith.truncf %283 : vector<8x32xf32> to vector<8x32xbf16>
    %cst_74 = arith.constant dense<0.000000e+00> : vector<8x128xf32>
    %296 = tpu.matmul %295, %10, %cst_74 {dimension_numbers = #tpu.dot_dimension_numbers<[1], [0], [0], [1], [0, 0, 1, 1], [], []>} : vector<8x32xbf16>, vector<32x128xbf16>, vector<8x128xf32> -> vector<8x128xf32>
    %297 = arith.index_cast %289 : i32 to index
    %c0_75 = arith.constant 0 : index
    %298 = vector.load %arg14[%297, %c0_75] : memref<64x256xf32, #tpu.memory_space<vmem>>, vector<8x128xf32>
    %299 = arith.addf %298, %294 : vector<8x128xf32>
    %300 = arith.index_cast %292 : i32 to index
    %c128_76 = arith.constant 128 : index
    %301 = vector.load %arg14[%300, %c128_76] : memref<64x256xf32, #tpu.memory_space<vmem>>, vector<8x128xf32>
    %302 = arith.addf %301, %296 : vector<8x128xf32>
    %303 = vector.extract_strided_slice %299 {offsets = [0, 0], sizes = [8, 32], strides = [1, 1]} : vector<8x128xf32> to vector<8x32xf32>
    %304 = arith.negf %303 : vector<8x32xf32>
    %305 = math.exp %304 : vector<8x32xf32>
    %cst_77 = arith.constant 1.000000e+00 : f32
    %306 = vector.broadcast %cst_77 : f32 to vector<8x32xf32>
    %307 = arith.addf %306, %305 : vector<8x32xf32>
    %308 = arith.divf %306, %307 : vector<8x32xf32>
    %309 = vector.extract_strided_slice %299 {offsets = [0, 32], sizes = [8, 32], strides = [1, 1]} : vector<8x128xf32> to vector<8x32xf32>
    %310 = arith.negf %309 : vector<8x32xf32>
    %311 = math.exp %310 : vector<8x32xf32>
    %cst_78 = arith.constant 1.000000e+00 : f32
    %312 = vector.broadcast %cst_78 : f32 to vector<8x32xf32>
    %313 = arith.addf %312, %311 : vector<8x32xf32>
    %314 = arith.divf %312, %313 : vector<8x32xf32>
    %315 = vector.extract_strided_slice %299 {offsets = [0, 64], sizes = [8, 32], strides = [1, 1]} : vector<8x128xf32> to vector<8x32xf32>
    %316 = math.tanh %315 : vector<8x32xf32>
    %317 = vector.extract_strided_slice %299 {offsets = [0, 96], sizes = [8, 32], strides = [1, 1]} : vector<8x128xf32> to vector<8x32xf32>
    %318 = arith.negf %317 : vector<8x32xf32>
    %319 = math.exp %318 : vector<8x32xf32>
    %cst_79 = arith.constant 1.000000e+00 : f32
    %320 = vector.broadcast %cst_79 : f32 to vector<8x32xf32>
    %321 = arith.addf %320, %319 : vector<8x32xf32>
    %322 = arith.divf %320, %321 : vector<8x32xf32>
    %323 = arith.mulf %314, %256 : vector<8x32xf32>
    %324 = arith.mulf %308, %316 : vector<8x32xf32>
    %325 = arith.addf %323, %324 : vector<8x32xf32>
    %326 = math.tanh %325 : vector<8x32xf32>
    %327 = arith.mulf %322, %326 : vector<8x32xf32>
    %328 = vector.extract_strided_slice %302 {offsets = [0, 0], sizes = [8, 32], strides = [1, 1]} : vector<8x128xf32> to vector<8x32xf32>
    %329 = arith.negf %328 : vector<8x32xf32>
    %330 = math.exp %329 : vector<8x32xf32>
    %cst_80 = arith.constant 1.000000e+00 : f32
    %331 = vector.broadcast %cst_80 : f32 to vector<8x32xf32>
    %332 = arith.addf %331, %330 : vector<8x32xf32>
    %333 = arith.divf %331, %332 : vector<8x32xf32>
    %334 = vector.extract_strided_slice %302 {offsets = [0, 32], sizes = [8, 32], strides = [1, 1]} : vector<8x128xf32> to vector<8x32xf32>
    %335 = arith.negf %334 : vector<8x32xf32>
    %336 = math.exp %335 : vector<8x32xf32>
    %cst_81 = arith.constant 1.000000e+00 : f32
    %337 = vector.broadcast %cst_81 : f32 to vector<8x32xf32>
    %338 = arith.addf %337, %336 : vector<8x32xf32>
    %339 = arith.divf %337, %338 : vector<8x32xf32>
    %340 = vector.extract_strided_slice %302 {offsets = [0, 64], sizes = [8, 32], strides = [1, 1]} : vector<8x128xf32> to vector<8x32xf32>
    %341 = math.tanh %340 : vector<8x32xf32>
    %342 = vector.extract_strided_slice %302 {offsets = [0, 96], sizes = [8, 32], strides = [1, 1]} : vector<8x128xf32> to vector<8x32xf32>
    %343 = arith.negf %342 : vector<8x32xf32>
    %344 = math.exp %343 : vector<8x32xf32>
    %cst_82 = arith.constant 1.000000e+00 : f32
    %345 = vector.broadcast %cst_82 : f32 to vector<8x32xf32>
    %346 = arith.addf %345, %344 : vector<8x32xf32>
    %347 = arith.divf %345, %346 : vector<8x32xf32>
    %348 = arith.mulf %339, %281 : vector<8x32xf32>
    %349 = arith.mulf %333, %341 : vector<8x32xf32>
    %350 = arith.addf %348, %349 : vector<8x32xf32>
    %351 = math.tanh %350 : vector<8x32xf32>
    %352 = arith.mulf %347, %351 : vector<8x32xf32>
    %353 = arith.index_cast %289 : i32 to index
    %c0_83 = arith.constant 0 : index
    %354 = vector.load %arg15[%353, %c0_83] : memref<64x32xf32, #tpu.memory_space<vmem>>, vector<8x32xf32>
    tpu.vector_store %arg15[%353, %c0_83], %327 {strides = array<i32>} : memref<64x32xf32, #tpu.memory_space<vmem>>, vector<8x32xf32>,
    %355 = arith.index_cast %292 : i32 to index
    %c0_84 = arith.constant 0 : index
    %356 = vector.load %arg16[%355, %c0_84] : memref<64x32xf32, #tpu.memory_space<vmem>>, vector<8x32xf32>
    tpu.vector_store %arg16[%355, %c0_84], %352 {strides = array<i32>} : memref<64x32xf32, #tpu.memory_space<vmem>>, vector<8x32xf32>,
    %c5_i32 = arith.constant 5 : i32
    %c8_i32_85 = arith.constant 8 : i32
    %357 = arith.muli %c5_i32, %c8_i32_85 : i32
    %358 = tpu.assume_multiple %357, 8 : i32
    %c7_i32_86 = arith.constant 7 : i32
    %359 = arith.subi %c7_i32_86, %c5_i32 : i32
    %c8_i32_87 = arith.constant 8 : i32
    %360 = arith.muli %359, %c8_i32_87 : i32
    %361 = tpu.assume_multiple %360, 8 : i32
    %362 = arith.truncf %327 : vector<8x32xf32> to vector<8x32xbf16>
    %cst_88 = arith.constant dense<0.000000e+00> : vector<8x128xf32>
    %363 = tpu.matmul %362, %9, %cst_88 {dimension_numbers = #tpu.dot_dimension_numbers<[1], [0], [0], [1], [0, 0, 1, 1], [], []>} : vector<8x32xbf16>, vector<32x128xbf16>, vector<8x128xf32> -> vector<8x128xf32>
    %364 = arith.truncf %352 : vector<8x32xf32> to vector<8x32xbf16>
    %cst_89 = arith.constant dense<0.000000e+00> : vector<8x128xf32>
    %365 = tpu.matmul %364, %10, %cst_89 {dimension_numbers = #tpu.dot_dimension_numbers<[1], [0], [0], [1], [0, 0, 1, 1], [], []>} : vector<8x32xbf16>, vector<32x128xbf16>, vector<8x128xf32> -> vector<8x128xf32>
    %366 = arith.index_cast %358 : i32 to index
    %c0_90 = arith.constant 0 : index
    %367 = vector.load %arg14[%366, %c0_90] : memref<64x256xf32, #tpu.memory_space<vmem>>, vector<8x128xf32>
    %368 = arith.addf %367, %363 : vector<8x128xf32>
    %369 = arith.index_cast %361 : i32 to index
    %c128_91 = arith.constant 128 : index
    %370 = vector.load %arg14[%369, %c128_91] : memref<64x256xf32, #tpu.memory_space<vmem>>, vector<8x128xf32>
    %371 = arith.addf %370, %365 : vector<8x128xf32>
    %372 = vector.extract_strided_slice %368 {offsets = [0, 0], sizes = [8, 32], strides = [1, 1]} : vector<8x128xf32> to vector<8x32xf32>
    %373 = arith.negf %372 : vector<8x32xf32>
    %374 = math.exp %373 : vector<8x32xf32>
    %cst_92 = arith.constant 1.000000e+00 : f32
    %375 = vector.broadcast %cst_92 : f32 to vector<8x32xf32>
    %376 = arith.addf %375, %374 : vector<8x32xf32>
    %377 = arith.divf %375, %376 : vector<8x32xf32>
    %378 = vector.extract_strided_slice %368 {offsets = [0, 32], sizes = [8, 32], strides = [1, 1]} : vector<8x128xf32> to vector<8x32xf32>
    %379 = arith.negf %378 : vector<8x32xf32>
    %380 = math.exp %379 : vector<8x32xf32>
    %cst_93 = arith.constant 1.000000e+00 : f32
    %381 = vector.broadcast %cst_93 : f32 to vector<8x32xf32>
    %382 = arith.addf %381, %380 : vector<8x32xf32>
    %383 = arith.divf %381, %382 : vector<8x32xf32>
    %384 = vector.extract_strided_slice %368 {offsets = [0, 64], sizes = [8, 32], strides = [1, 1]} : vector<8x128xf32> to vector<8x32xf32>
    %385 = math.tanh %384 : vector<8x32xf32>
    %386 = vector.extract_strided_slice %368 {offsets = [0, 96], sizes = [8, 32], strides = [1, 1]} : vector<8x128xf32> to vector<8x32xf32>
    %387 = arith.negf %386 : vector<8x32xf32>
    %388 = math.exp %387 : vector<8x32xf32>
    %cst_94 = arith.constant 1.000000e+00 : f32
    %389 = vector.broadcast %cst_94 : f32 to vector<8x32xf32>
    %390 = arith.addf %389, %388 : vector<8x32xf32>
    %391 = arith.divf %389, %390 : vector<8x32xf32>
    %392 = arith.mulf %383, %325 : vector<8x32xf32>
    %393 = arith.mulf %377, %385 : vector<8x32xf32>
    %394 = arith.addf %392, %393 : vector<8x32xf32>
    %395 = math.tanh %394 : vector<8x32xf32>
    %396 = arith.mulf %391, %395 : vector<8x32xf32>
    %397 = vector.extract_strided_slice %371 {offsets = [0, 0], sizes = [8, 32], strides = [1, 1]} : vector<8x128xf32> to vector<8x32xf32>
    %398 = arith.negf %397 : vector<8x32xf32>
    %399 = math.exp %398 : vector<8x32xf32>
    %cst_95 = arith.constant 1.000000e+00 : f32
    %400 = vector.broadcast %cst_95 : f32 to vector<8x32xf32>
    %401 = arith.addf %400, %399 : vector<8x32xf32>
    %402 = arith.divf %400, %401 : vector<8x32xf32>
    %403 = vector.extract_strided_slice %371 {offsets = [0, 32], sizes = [8, 32], strides = [1, 1]} : vector<8x128xf32> to vector<8x32xf32>
    %404 = arith.negf %403 : vector<8x32xf32>
    %405 = math.exp %404 : vector<8x32xf32>
    %cst_96 = arith.constant 1.000000e+00 : f32
    %406 = vector.broadcast %cst_96 : f32 to vector<8x32xf32>
    %407 = arith.addf %406, %405 : vector<8x32xf32>
    %408 = arith.divf %406, %407 : vector<8x32xf32>
    %409 = vector.extract_strided_slice %371 {offsets = [0, 64], sizes = [8, 32], strides = [1, 1]} : vector<8x128xf32> to vector<8x32xf32>
    %410 = math.tanh %409 : vector<8x32xf32>
    %411 = vector.extract_strided_slice %371 {offsets = [0, 96], sizes = [8, 32], strides = [1, 1]} : vector<8x128xf32> to vector<8x32xf32>
    %412 = arith.negf %411 : vector<8x32xf32>
    %413 = math.exp %412 : vector<8x32xf32>
    %cst_97 = arith.constant 1.000000e+00 : f32
    %414 = vector.broadcast %cst_97 : f32 to vector<8x32xf32>
    %415 = arith.addf %414, %413 : vector<8x32xf32>
    %416 = arith.divf %414, %415 : vector<8x32xf32>
    %417 = arith.mulf %408, %350 : vector<8x32xf32>
    %418 = arith.mulf %402, %410 : vector<8x32xf32>
    %419 = arith.addf %417, %418 : vector<8x32xf32>
    %420 = math.tanh %419 : vector<8x32xf32>
    %421 = arith.mulf %416, %420 : vector<8x32xf32>
    %422 = arith.index_cast %358 : i32 to index
    %c0_98 = arith.constant 0 : index
    %423 = vector.load %arg15[%422, %c0_98] : memref<64x32xf32, #tpu.memory_space<vmem>>, vector<8x32xf32>
    tpu.vector_store %arg15[%422, %c0_98], %396 {strides = array<i32>} : memref<64x32xf32, #tpu.memory_space<vmem>>, vector<8x32xf32>,
    %424 = arith.index_cast %361 : i32 to index
    %c0_99 = arith.constant 0 : index
    %425 = vector.load %arg16[%424, %c0_99] : memref<64x32xf32, #tpu.memory_space<vmem>>, vector<8x32xf32>
    tpu.vector_store %arg16[%424, %c0_99], %421 {strides = array<i32>} : memref<64x32xf32, #tpu.memory_space<vmem>>, vector<8x32xf32>,
    %c6_i32 = arith.constant 6 : i32
    %c8_i32_100 = arith.constant 8 : i32
    %426 = arith.muli %c6_i32, %c8_i32_100 : i32
    %427 = tpu.assume_multiple %426, 8 : i32
    %c7_i32_101 = arith.constant 7 : i32
    %428 = arith.subi %c7_i32_101, %c6_i32 : i32
    %c8_i32_102 = arith.constant 8 : i32
    %429 = arith.muli %428, %c8_i32_102 : i32
    %430 = tpu.assume_multiple %429, 8 : i32
    %431 = arith.truncf %396 : vector<8x32xf32> to vector<8x32xbf16>
    %cst_103 = arith.constant dense<0.000000e+00> : vector<8x128xf32>
    %432 = tpu.matmul %431, %9, %cst_103 {dimension_numbers = #tpu.dot_dimension_numbers<[1], [0], [0], [1], [0, 0, 1, 1], [], []>} : vector<8x32xbf16>, vector<32x128xbf16>, vector<8x128xf32> -> vector<8x128xf32>
    %433 = arith.truncf %421 : vector<8x32xf32> to vector<8x32xbf16>
    %cst_104 = arith.constant dense<0.000000e+00> : vector<8x128xf32>
    %434 = tpu.matmul %433, %10, %cst_104 {dimension_numbers = #tpu.dot_dimension_numbers<[1], [0], [0], [1], [0, 0, 1, 1], [], []>} : vector<8x32xbf16>, vector<32x128xbf16>, vector<8x128xf32> -> vector<8x128xf32>
    %435 = arith.index_cast %427 : i32 to index
    %c0_105 = arith.constant 0 : index
    %436 = vector.load %arg14[%435, %c0_105] : memref<64x256xf32, #tpu.memory_space<vmem>>, vector<8x128xf32>
    %437 = arith.addf %436, %432 : vector<8x128xf32>
    %438 = arith.index_cast %430 : i32 to index
    %c128_106 = arith.constant 128 : index
    %439 = vector.load %arg14[%438, %c128_106] : memref<64x256xf32, #tpu.memory_space<vmem>>, vector<8x128xf32>
    %440 = arith.addf %439, %434 : vector<8x128xf32>
    %441 = vector.extract_strided_slice %437 {offsets = [0, 0], sizes = [8, 32], strides = [1, 1]} : vector<8x128xf32> to vector<8x32xf32>
    %442 = arith.negf %441 : vector<8x32xf32>
    %443 = math.exp %442 : vector<8x32xf32>
    %cst_107 = arith.constant 1.000000e+00 : f32
    %444 = vector.broadcast %cst_107 : f32 to vector<8x32xf32>
    %445 = arith.addf %444, %443 : vector<8x32xf32>
    %446 = arith.divf %444, %445 : vector<8x32xf32>
    %447 = vector.extract_strided_slice %437 {offsets = [0, 32], sizes = [8, 32], strides = [1, 1]} : vector<8x128xf32> to vector<8x32xf32>
    %448 = arith.negf %447 : vector<8x32xf32>
    %449 = math.exp %448 : vector<8x32xf32>
    %cst_108 = arith.constant 1.000000e+00 : f32
    %450 = vector.broadcast %cst_108 : f32 to vector<8x32xf32>
    %451 = arith.addf %450, %449 : vector<8x32xf32>
    %452 = arith.divf %450, %451 : vector<8x32xf32>
    %453 = vector.extract_strided_slice %437 {offsets = [0, 64], sizes = [8, 32], strides = [1, 1]} : vector<8x128xf32> to vector<8x32xf32>
    %454 = math.tanh %453 : vector<8x32xf32>
    %455 = vector.extract_strided_slice %437 {offsets = [0, 96], sizes = [8, 32], strides = [1, 1]} : vector<8x128xf32> to vector<8x32xf32>
    %456 = arith.negf %455 : vector<8x32xf32>
    %457 = math.exp %456 : vector<8x32xf32>
    %cst_109 = arith.constant 1.000000e+00 : f32
    %458 = vector.broadcast %cst_109 : f32 to vector<8x32xf32>
    %459 = arith.addf %458, %457 : vector<8x32xf32>
    %460 = arith.divf %458, %459 : vector<8x32xf32>
    %461 = arith.mulf %452, %394 : vector<8x32xf32>
    %462 = arith.mulf %446, %454 : vector<8x32xf32>
    %463 = arith.addf %461, %462 : vector<8x32xf32>
    %464 = math.tanh %463 : vector<8x32xf32>
    %465 = arith.mulf %460, %464 : vector<8x32xf32>
    %466 = vector.extract_strided_slice %440 {offsets = [0, 0], sizes = [8, 32], strides = [1, 1]} : vector<8x128xf32> to vector<8x32xf32>
    %467 = arith.negf %466 : vector<8x32xf32>
    %468 = math.exp %467 : vector<8x32xf32>
    %cst_110 = arith.constant 1.000000e+00 : f32
    %469 = vector.broadcast %cst_110 : f32 to vector<8x32xf32>
    %470 = arith.addf %469, %468 : vector<8x32xf32>
    %471 = arith.divf %469, %470 : vector<8x32xf32>
    %472 = vector.extract_strided_slice %440 {offsets = [0, 32], sizes = [8, 32], strides = [1, 1]} : vector<8x128xf32> to vector<8x32xf32>
    %473 = arith.negf %472 : vector<8x32xf32>
    %474 = math.exp %473 : vector<8x32xf32>
    %cst_111 = arith.constant 1.000000e+00 : f32
    %475 = vector.broadcast %cst_111 : f32 to vector<8x32xf32>
    %476 = arith.addf %475, %474 : vector<8x32xf32>
    %477 = arith.divf %475, %476 : vector<8x32xf32>
    %478 = vector.extract_strided_slice %440 {offsets = [0, 64], sizes = [8, 32], strides = [1, 1]} : vector<8x128xf32> to vector<8x32xf32>
    %479 = math.tanh %478 : vector<8x32xf32>
    %480 = vector.extract_strided_slice %440 {offsets = [0, 96], sizes = [8, 32], strides = [1, 1]} : vector<8x128xf32> to vector<8x32xf32>
    %481 = arith.negf %480 : vector<8x32xf32>
    %482 = math.exp %481 : vector<8x32xf32>
    %cst_112 = arith.constant 1.000000e+00 : f32
    %483 = vector.broadcast %cst_112 : f32 to vector<8x32xf32>
    %484 = arith.addf %483, %482 : vector<8x32xf32>
    %485 = arith.divf %483, %484 : vector<8x32xf32>
    %486 = arith.mulf %477, %419 : vector<8x32xf32>
    %487 = arith.mulf %471, %479 : vector<8x32xf32>
    %488 = arith.addf %486, %487 : vector<8x32xf32>
    %489 = math.tanh %488 : vector<8x32xf32>
    %490 = arith.mulf %485, %489 : vector<8x32xf32>
    %491 = arith.index_cast %427 : i32 to index
    %c0_113 = arith.constant 0 : index
    %492 = vector.load %arg15[%491, %c0_113] : memref<64x32xf32, #tpu.memory_space<vmem>>, vector<8x32xf32>
    tpu.vector_store %arg15[%491, %c0_113], %465 {strides = array<i32>} : memref<64x32xf32, #tpu.memory_space<vmem>>, vector<8x32xf32>,
    %493 = arith.index_cast %430 : i32 to index
    %c0_114 = arith.constant 0 : index
    %494 = vector.load %arg16[%493, %c0_114] : memref<64x32xf32, #tpu.memory_space<vmem>>, vector<8x32xf32>
    tpu.vector_store %arg16[%493, %c0_114], %490 {strides = array<i32>} : memref<64x32xf32, #tpu.memory_space<vmem>>, vector<8x32xf32>,
    %c7_i32_115 = arith.constant 7 : i32
    %c8_i32_116 = arith.constant 8 : i32
    %495 = arith.muli %c7_i32_115, %c8_i32_116 : i32
    %496 = tpu.assume_multiple %495, 8 : i32
    %c7_i32_117 = arith.constant 7 : i32
    %497 = arith.subi %c7_i32_117, %c7_i32_115 : i32
    %c8_i32_118 = arith.constant 8 : i32
    %498 = arith.muli %497, %c8_i32_118 : i32
    %499 = tpu.assume_multiple %498, 8 : i32
    %500 = arith.truncf %465 : vector<8x32xf32> to vector<8x32xbf16>
    %cst_119 = arith.constant dense<0.000000e+00> : vector<8x128xf32>
    %501 = tpu.matmul %500, %9, %cst_119 {dimension_numbers = #tpu.dot_dimension_numbers<[1], [0], [0], [1], [0, 0, 1, 1], [], []>} : vector<8x32xbf16>, vector<32x128xbf16>, vector<8x128xf32> -> vector<8x128xf32>
    %502 = arith.truncf %490 : vector<8x32xf32> to vector<8x32xbf16>
    %cst_120 = arith.constant dense<0.000000e+00> : vector<8x128xf32>
    %503 = tpu.matmul %502, %10, %cst_120 {dimension_numbers = #tpu.dot_dimension_numbers<[1], [0], [0], [1], [0, 0, 1, 1], [], []>} : vector<8x32xbf16>, vector<32x128xbf16>, vector<8x128xf32> -> vector<8x128xf32>
    %504 = arith.index_cast %496 : i32 to index
    %c0_121 = arith.constant 0 : index
    %505 = vector.load %arg14[%504, %c0_121] : memref<64x256xf32, #tpu.memory_space<vmem>>, vector<8x128xf32>
    %506 = arith.addf %505, %501 : vector<8x128xf32>
    %507 = arith.index_cast %499 : i32 to index
    %c128_122 = arith.constant 128 : index
    %508 = vector.load %arg14[%507, %c128_122] : memref<64x256xf32, #tpu.memory_space<vmem>>, vector<8x128xf32>
    %509 = arith.addf %508, %503 : vector<8x128xf32>
    %510 = vector.extract_strided_slice %506 {offsets = [0, 0], sizes = [8, 32], strides = [1, 1]} : vector<8x128xf32> to vector<8x32xf32>
    %511 = arith.negf %510 : vector<8x32xf32>
    %512 = math.exp %511 : vector<8x32xf32>
    %cst_123 = arith.constant 1.000000e+00 : f32
    %513 = vector.broadcast %cst_123 : f32 to vector<8x32xf32>
    %514 = arith.addf %513, %512 : vector<8x32xf32>
    %515 = arith.divf %513, %514 : vector<8x32xf32>
    %516 = vector.extract_strided_slice %506 {offsets = [0, 32], sizes = [8, 32], strides = [1, 1]} : vector<8x128xf32> to vector<8x32xf32>
    %517 = arith.negf %516 : vector<8x32xf32>
    %518 = math.exp %517 : vector<8x32xf32>
    %cst_124 = arith.constant 1.000000e+00 : f32
    %519 = vector.broadcast %cst_124 : f32 to vector<8x32xf32>
    %520 = arith.addf %519, %518 : vector<8x32xf32>
    %521 = arith.divf %519, %520 : vector<8x32xf32>
    %522 = vector.extract_strided_slice %506 {offsets = [0, 64], sizes = [8, 32], strides = [1, 1]} : vector<8x128xf32> to vector<8x32xf32>
    %523 = math.tanh %522 : vector<8x32xf32>
    %524 = vector.extract_strided_slice %506 {offsets = [0, 96], sizes = [8, 32], strides = [1, 1]} : vector<8x128xf32> to vector<8x32xf32>
    %525 = arith.negf %524 : vector<8x32xf32>
    %526 = math.exp %525 : vector<8x32xf32>
    %cst_125 = arith.constant 1.000000e+00 : f32
    %527 = vector.broadcast %cst_125 : f32 to vector<8x32xf32>
    %528 = arith.addf %527, %526 : vector<8x32xf32>
    %529 = arith.divf %527, %528 : vector<8x32xf32>
    %530 = arith.mulf %521, %463 : vector<8x32xf32>
    %531 = arith.mulf %515, %523 : vector<8x32xf32>
    %532 = arith.addf %530, %531 : vector<8x32xf32>
    %533 = math.tanh %532 : vector<8x32xf32>
    %534 = arith.mulf %529, %533 : vector<8x32xf32>
    %535 = vector.extract_strided_slice %509 {offsets = [0, 0], sizes = [8, 32], strides = [1, 1]} : vector<8x128xf32> to vector<8x32xf32>
    %536 = arith.negf %535 : vector<8x32xf32>
    %537 = math.exp %536 : vector<8x32xf32>
    %cst_126 = arith.constant 1.000000e+00 : f32
    %538 = vector.broadcast %cst_126 : f32 to vector<8x32xf32>
    %539 = arith.addf %538, %537 : vector<8x32xf32>
    %540 = arith.divf %538, %539 : vector<8x32xf32>
    %541 = vector.extract_strided_slice %509 {offsets = [0, 32], sizes = [8, 32], strides = [1, 1]} : vector<8x128xf32> to vector<8x32xf32>
    %542 = arith.negf %541 : vector<8x32xf32>
    %543 = math.exp %542 : vector<8x32xf32>
    %cst_127 = arith.constant 1.000000e+00 : f32
    %544 = vector.broadcast %cst_127 : f32 to vector<8x32xf32>
    %545 = arith.addf %544, %543 : vector<8x32xf32>
    %546 = arith.divf %544, %545 : vector<8x32xf32>
    %547 = vector.extract_strided_slice %509 {offsets = [0, 64], sizes = [8, 32], strides = [1, 1]} : vector<8x128xf32> to vector<8x32xf32>
    %548 = math.tanh %547 : vector<8x32xf32>
    %549 = vector.extract_strided_slice %509 {offsets = [0, 96], sizes = [8, 32], strides = [1, 1]} : vector<8x128xf32> to vector<8x32xf32>
    %550 = arith.negf %549 : vector<8x32xf32>
    %551 = math.exp %550 : vector<8x32xf32>
    %cst_128 = arith.constant 1.000000e+00 : f32
    %552 = vector.broadcast %cst_128 : f32 to vector<8x32xf32>
    %553 = arith.addf %552, %551 : vector<8x32xf32>
    %554 = arith.divf %552, %553 : vector<8x32xf32>
    %555 = arith.mulf %546, %488 : vector<8x32xf32>
    %556 = arith.mulf %540, %548 : vector<8x32xf32>
    %557 = arith.addf %555, %556 : vector<8x32xf32>
    %558 = math.tanh %557 : vector<8x32xf32>
    %559 = arith.mulf %554, %558 : vector<8x32xf32>
    %560 = arith.index_cast %496 : i32 to index
    %c0_129 = arith.constant 0 : index
    %561 = vector.load %arg15[%560, %c0_129] : memref<64x32xf32, #tpu.memory_space<vmem>>, vector<8x32xf32>
    tpu.vector_store %arg15[%560, %c0_129], %534 {strides = array<i32>} : memref<64x32xf32, #tpu.memory_space<vmem>>, vector<8x32xf32>,
    %562 = arith.index_cast %499 : i32 to index
    %c0_130 = arith.constant 0 : index
    %563 = vector.load %arg16[%562, %c0_130] : memref<64x32xf32, #tpu.memory_space<vmem>>, vector<8x32xf32>
    tpu.vector_store %arg16[%562, %c0_130], %559 {strides = array<i32>} : memref<64x32xf32, #tpu.memory_space<vmem>>, vector<8x32xf32>,
    %c8_i32_131 = arith.constant 8 : i32
    %c0_132 = arith.constant 0 : index
    %c0_133 = arith.constant 0 : index
    %564 = vector.load %arg15[%c0_132, %c0_133] : memref<64x32xf32, #tpu.memory_space<vmem>>, vector<64x32xf32>
    %565 = arith.truncf %564 : vector<64x32xf32> to vector<64x32xbf16>
    %c0_134 = arith.constant 0 : index
    %c0_135 = arith.constant 0 : index
    %566 = vector.load %arg6[%c0_134, %c0_135] : memref<64x256xbf16, #tpu.memory_space<vmem>>, vector<32x256xbf16>
    %cst_136 = arith.constant dense<0.000000e+00> : vector<64x256xf32>
    %567 = tpu.matmul %565, %566, %cst_136 {dimension_numbers = #tpu.dot_dimension_numbers<[1], [0], [0], [1], [0, 0, 1, 1], [], []>} : vector<64x32xbf16>, vector<32x256xbf16>, vector<64x256xf32> -> vector<64x256xf32>
    %c0_137 = arith.constant 0 : index
    %c0_138 = arith.constant 0 : index
    %568 = vector.load %arg16[%c0_137, %c0_138] : memref<64x32xf32, #tpu.memory_space<vmem>>, vector<64x32xf32>
    %569 = arith.truncf %568 : vector<64x32xf32> to vector<64x32xbf16>
    %c32 = arith.constant 32 : index
    %c0_139 = arith.constant 0 : index
    %570 = vector.load %arg6[%c32, %c0_139] : memref<64x256xbf16, #tpu.memory_space<vmem>>, vector<32x256xbf16>
    %cst_140 = arith.constant dense<0.000000e+00> : vector<64x256xf32>
    %571 = tpu.matmul %569, %570, %cst_140 {dimension_numbers = #tpu.dot_dimension_numbers<[1], [0], [0], [1], [0, 0, 1, 1], [], []>} : vector<64x32xbf16>, vector<32x256xbf16>, vector<64x256xf32> -> vector<64x256xf32>
    %572 = arith.addf %567, %571 : vector<64x256xf32>
    %c0_141 = arith.constant 0 : index
    %c0_142 = arith.constant 0 : index
    %573 = vector.load %arg9[%c0_141, %c0_142] : memref<1x256xf32, #tpu.memory_space<vmem>>, vector<1x256xf32>
    %574 = vector.broadcast %573 : vector<1x256xf32> to vector<64x256xf32>
    %575 = arith.addf %572, %574 : vector<64x256xf32>
    %c0_143 = arith.constant 0 : index
    %c0_144 = arith.constant 0 : index
    %576 = vector.load %arg14[%c0_143, %c0_144] : memref<64x256xf32, #tpu.memory_space<vmem>>, vector<64x256xf32>
    tpu.vector_store %arg14[%c0_143, %c0_144], %575 {strides = array<i32>} : memref<64x256xf32, #tpu.memory_space<vmem>>, vector<64x256xf32>,
    %c0_145 = arith.constant 0 : index
    %c0_146 = arith.constant 0 : index
    %577 = vector.load %arg7[%c0_145, %c0_146] : memref<32x128xbf16, #tpu.memory_space<vmem>>, vector<32x128xbf16>
    %c0_147 = arith.constant 0 : index
    %c0_148 = arith.constant 0 : index
    %578 = vector.load %arg8[%c0_147, %c0_148] : memref<32x128xbf16, #tpu.memory_space<vmem>>, vector<32x128xbf16>
    %cst_149 = arith.constant 0.000000e+00 : f32
    %579 = vector.broadcast %cst_149 : f32 to vector<8x32xf32>
    %c0_i32_150 = arith.constant 0 : i32
    %c8_i32_151 = arith.constant 8 : i32
    %580 = arith.muli %c0_i32_150, %c8_i32_151 : i32
    %581 = tpu.assume_multiple %580, 8 : i32
    %c7_i32_152 = arith.constant 7 : i32
    %582 = arith.subi %c7_i32_152, %c0_i32_150 : i32
    %c8_i32_153 = arith.constant 8 : i32
    %583 = arith.muli %582, %c8_i32_153 : i32
    %584 = tpu.assume_multiple %583, 8 : i32
    %585 = arith.truncf %579 : vector<8x32xf32> to vector<8x32xbf16>
    %cst_154 = arith.constant dense<0.000000e+00> : vector<8x128xf32>
    %586 = tpu.matmul %585, %577, %cst_154 {dimension_numbers = #tpu.dot_dimension_numbers<[1], [0], [0], [1], [0, 0, 1, 1], [], []>} : vector<8x32xbf16>, vector<32x128xbf16>, vector<8x128xf32> -> vector<8x128xf32>
    %587 = arith.truncf %579 : vector<8x32xf32> to vector<8x32xbf16>
    %cst_155 = arith.constant dense<0.000000e+00> : vector<8x128xf32>
    %588 = tpu.matmul %587, %578, %cst_155 {dimension_numbers = #tpu.dot_dimension_numbers<[1], [0], [0], [1], [0, 0, 1, 1], [], []>} : vector<8x32xbf16>, vector<32x128xbf16>, vector<8x128xf32> -> vector<8x128xf32>
    %589 = arith.index_cast %581 : i32 to index
    %c0_156 = arith.constant 0 : index
    %590 = vector.load %arg14[%589, %c0_156] : memref<64x256xf32, #tpu.memory_space<vmem>>, vector<8x128xf32>
    %591 = arith.addf %590, %586 : vector<8x128xf32>
    %592 = arith.index_cast %584 : i32 to index
    %c128_157 = arith.constant 128 : index
    %593 = vector.load %arg14[%592, %c128_157] : memref<64x256xf32, #tpu.memory_space<vmem>>, vector<8x128xf32>
    %594 = arith.addf %593, %588 : vector<8x128xf32>
    %595 = vector.extract_strided_slice %591 {offsets = [0, 0], sizes = [8, 32], strides = [1, 1]} : vector<8x128xf32> to vector<8x32xf32>
    %596 = arith.negf %595 : vector<8x32xf32>
    %597 = math.exp %596 : vector<8x32xf32>
    %cst_158 = arith.constant 1.000000e+00 : f32
    %598 = vector.broadcast %cst_158 : f32 to vector<8x32xf32>
    %599 = arith.addf %598, %597 : vector<8x32xf32>
    %600 = arith.divf %598, %599 : vector<8x32xf32>
    %601 = vector.extract_strided_slice %591 {offsets = [0, 32], sizes = [8, 32], strides = [1, 1]} : vector<8x128xf32> to vector<8x32xf32>
    %602 = arith.negf %601 : vector<8x32xf32>
    %603 = math.exp %602 : vector<8x32xf32>
    %cst_159 = arith.constant 1.000000e+00 : f32
    %604 = vector.broadcast %cst_159 : f32 to vector<8x32xf32>
    %605 = arith.addf %604, %603 : vector<8x32xf32>
    %606 = arith.divf %604, %605 : vector<8x32xf32>
    %607 = vector.extract_strided_slice %591 {offsets = [0, 64], sizes = [8, 32], strides = [1, 1]} : vector<8x128xf32> to vector<8x32xf32>
    %608 = math.tanh %607 : vector<8x32xf32>
    %609 = vector.extract_strided_slice %591 {offsets = [0, 96], sizes = [8, 32], strides = [1, 1]} : vector<8x128xf32> to vector<8x32xf32>
    %610 = arith.negf %609 : vector<8x32xf32>
    %611 = math.exp %610 : vector<8x32xf32>
    %cst_160 = arith.constant 1.000000e+00 : f32
    %612 = vector.broadcast %cst_160 : f32 to vector<8x32xf32>
    %613 = arith.addf %612, %611 : vector<8x32xf32>
    %614 = arith.divf %612, %613 : vector<8x32xf32>
    %615 = arith.mulf %606, %579 : vector<8x32xf32>
    %616 = arith.mulf %600, %608 : vector<8x32xf32>
    %617 = arith.addf %615, %616 : vector<8x32xf32>
    %618 = math.tanh %617 : vector<8x32xf32>
    %619 = arith.mulf %614, %618 : vector<8x32xf32>
    %620 = vector.extract_strided_slice %594 {offsets = [0, 0], sizes = [8, 32], strides = [1, 1]} : vector<8x128xf32> to vector<8x32xf32>
    %621 = arith.negf %620 : vector<8x32xf32>
    %622 = math.exp %621 : vector<8x32xf32>
    %cst_161 = arith.constant 1.000000e+00 : f32
    %623 = vector.broadcast %cst_161 : f32 to vector<8x32xf32>
    %624 = arith.addf %623, %622 : vector<8x32xf32>
    %625 = arith.divf %623, %624 : vector<8x32xf32>
    %626 = vector.extract_strided_slice %594 {offsets = [0, 32], sizes = [8, 32], strides = [1, 1]} : vector<8x128xf32> to vector<8x32xf32>
    %627 = arith.negf %626 : vector<8x32xf32>
    %628 = math.exp %627 : vector<8x32xf32>
    %cst_162 = arith.constant 1.000000e+00 : f32
    %629 = vector.broadcast %cst_162 : f32 to vector<8x32xf32>
    %630 = arith.addf %629, %628 : vector<8x32xf32>
    %631 = arith.divf %629, %630 : vector<8x32xf32>
    %632 = vector.extract_strided_slice %594 {offsets = [0, 64], sizes = [8, 32], strides = [1, 1]} : vector<8x128xf32> to vector<8x32xf32>
    %633 = math.tanh %632 : vector<8x32xf32>
    %634 = vector.extract_strided_slice %594 {offsets = [0, 96], sizes = [8, 32], strides = [1, 1]} : vector<8x128xf32> to vector<8x32xf32>
    %635 = arith.negf %634 : vector<8x32xf32>
    %636 = math.exp %635 : vector<8x32xf32>
    %cst_163 = arith.constant 1.000000e+00 : f32
    %637 = vector.broadcast %cst_163 : f32 to vector<8x32xf32>
    %638 = arith.addf %637, %636 : vector<8x32xf32>
    %639 = arith.divf %637, %638 : vector<8x32xf32>
    %640 = arith.mulf %631, %579 : vector<8x32xf32>
    %641 = arith.mulf %625, %633 : vector<8x32xf32>
    %642 = arith.addf %640, %641 : vector<8x32xf32>
    %643 = math.tanh %642 : vector<8x32xf32>
    %644 = arith.mulf %639, %643 : vector<8x32xf32>
    %645 = arith.index_cast %581 : i32 to index
    %c0_164 = arith.constant 0 : index
    %646 = vector.load %arg15[%645, %c0_164] : memref<64x32xf32, #tpu.memory_space<vmem>>, vector<8x32xf32>
    tpu.vector_store %arg15[%645, %c0_164], %619 {strides = array<i32>} : memref<64x32xf32, #tpu.memory_space<vmem>>, vector<8x32xf32>,
    %647 = arith.index_cast %584 : i32 to index
    %c0_165 = arith.constant 0 : index
    %648 = vector.load %arg16[%647, %c0_165] : memref<64x32xf32, #tpu.memory_space<vmem>>, vector<8x32xf32>
    tpu.vector_store %arg16[%647, %c0_165], %644 {strides = array<i32>} : memref<64x32xf32, #tpu.memory_space<vmem>>, vector<8x32xf32>,
    %c1_i32_166 = arith.constant 1 : i32
    %c8_i32_167 = arith.constant 8 : i32
    %649 = arith.muli %c1_i32_166, %c8_i32_167 : i32
    %650 = tpu.assume_multiple %649, 8 : i32
    %c7_i32_168 = arith.constant 7 : i32
    %651 = arith.subi %c7_i32_168, %c1_i32_166 : i32
    %c8_i32_169 = arith.constant 8 : i32
    %652 = arith.muli %651, %c8_i32_169 : i32
    %653 = tpu.assume_multiple %652, 8 : i32
    %654 = arith.truncf %619 : vector<8x32xf32> to vector<8x32xbf16>
    %cst_170 = arith.constant dense<0.000000e+00> : vector<8x128xf32>
    %655 = tpu.matmul %654, %577, %cst_170 {dimension_numbers = #tpu.dot_dimension_numbers<[1], [0], [0], [1], [0, 0, 1, 1], [], []>} : vector<8x32xbf16>, vector<32x128xbf16>, vector<8x128xf32> -> vector<8x128xf32>
    %656 = arith.truncf %644 : vector<8x32xf32> to vector<8x32xbf16>
    %cst_171 = arith.constant dense<0.000000e+00> : vector<8x128xf32>
    %657 = tpu.matmul %656, %578, %cst_171 {dimension_numbers = #tpu.dot_dimension_numbers<[1], [0], [0], [1], [0, 0, 1, 1], [], []>} : vector<8x32xbf16>, vector<32x128xbf16>, vector<8x128xf32> -> vector<8x128xf32>
    %658 = arith.index_cast %650 : i32 to index
    %c0_172 = arith.constant 0 : index
    %659 = vector.load %arg14[%658, %c0_172] : memref<64x256xf32, #tpu.memory_space<vmem>>, vector<8x128xf32>
    %660 = arith.addf %659, %655 : vector<8x128xf32>
    %661 = arith.index_cast %653 : i32 to index
    %c128_173 = arith.constant 128 : index
    %662 = vector.load %arg14[%661, %c128_173] : memref<64x256xf32, #tpu.memory_space<vmem>>, vector<8x128xf32>
    %663 = arith.addf %662, %657 : vector<8x128xf32>
    %664 = vector.extract_strided_slice %660 {offsets = [0, 0], sizes = [8, 32], strides = [1, 1]} : vector<8x128xf32> to vector<8x32xf32>
    %665 = arith.negf %664 : vector<8x32xf32>
    %666 = math.exp %665 : vector<8x32xf32>
    %cst_174 = arith.constant 1.000000e+00 : f32
    %667 = vector.broadcast %cst_174 : f32 to vector<8x32xf32>
    %668 = arith.addf %667, %666 : vector<8x32xf32>
    %669 = arith.divf %667, %668 : vector<8x32xf32>
    %670 = vector.extract_strided_slice %660 {offsets = [0, 32], sizes = [8, 32], strides = [1, 1]} : vector<8x128xf32> to vector<8x32xf32>
    %671 = arith.negf %670 : vector<8x32xf32>
    %672 = math.exp %671 : vector<8x32xf32>
    %cst_175 = arith.constant 1.000000e+00 : f32
    %673 = vector.broadcast %cst_175 : f32 to vector<8x32xf32>
    %674 = arith.addf %673, %672 : vector<8x32xf32>
    %675 = arith.divf %673, %674 : vector<8x32xf32>
    %676 = vector.extract_strided_slice %660 {offsets = [0, 64], sizes = [8, 32], strides = [1, 1]} : vector<8x128xf32> to vector<8x32xf32>
    %677 = math.tanh %676 : vector<8x32xf32>
    %678 = vector.extract_strided_slice %660 {offsets = [0, 96], sizes = [8, 32], strides = [1, 1]} : vector<8x128xf32> to vector<8x32xf32>
    %679 = arith.negf %678 : vector<8x32xf32>
    %680 = math.exp %679 : vector<8x32xf32>
    %cst_176 = arith.constant 1.000000e+00 : f32
    %681 = vector.broadcast %cst_176 : f32 to vector<8x32xf32>
    %682 = arith.addf %681, %680 : vector<8x32xf32>
    %683 = arith.divf %681, %682 : vector<8x32xf32>
    %684 = arith.mulf %675, %617 : vector<8x32xf32>
    %685 = arith.mulf %669, %677 : vector<8x32xf32>
    %686 = arith.addf %684, %685 : vector<8x32xf32>
    %687 = math.tanh %686 : vector<8x32xf32>
    %688 = arith.mulf %683, %687 : vector<8x32xf32>
    %689 = vector.extract_strided_slice %663 {offsets = [0, 0], sizes = [8, 32], strides = [1, 1]} : vector<8x128xf32> to vector<8x32xf32>
    %690 = arith.negf %689 : vector<8x32xf32>
    %691 = math.exp %690 : vector<8x32xf32>
    %cst_177 = arith.constant 1.000000e+00 : f32
    %692 = vector.broadcast %cst_177 : f32 to vector<8x32xf32>
    %693 = arith.addf %692, %691 : vector<8x32xf32>
    %694 = arith.divf %692, %693 : vector<8x32xf32>
    %695 = vector.extract_strided_slice %663 {offsets = [0, 32], sizes = [8, 32], strides = [1, 1]} : vector<8x128xf32> to vector<8x32xf32>
    %696 = arith.negf %695 : vector<8x32xf32>
    %697 = math.exp %696 : vector<8x32xf32>
    %cst_178 = arith.constant 1.000000e+00 : f32
    %698 = vector.broadcast %cst_178 : f32 to vector<8x32xf32>
    %699 = arith.addf %698, %697 : vector<8x32xf32>
    %700 = arith.divf %698, %699 : vector<8x32xf32>
    %701 = vector.extract_strided_slice %663 {offsets = [0, 64], sizes = [8, 32], strides = [1, 1]} : vector<8x128xf32> to vector<8x32xf32>
    %702 = math.tanh %701 : vector<8x32xf32>
    %703 = vector.extract_strided_slice %663 {offsets = [0, 96], sizes = [8, 32], strides = [1, 1]} : vector<8x128xf32> to vector<8x32xf32>
    %704 = arith.negf %703 : vector<8x32xf32>
    %705 = math.exp %704 : vector<8x32xf32>
    %cst_179 = arith.constant 1.000000e+00 : f32
    %706 = vector.broadcast %cst_179 : f32 to vector<8x32xf32>
    %707 = arith.addf %706, %705 : vector<8x32xf32>
    %708 = arith.divf %706, %707 : vector<8x32xf32>
    %709 = arith.mulf %700, %642 : vector<8x32xf32>
    %710 = arith.mulf %694, %702 : vector<8x32xf32>
    %711 = arith.addf %709, %710 : vector<8x32xf32>
    %712 = math.tanh %711 : vector<8x32xf32>
    %713 = arith.mulf %708, %712 : vector<8x32xf32>
    %714 = arith.index_cast %650 : i32 to index
    %c0_180 = arith.constant 0 : index
    %715 = vector.load %arg15[%714, %c0_180] : memref<64x32xf32, #tpu.memory_space<vmem>>, vector<8x32xf32>
    tpu.vector_store %arg15[%714, %c0_180], %688 {strides = array<i32>} : memref<64x32xf32, #tpu.memory_space<vmem>>, vector<8x32xf32>,
    %716 = arith.index_cast %653 : i32 to index
    %c0_181 = arith.constant 0 : index
    %717 = vector.load %arg16[%716, %c0_181] : memref<64x32xf32, #tpu.memory_space<vmem>>, vector<8x32xf32>
    tpu.vector_store %arg16[%716, %c0_181], %713 {strides = array<i32>} : memref<64x32xf32, #tpu.memory_space<vmem>>, vector<8x32xf32>,
    %c2_i32_182 = arith.constant 2 : i32
    %c8_i32_183 = arith.constant 8 : i32
    %718 = arith.muli %c2_i32_182, %c8_i32_183 : i32
    %719 = tpu.assume_multiple %718, 8 : i32
    %c7_i32_184 = arith.constant 7 : i32
    %720 = arith.subi %c7_i32_184, %c2_i32_182 : i32
    %c8_i32_185 = arith.constant 8 : i32
    %721 = arith.muli %720, %c8_i32_185 : i32
    %722 = tpu.assume_multiple %721, 8 : i32
    %723 = arith.truncf %688 : vector<8x32xf32> to vector<8x32xbf16>
    %cst_186 = arith.constant dense<0.000000e+00> : vector<8x128xf32>
    %724 = tpu.matmul %723, %577, %cst_186 {dimension_numbers = #tpu.dot_dimension_numbers<[1], [0], [0], [1], [0, 0, 1, 1], [], []>} : vector<8x32xbf16>, vector<32x128xbf16>, vector<8x128xf32> -> vector<8x128xf32>
    %725 = arith.truncf %713 : vector<8x32xf32> to vector<8x32xbf16>
    %cst_187 = arith.constant dense<0.000000e+00> : vector<8x128xf32>
    %726 = tpu.matmul %725, %578, %cst_187 {dimension_numbers = #tpu.dot_dimension_numbers<[1], [0], [0], [1], [0, 0, 1, 1], [], []>} : vector<8x32xbf16>, vector<32x128xbf16>, vector<8x128xf32> -> vector<8x128xf32>
    %727 = arith.index_cast %719 : i32 to index
    %c0_188 = arith.constant 0 : index
    %728 = vector.load %arg14[%727, %c0_188] : memref<64x256xf32, #tpu.memory_space<vmem>>, vector<8x128xf32>
    %729 = arith.addf %728, %724 : vector<8x128xf32>
    %730 = arith.index_cast %722 : i32 to index
    %c128_189 = arith.constant 128 : index
    %731 = vector.load %arg14[%730, %c128_189] : memref<64x256xf32, #tpu.memory_space<vmem>>, vector<8x128xf32>
    %732 = arith.addf %731, %726 : vector<8x128xf32>
    %733 = vector.extract_strided_slice %729 {offsets = [0, 0], sizes = [8, 32], strides = [1, 1]} : vector<8x128xf32> to vector<8x32xf32>
    %734 = arith.negf %733 : vector<8x32xf32>
    %735 = math.exp %734 : vector<8x32xf32>
    %cst_190 = arith.constant 1.000000e+00 : f32
    %736 = vector.broadcast %cst_190 : f32 to vector<8x32xf32>
    %737 = arith.addf %736, %735 : vector<8x32xf32>
    %738 = arith.divf %736, %737 : vector<8x32xf32>
    %739 = vector.extract_strided_slice %729 {offsets = [0, 32], sizes = [8, 32], strides = [1, 1]} : vector<8x128xf32> to vector<8x32xf32>
    %740 = arith.negf %739 : vector<8x32xf32>
    %741 = math.exp %740 : vector<8x32xf32>
    %cst_191 = arith.constant 1.000000e+00 : f32
    %742 = vector.broadcast %cst_191 : f32 to vector<8x32xf32>
    %743 = arith.addf %742, %741 : vector<8x32xf32>
    %744 = arith.divf %742, %743 : vector<8x32xf32>
    %745 = vector.extract_strided_slice %729 {offsets = [0, 64], sizes = [8, 32], strides = [1, 1]} : vector<8x128xf32> to vector<8x32xf32>
    %746 = math.tanh %745 : vector<8x32xf32>
    %747 = vector.extract_strided_slice %729 {offsets = [0, 96], sizes = [8, 32], strides = [1, 1]} : vector<8x128xf32> to vector<8x32xf32>
    %748 = arith.negf %747 : vector<8x32xf32>
    %749 = math.exp %748 : vector<8x32xf32>
    %cst_192 = arith.constant 1.000000e+00 : f32
    %750 = vector.broadcast %cst_192 : f32 to vector<8x32xf32>
    %751 = arith.addf %750, %749 : vector<8x32xf32>
    %752 = arith.divf %750, %751 : vector<8x32xf32>
    %753 = arith.mulf %744, %686 : vector<8x32xf32>
    %754 = arith.mulf %738, %746 : vector<8x32xf32>
    %755 = arith.addf %753, %754 : vector<8x32xf32>
    %756 = math.tanh %755 : vector<8x32xf32>
    %757 = arith.mulf %752, %756 : vector<8x32xf32>
    %758 = vector.extract_strided_slice %732 {offsets = [0, 0], sizes = [8, 32], strides = [1, 1]} : vector<8x128xf32> to vector<8x32xf32>
    %759 = arith.negf %758 : vector<8x32xf32>
    %760 = math.exp %759 : vector<8x32xf32>
    %cst_193 = arith.constant 1.000000e+00 : f32
    %761 = vector.broadcast %cst_193 : f32 to vector<8x32xf32>
    %762 = arith.addf %761, %760 : vector<8x32xf32>
    %763 = arith.divf %761, %762 : vector<8x32xf32>
    %764 = vector.extract_strided_slice %732 {offsets = [0, 32], sizes = [8, 32], strides = [1, 1]} : vector<8x128xf32> to vector<8x32xf32>
    %765 = arith.negf %764 : vector<8x32xf32>
    %766 = math.exp %765 : vector<8x32xf32>
    %cst_194 = arith.constant 1.000000e+00 : f32
    %767 = vector.broadcast %cst_194 : f32 to vector<8x32xf32>
    %768 = arith.addf %767, %766 : vector<8x32xf32>
    %769 = arith.divf %767, %768 : vector<8x32xf32>
    %770 = vector.extract_strided_slice %732 {offsets = [0, 64], sizes = [8, 32], strides = [1, 1]} : vector<8x128xf32> to vector<8x32xf32>
    %771 = math.tanh %770 : vector<8x32xf32>
    %772 = vector.extract_strided_slice %732 {offsets = [0, 96], sizes = [8, 32], strides = [1, 1]} : vector<8x128xf32> to vector<8x32xf32>
    %773 = arith.negf %772 : vector<8x32xf32>
    %774 = math.exp %773 : vector<8x32xf32>
    %cst_195 = arith.constant 1.000000e+00 : f32
    %775 = vector.broadcast %cst_195 : f32 to vector<8x32xf32>
    %776 = arith.addf %775, %774 : vector<8x32xf32>
    %777 = arith.divf %775, %776 : vector<8x32xf32>
    %778 = arith.mulf %769, %711 : vector<8x32xf32>
    %779 = arith.mulf %763, %771 : vector<8x32xf32>
    %780 = arith.addf %778, %779 : vector<8x32xf32>
    %781 = math.tanh %780 : vector<8x32xf32>
    %782 = arith.mulf %777, %781 : vector<8x32xf32>
    %783 = arith.index_cast %719 : i32 to index
    %c0_196 = arith.constant 0 : index
    %784 = vector.load %arg15[%783, %c0_196] : memref<64x32xf32, #tpu.memory_space<vmem>>, vector<8x32xf32>
    tpu.vector_store %arg15[%783, %c0_196], %757 {strides = array<i32>} : memref<64x32xf32, #tpu.memory_space<vmem>>, vector<8x32xf32>,
    %785 = arith.index_cast %722 : i32 to index
    %c0_197 = arith.constant 0 : index
    %786 = vector.load %arg16[%785, %c0_197] : memref<64x32xf32, #tpu.memory_space<vmem>>, vector<8x32xf32>
    tpu.vector_store %arg16[%785, %c0_197], %782 {strides = array<i32>} : memref<64x32xf32, #tpu.memory_space<vmem>>, vector<8x32xf32>,
    %c3_i32_198 = arith.constant 3 : i32
    %c8_i32_199 = arith.constant 8 : i32
    %787 = arith.muli %c3_i32_198, %c8_i32_199 : i32
    %788 = tpu.assume_multiple %787, 8 : i32
    %c7_i32_200 = arith.constant 7 : i32
    %789 = arith.subi %c7_i32_200, %c3_i32_198 : i32
    %c8_i32_201 = arith.constant 8 : i32
    %790 = arith.muli %789, %c8_i32_201 : i32
    %791 = tpu.assume_multiple %790, 8 : i32
    %792 = arith.truncf %757 : vector<8x32xf32> to vector<8x32xbf16>
    %cst_202 = arith.constant dense<0.000000e+00> : vector<8x128xf32>
    %793 = tpu.matmul %792, %577, %cst_202 {dimension_numbers = #tpu.dot_dimension_numbers<[1], [0], [0], [1], [0, 0, 1, 1], [], []>} : vector<8x32xbf16>, vector<32x128xbf16>, vector<8x128xf32> -> vector<8x128xf32>
    %794 = arith.truncf %782 : vector<8x32xf32> to vector<8x32xbf16>
    %cst_203 = arith.constant dense<0.000000e+00> : vector<8x128xf32>
    %795 = tpu.matmul %794, %578, %cst_203 {dimension_numbers = #tpu.dot_dimension_numbers<[1], [0], [0], [1], [0, 0, 1, 1], [], []>} : vector<8x32xbf16>, vector<32x128xbf16>, vector<8x128xf32> -> vector<8x128xf32>
    %796 = arith.index_cast %788 : i32 to index
    %c0_204 = arith.constant 0 : index
    %797 = vector.load %arg14[%796, %c0_204] : memref<64x256xf32, #tpu.memory_space<vmem>>, vector<8x128xf32>
    %798 = arith.addf %797, %793 : vector<8x128xf32>
    %799 = arith.index_cast %791 : i32 to index
    %c128_205 = arith.constant 128 : index
    %800 = vector.load %arg14[%799, %c128_205] : memref<64x256xf32, #tpu.memory_space<vmem>>, vector<8x128xf32>
    %801 = arith.addf %800, %795 : vector<8x128xf32>
    %802 = vector.extract_strided_slice %798 {offsets = [0, 0], sizes = [8, 32], strides = [1, 1]} : vector<8x128xf32> to vector<8x32xf32>
    %803 = arith.negf %802 : vector<8x32xf32>
    %804 = math.exp %803 : vector<8x32xf32>
    %cst_206 = arith.constant 1.000000e+00 : f32
    %805 = vector.broadcast %cst_206 : f32 to vector<8x32xf32>
    %806 = arith.addf %805, %804 : vector<8x32xf32>
    %807 = arith.divf %805, %806 : vector<8x32xf32>
    %808 = vector.extract_strided_slice %798 {offsets = [0, 32], sizes = [8, 32], strides = [1, 1]} : vector<8x128xf32> to vector<8x32xf32>
    %809 = arith.negf %808 : vector<8x32xf32>
    %810 = math.exp %809 : vector<8x32xf32>
    %cst_207 = arith.constant 1.000000e+00 : f32
    %811 = vector.broadcast %cst_207 : f32 to vector<8x32xf32>
    %812 = arith.addf %811, %810 : vector<8x32xf32>
    %813 = arith.divf %811, %812 : vector<8x32xf32>
    %814 = vector.extract_strided_slice %798 {offsets = [0, 64], sizes = [8, 32], strides = [1, 1]} : vector<8x128xf32> to vector<8x32xf32>
    %815 = math.tanh %814 : vector<8x32xf32>
    %816 = vector.extract_strided_slice %798 {offsets = [0, 96], sizes = [8, 32], strides = [1, 1]} : vector<8x128xf32> to vector<8x32xf32>
    %817 = arith.negf %816 : vector<8x32xf32>
    %818 = math.exp %817 : vector<8x32xf32>
    %cst_208 = arith.constant 1.000000e+00 : f32
    %819 = vector.broadcast %cst_208 : f32 to vector<8x32xf32>
    %820 = arith.addf %819, %818 : vector<8x32xf32>
    %821 = arith.divf %819, %820 : vector<8x32xf32>
    %822 = arith.mulf %813, %755 : vector<8x32xf32>
    %823 = arith.mulf %807, %815 : vector<8x32xf32>
    %824 = arith.addf %822, %823 : vector<8x32xf32>
    %825 = math.tanh %824 : vector<8x32xf32>
    %826 = arith.mulf %821, %825 : vector<8x32xf32>
    %827 = vector.extract_strided_slice %801 {offsets = [0, 0], sizes = [8, 32], strides = [1, 1]} : vector<8x128xf32> to vector<8x32xf32>
    %828 = arith.negf %827 : vector<8x32xf32>
    %829 = math.exp %828 : vector<8x32xf32>
    %cst_209 = arith.constant 1.000000e+00 : f32
    %830 = vector.broadcast %cst_209 : f32 to vector<8x32xf32>
    %831 = arith.addf %830, %829 : vector<8x32xf32>
    %832 = arith.divf %830, %831 : vector<8x32xf32>
    %833 = vector.extract_strided_slice %801 {offsets = [0, 32], sizes = [8, 32], strides = [1, 1]} : vector<8x128xf32> to vector<8x32xf32>
    %834 = arith.negf %833 : vector<8x32xf32>
    %835 = math.exp %834 : vector<8x32xf32>
    %cst_210 = arith.constant 1.000000e+00 : f32
    %836 = vector.broadcast %cst_210 : f32 to vector<8x32xf32>
    %837 = arith.addf %836, %835 : vector<8x32xf32>
    %838 = arith.divf %836, %837 : vector<8x32xf32>
    %839 = vector.extract_strided_slice %801 {offsets = [0, 64], sizes = [8, 32], strides = [1, 1]} : vector<8x128xf32> to vector<8x32xf32>
    %840 = math.tanh %839 : vector<8x32xf32>
    %841 = vector.extract_strided_slice %801 {offsets = [0, 96], sizes = [8, 32], strides = [1, 1]} : vector<8x128xf32> to vector<8x32xf32>
    %842 = arith.negf %841 : vector<8x32xf32>
    %843 = math.exp %842 : vector<8x32xf32>
    %cst_211 = arith.constant 1.000000e+00 : f32
    %844 = vector.broadcast %cst_211 : f32 to vector<8x32xf32>
    %845 = arith.addf %844, %843 : vector<8x32xf32>
    %846 = arith.divf %844, %845 : vector<8x32xf32>
    %847 = arith.mulf %838, %780 : vector<8x32xf32>
    %848 = arith.mulf %832, %840 : vector<8x32xf32>
    %849 = arith.addf %847, %848 : vector<8x32xf32>
    %850 = math.tanh %849 : vector<8x32xf32>
    %851 = arith.mulf %846, %850 : vector<8x32xf32>
    %852 = arith.index_cast %788 : i32 to index
    %c0_212 = arith.constant 0 : index
    %853 = vector.load %arg15[%852, %c0_212] : memref<64x32xf32, #tpu.memory_space<vmem>>, vector<8x32xf32>
    tpu.vector_store %arg15[%852, %c0_212], %826 {strides = array<i32>} : memref<64x32xf32, #tpu.memory_space<vmem>>, vector<8x32xf32>,
    %854 = arith.index_cast %791 : i32 to index
    %c0_213 = arith.constant 0 : index
    %855 = vector.load %arg16[%854, %c0_213] : memref<64x32xf32, #tpu.memory_space<vmem>>, vector<8x32xf32>
    tpu.vector_store %arg16[%854, %c0_213], %851 {strides = array<i32>} : memref<64x32xf32, #tpu.memory_space<vmem>>, vector<8x32xf32>,
    %c4_i32_214 = arith.constant 4 : i32
    %c8_i32_215 = arith.constant 8 : i32
    %856 = arith.muli %c4_i32_214, %c8_i32_215 : i32
    %857 = tpu.assume_multiple %856, 8 : i32
    %c7_i32_216 = arith.constant 7 : i32
    %858 = arith.subi %c7_i32_216, %c4_i32_214 : i32
    %c8_i32_217 = arith.constant 8 : i32
    %859 = arith.muli %858, %c8_i32_217 : i32
    %860 = tpu.assume_multiple %859, 8 : i32
    %861 = arith.truncf %826 : vector<8x32xf32> to vector<8x32xbf16>
    %cst_218 = arith.constant dense<0.000000e+00> : vector<8x128xf32>
    %862 = tpu.matmul %861, %577, %cst_218 {dimension_numbers = #tpu.dot_dimension_numbers<[1], [0], [0], [1], [0, 0, 1, 1], [], []>} : vector<8x32xbf16>, vector<32x128xbf16>, vector<8x128xf32> -> vector<8x128xf32>
    %863 = arith.truncf %851 : vector<8x32xf32> to vector<8x32xbf16>
    %cst_219 = arith.constant dense<0.000000e+00> : vector<8x128xf32>
    %864 = tpu.matmul %863, %578, %cst_219 {dimension_numbers = #tpu.dot_dimension_numbers<[1], [0], [0], [1], [0, 0, 1, 1], [], []>} : vector<8x32xbf16>, vector<32x128xbf16>, vector<8x128xf32> -> vector<8x128xf32>
    %865 = arith.index_cast %857 : i32 to index
    %c0_220 = arith.constant 0 : index
    %866 = vector.load %arg14[%865, %c0_220] : memref<64x256xf32, #tpu.memory_space<vmem>>, vector<8x128xf32>
    %867 = arith.addf %866, %862 : vector<8x128xf32>
    %868 = arith.index_cast %860 : i32 to index
    %c128_221 = arith.constant 128 : index
    %869 = vector.load %arg14[%868, %c128_221] : memref<64x256xf32, #tpu.memory_space<vmem>>, vector<8x128xf32>
    %870 = arith.addf %869, %864 : vector<8x128xf32>
    %871 = vector.extract_strided_slice %867 {offsets = [0, 0], sizes = [8, 32], strides = [1, 1]} : vector<8x128xf32> to vector<8x32xf32>
    %872 = arith.negf %871 : vector<8x32xf32>
    %873 = math.exp %872 : vector<8x32xf32>
    %cst_222 = arith.constant 1.000000e+00 : f32
    %874 = vector.broadcast %cst_222 : f32 to vector<8x32xf32>
    %875 = arith.addf %874, %873 : vector<8x32xf32>
    %876 = arith.divf %874, %875 : vector<8x32xf32>
    %877 = vector.extract_strided_slice %867 {offsets = [0, 32], sizes = [8, 32], strides = [1, 1]} : vector<8x128xf32> to vector<8x32xf32>
    %878 = arith.negf %877 : vector<8x32xf32>
    %879 = math.exp %878 : vector<8x32xf32>
    %cst_223 = arith.constant 1.000000e+00 : f32
    %880 = vector.broadcast %cst_223 : f32 to vector<8x32xf32>
    %881 = arith.addf %880, %879 : vector<8x32xf32>
    %882 = arith.divf %880, %881 : vector<8x32xf32>
    %883 = vector.extract_strided_slice %867 {offsets = [0, 64], sizes = [8, 32], strides = [1, 1]} : vector<8x128xf32> to vector<8x32xf32>
    %884 = math.tanh %883 : vector<8x32xf32>
    %885 = vector.extract_strided_slice %867 {offsets = [0, 96], sizes = [8, 32], strides = [1, 1]} : vector<8x128xf32> to vector<8x32xf32>
    %886 = arith.negf %885 : vector<8x32xf32>
    %887 = math.exp %886 : vector<8x32xf32>
    %cst_224 = arith.constant 1.000000e+00 : f32
    %888 = vector.broadcast %cst_224 : f32 to vector<8x32xf32>
    %889 = arith.addf %888, %887 : vector<8x32xf32>
    %890 = arith.divf %888, %889 : vector<8x32xf32>
    %891 = arith.mulf %882, %824 : vector<8x32xf32>
    %892 = arith.mulf %876, %884 : vector<8x32xf32>
    %893 = arith.addf %891, %892 : vector<8x32xf32>
    %894 = math.tanh %893 : vector<8x32xf32>
    %895 = arith.mulf %890, %894 : vector<8x32xf32>
    %896 = vector.extract_strided_slice %870 {offsets = [0, 0], sizes = [8, 32], strides = [1, 1]} : vector<8x128xf32> to vector<8x32xf32>
    %897 = arith.negf %896 : vector<8x32xf32>
    %898 = math.exp %897 : vector<8x32xf32>
    %cst_225 = arith.constant 1.000000e+00 : f32
    %899 = vector.broadcast %cst_225 : f32 to vector<8x32xf32>
    %900 = arith.addf %899, %898 : vector<8x32xf32>
    %901 = arith.divf %899, %900 : vector<8x32xf32>
    %902 = vector.extract_strided_slice %870 {offsets = [0, 32], sizes = [8, 32], strides = [1, 1]} : vector<8x128xf32> to vector<8x32xf32>
    %903 = arith.negf %902 : vector<8x32xf32>
    %904 = math.exp %903 : vector<8x32xf32>
    %cst_226 = arith.constant 1.000000e+00 : f32
    %905 = vector.broadcast %cst_226 : f32 to vector<8x32xf32>
    %906 = arith.addf %905, %904 : vector<8x32xf32>
    %907 = arith.divf %905, %906 : vector<8x32xf32>
    %908 = vector.extract_strided_slice %870 {offsets = [0, 64], sizes = [8, 32], strides = [1, 1]} : vector<8x128xf32> to vector<8x32xf32>
    %909 = math.tanh %908 : vector<8x32xf32>
    %910 = vector.extract_strided_slice %870 {offsets = [0, 96], sizes = [8, 32], strides = [1, 1]} : vector<8x128xf32> to vector<8x32xf32>
    %911 = arith.negf %910 : vector<8x32xf32>
    %912 = math.exp %911 : vector<8x32xf32>
    %cst_227 = arith.constant 1.000000e+00 : f32
    %913 = vector.broadcast %cst_227 : f32 to vector<8x32xf32>
    %914 = arith.addf %913, %912 : vector<8x32xf32>
    %915 = arith.divf %913, %914 : vector<8x32xf32>
    %916 = arith.mulf %907, %849 : vector<8x32xf32>
    %917 = arith.mulf %901, %909 : vector<8x32xf32>
    %918 = arith.addf %916, %917 : vector<8x32xf32>
    %919 = math.tanh %918 : vector<8x32xf32>
    %920 = arith.mulf %915, %919 : vector<8x32xf32>
    %921 = arith.index_cast %857 : i32 to index
    %c0_228 = arith.constant 0 : index
    %922 = vector.load %arg15[%921, %c0_228] : memref<64x32xf32, #tpu.memory_space<vmem>>, vector<8x32xf32>
    tpu.vector_store %arg15[%921, %c0_228], %895 {strides = array<i32>} : memref<64x32xf32, #tpu.memory_space<vmem>>, vector<8x32xf32>,
    %923 = arith.index_cast %860 : i32 to index
    %c0_229 = arith.constant 0 : index
    %924 = vector.load %arg16[%923, %c0_229] : memref<64x32xf32, #tpu.memory_space<vmem>>, vector<8x32xf32>
    tpu.vector_store %arg16[%923, %c0_229], %920 {strides = array<i32>} : memref<64x32xf32, #tpu.memory_space<vmem>>, vector<8x32xf32>,
    %c5_i32_230 = arith.constant 5 : i32
    %c8_i32_231 = arith.constant 8 : i32
    %925 = arith.muli %c5_i32_230, %c8_i32_231 : i32
    %926 = tpu.assume_multiple %925, 8 : i32
    %c7_i32_232 = arith.constant 7 : i32
    %927 = arith.subi %c7_i32_232, %c5_i32_230 : i32
    %c8_i32_233 = arith.constant 8 : i32
    %928 = arith.muli %927, %c8_i32_233 : i32
    %929 = tpu.assume_multiple %928, 8 : i32
    %930 = arith.truncf %895 : vector<8x32xf32> to vector<8x32xbf16>
    %cst_234 = arith.constant dense<0.000000e+00> : vector<8x128xf32>
    %931 = tpu.matmul %930, %577, %cst_234 {dimension_numbers = #tpu.dot_dimension_numbers<[1], [0], [0], [1], [0, 0, 1, 1], [], []>} : vector<8x32xbf16>, vector<32x128xbf16>, vector<8x128xf32> -> vector<8x128xf32>
    %932 = arith.truncf %920 : vector<8x32xf32> to vector<8x32xbf16>
    %cst_235 = arith.constant dense<0.000000e+00> : vector<8x128xf32>
    %933 = tpu.matmul %932, %578, %cst_235 {dimension_numbers = #tpu.dot_dimension_numbers<[1], [0], [0], [1], [0, 0, 1, 1], [], []>} : vector<8x32xbf16>, vector<32x128xbf16>, vector<8x128xf32> -> vector<8x128xf32>
    %934 = arith.index_cast %926 : i32 to index
    %c0_236 = arith.constant 0 : index
    %935 = vector.load %arg14[%934, %c0_236] : memref<64x256xf32, #tpu.memory_space<vmem>>, vector<8x128xf32>
    %936 = arith.addf %935, %931 : vector<8x128xf32>
    %937 = arith.index_cast %929 : i32 to index
    %c128_237 = arith.constant 128 : index
    %938 = vector.load %arg14[%937, %c128_237] : memref<64x256xf32, #tpu.memory_space<vmem>>, vector<8x128xf32>
    %939 = arith.addf %938, %933 : vector<8x128xf32>
    %940 = vector.extract_strided_slice %936 {offsets = [0, 0], sizes = [8, 32], strides = [1, 1]} : vector<8x128xf32> to vector<8x32xf32>
    %941 = arith.negf %940 : vector<8x32xf32>
    %942 = math.exp %941 : vector<8x32xf32>
    %cst_238 = arith.constant 1.000000e+00 : f32
    %943 = vector.broadcast %cst_238 : f32 to vector<8x32xf32>
    %944 = arith.addf %943, %942 : vector<8x32xf32>
    %945 = arith.divf %943, %944 : vector<8x32xf32>
    %946 = vector.extract_strided_slice %936 {offsets = [0, 32], sizes = [8, 32], strides = [1, 1]} : vector<8x128xf32> to vector<8x32xf32>
    %947 = arith.negf %946 : vector<8x32xf32>
    %948 = math.exp %947 : vector<8x32xf32>
    %cst_239 = arith.constant 1.000000e+00 : f32
    %949 = vector.broadcast %cst_239 : f32 to vector<8x32xf32>
    %950 = arith.addf %949, %948 : vector<8x32xf32>
    %951 = arith.divf %949, %950 : vector<8x32xf32>
    %952 = vector.extract_strided_slice %936 {offsets = [0, 64], sizes = [8, 32], strides = [1, 1]} : vector<8x128xf32> to vector<8x32xf32>
    %953 = math.tanh %952 : vector<8x32xf32>
    %954 = vector.extract_strided_slice %936 {offsets = [0, 96], sizes = [8, 32], strides = [1, 1]} : vector<8x128xf32> to vector<8x32xf32>
    %955 = arith.negf %954 : vector<8x32xf32>
    %956 = math.exp %955 : vector<8x32xf32>
    %cst_240 = arith.constant 1.000000e+00 : f32
    %957 = vector.broadcast %cst_240 : f32 to vector<8x32xf32>
    %958 = arith.addf %957, %956 : vector<8x32xf32>
    %959 = arith.divf %957, %958 : vector<8x32xf32>
    %960 = arith.mulf %951, %893 : vector<8x32xf32>
    %961 = arith.mulf %945, %953 : vector<8x32xf32>
    %962 = arith.addf %960, %961 : vector<8x32xf32>
    %963 = math.tanh %962 : vector<8x32xf32>
    %964 = arith.mulf %959, %963 : vector<8x32xf32>
    %965 = vector.extract_strided_slice %939 {offsets = [0, 0], sizes = [8, 32], strides = [1, 1]} : vector<8x128xf32> to vector<8x32xf32>
    %966 = arith.negf %965 : vector<8x32xf32>
    %967 = math.exp %966 : vector<8x32xf32>
    %cst_241 = arith.constant 1.000000e+00 : f32
    %968 = vector.broadcast %cst_241 : f32 to vector<8x32xf32>
    %969 = arith.addf %968, %967 : vector<8x32xf32>
    %970 = arith.divf %968, %969 : vector<8x32xf32>
    %971 = vector.extract_strided_slice %939 {offsets = [0, 32], sizes = [8, 32], strides = [1, 1]} : vector<8x128xf32> to vector<8x32xf32>
    %972 = arith.negf %971 : vector<8x32xf32>
    %973 = math.exp %972 : vector<8x32xf32>
    %cst_242 = arith.constant 1.000000e+00 : f32
    %974 = vector.broadcast %cst_242 : f32 to vector<8x32xf32>
    %975 = arith.addf %974, %973 : vector<8x32xf32>
    %976 = arith.divf %974, %975 : vector<8x32xf32>
    %977 = vector.extract_strided_slice %939 {offsets = [0, 64], sizes = [8, 32], strides = [1, 1]} : vector<8x128xf32> to vector<8x32xf32>
    %978 = math.tanh %977 : vector<8x32xf32>
    %979 = vector.extract_strided_slice %939 {offsets = [0, 96], sizes = [8, 32], strides = [1, 1]} : vector<8x128xf32> to vector<8x32xf32>
    %980 = arith.negf %979 : vector<8x32xf32>
    %981 = math.exp %980 : vector<8x32xf32>
    %cst_243 = arith.constant 1.000000e+00 : f32
    %982 = vector.broadcast %cst_243 : f32 to vector<8x32xf32>
    %983 = arith.addf %982, %981 : vector<8x32xf32>
    %984 = arith.divf %982, %983 : vector<8x32xf32>
    %985 = arith.mulf %976, %918 : vector<8x32xf32>
    %986 = arith.mulf %970, %978 : vector<8x32xf32>
    %987 = arith.addf %985, %986 : vector<8x32xf32>
    %988 = math.tanh %987 : vector<8x32xf32>
    %989 = arith.mulf %984, %988 : vector<8x32xf32>
    %990 = arith.index_cast %926 : i32 to index
    %c0_244 = arith.constant 0 : index
    %991 = vector.load %arg15[%990, %c0_244] : memref<64x32xf32, #tpu.memory_space<vmem>>, vector<8x32xf32>
    tpu.vector_store %arg15[%990, %c0_244], %964 {strides = array<i32>} : memref<64x32xf32, #tpu.memory_space<vmem>>, vector<8x32xf32>,
    %992 = arith.index_cast %929 : i32 to index
    %c0_245 = arith.constant 0 : index
    %993 = vector.load %arg16[%992, %c0_245] : memref<64x32xf32, #tpu.memory_space<vmem>>, vector<8x32xf32>
    tpu.vector_store %arg16[%992, %c0_245], %989 {strides = array<i32>} : memref<64x32xf32, #tpu.memory_space<vmem>>, vector<8x32xf32>,
    %c6_i32_246 = arith.constant 6 : i32
    %c8_i32_247 = arith.constant 8 : i32
    %994 = arith.muli %c6_i32_246, %c8_i32_247 : i32
    %995 = tpu.assume_multiple %994, 8 : i32
    %c7_i32_248 = arith.constant 7 : i32
    %996 = arith.subi %c7_i32_248, %c6_i32_246 : i32
    %c8_i32_249 = arith.constant 8 : i32
    %997 = arith.muli %996, %c8_i32_249 : i32
    %998 = tpu.assume_multiple %997, 8 : i32
    %999 = arith.truncf %964 : vector<8x32xf32> to vector<8x32xbf16>
    %cst_250 = arith.constant dense<0.000000e+00> : vector<8x128xf32>
    %1000 = tpu.matmul %999, %577, %cst_250 {dimension_numbers = #tpu.dot_dimension_numbers<[1], [0], [0], [1], [0, 0, 1, 1], [], []>} : vector<8x32xbf16>, vector<32x128xbf16>, vector<8x128xf32> -> vector<8x128xf32>
    %1001 = arith.truncf %989 : vector<8x32xf32> to vector<8x32xbf16>
    %cst_251 = arith.constant dense<0.000000e+00> : vector<8x128xf32>
    %1002 = tpu.matmul %1001, %578, %cst_251 {dimension_numbers = #tpu.dot_dimension_numbers<[1], [0], [0], [1], [0, 0, 1, 1], [], []>} : vector<8x32xbf16>, vector<32x128xbf16>, vector<8x128xf32> -> vector<8x128xf32>
    %1003 = arith.index_cast %995 : i32 to index
    %c0_252 = arith.constant 0 : index
    %1004 = vector.load %arg14[%1003, %c0_252] : memref<64x256xf32, #tpu.memory_space<vmem>>, vector<8x128xf32>
    %1005 = arith.addf %1004, %1000 : vector<8x128xf32>
    %1006 = arith.index_cast %998 : i32 to index
    %c128_253 = arith.constant 128 : index
    %1007 = vector.load %arg14[%1006, %c128_253] : memref<64x256xf32, #tpu.memory_space<vmem>>, vector<8x128xf32>
    %1008 = arith.addf %1007, %1002 : vector<8x128xf32>
    %1009 = vector.extract_strided_slice %1005 {offsets = [0, 0], sizes = [8, 32], strides = [1, 1]} : vector<8x128xf32> to vector<8x32xf32>
    %1010 = arith.negf %1009 : vector<8x32xf32>
    %1011 = math.exp %1010 : vector<8x32xf32>
    %cst_254 = arith.constant 1.000000e+00 : f32
    %1012 = vector.broadcast %cst_254 : f32 to vector<8x32xf32>
    %1013 = arith.addf %1012, %1011 : vector<8x32xf32>
    %1014 = arith.divf %1012, %1013 : vector<8x32xf32>
    %1015 = vector.extract_strided_slice %1005 {offsets = [0, 32], sizes = [8, 32], strides = [1, 1]} : vector<8x128xf32> to vector<8x32xf32>
    %1016 = arith.negf %1015 : vector<8x32xf32>
    %1017 = math.exp %1016 : vector<8x32xf32>
    %cst_255 = arith.constant 1.000000e+00 : f32
    %1018 = vector.broadcast %cst_255 : f32 to vector<8x32xf32>
    %1019 = arith.addf %1018, %1017 : vector<8x32xf32>
    %1020 = arith.divf %1018, %1019 : vector<8x32xf32>
    %1021 = vector.extract_strided_slice %1005 {offsets = [0, 64], sizes = [8, 32], strides = [1, 1]} : vector<8x128xf32> to vector<8x32xf32>
    %1022 = math.tanh %1021 : vector<8x32xf32>
    %1023 = vector.extract_strided_slice %1005 {offsets = [0, 96], sizes = [8, 32], strides = [1, 1]} : vector<8x128xf32> to vector<8x32xf32>
    %1024 = arith.negf %1023 : vector<8x32xf32>
    %1025 = math.exp %1024 : vector<8x32xf32>
    %cst_256 = arith.constant 1.000000e+00 : f32
    %1026 = vector.broadcast %cst_256 : f32 to vector<8x32xf32>
    %1027 = arith.addf %1026, %1025 : vector<8x32xf32>
    %1028 = arith.divf %1026, %1027 : vector<8x32xf32>
    %1029 = arith.mulf %1020, %962 : vector<8x32xf32>
    %1030 = arith.mulf %1014, %1022 : vector<8x32xf32>
    %1031 = arith.addf %1029, %1030 : vector<8x32xf32>
    %1032 = math.tanh %1031 : vector<8x32xf32>
    %1033 = arith.mulf %1028, %1032 : vector<8x32xf32>
    %1034 = vector.extract_strided_slice %1008 {offsets = [0, 0], sizes = [8, 32], strides = [1, 1]} : vector<8x128xf32> to vector<8x32xf32>
    %1035 = arith.negf %1034 : vector<8x32xf32>
    %1036 = math.exp %1035 : vector<8x32xf32>
    %cst_257 = arith.constant 1.000000e+00 : f32
    %1037 = vector.broadcast %cst_257 : f32 to vector<8x32xf32>
    %1038 = arith.addf %1037, %1036 : vector<8x32xf32>
    %1039 = arith.divf %1037, %1038 : vector<8x32xf32>
    %1040 = vector.extract_strided_slice %1008 {offsets = [0, 32], sizes = [8, 32], strides = [1, 1]} : vector<8x128xf32> to vector<8x32xf32>
    %1041 = arith.negf %1040 : vector<8x32xf32>
    %1042 = math.exp %1041 : vector<8x32xf32>
    %cst_258 = arith.constant 1.000000e+00 : f32
    %1043 = vector.broadcast %cst_258 : f32 to vector<8x32xf32>
    %1044 = arith.addf %1043, %1042 : vector<8x32xf32>
    %1045 = arith.divf %1043, %1044 : vector<8x32xf32>
    %1046 = vector.extract_strided_slice %1008 {offsets = [0, 64], sizes = [8, 32], strides = [1, 1]} : vector<8x128xf32> to vector<8x32xf32>
    %1047 = math.tanh %1046 : vector<8x32xf32>
    %1048 = vector.extract_strided_slice %1008 {offsets = [0, 96], sizes = [8, 32], strides = [1, 1]} : vector<8x128xf32> to vector<8x32xf32>
    %1049 = arith.negf %1048 : vector<8x32xf32>
    %1050 = math.exp %1049 : vector<8x32xf32>
    %cst_259 = arith.constant 1.000000e+00 : f32
    %1051 = vector.broadcast %cst_259 : f32 to vector<8x32xf32>
    %1052 = arith.addf %1051, %1050 : vector<8x32xf32>
    %1053 = arith.divf %1051, %1052 : vector<8x32xf32>
    %1054 = arith.mulf %1045, %987 : vector<8x32xf32>
    %1055 = arith.mulf %1039, %1047 : vector<8x32xf32>
    %1056 = arith.addf %1054, %1055 : vector<8x32xf32>
    %1057 = math.tanh %1056 : vector<8x32xf32>
    %1058 = arith.mulf %1053, %1057 : vector<8x32xf32>
    %1059 = arith.index_cast %995 : i32 to index
    %c0_260 = arith.constant 0 : index
    %1060 = vector.load %arg15[%1059, %c0_260] : memref<64x32xf32, #tpu.memory_space<vmem>>, vector<8x32xf32>
    tpu.vector_store %arg15[%1059, %c0_260], %1033 {strides = array<i32>} : memref<64x32xf32, #tpu.memory_space<vmem>>, vector<8x32xf32>,
    %1061 = arith.index_cast %998 : i32 to index
    %c0_261 = arith.constant 0 : index
    %1062 = vector.load %arg16[%1061, %c0_261] : memref<64x32xf32, #tpu.memory_space<vmem>>, vector<8x32xf32>
    tpu.vector_store %arg16[%1061, %c0_261], %1058 {strides = array<i32>} : memref<64x32xf32, #tpu.memory_space<vmem>>, vector<8x32xf32>,
    %c7_i32_262 = arith.constant 7 : i32
    %c8_i32_263 = arith.constant 8 : i32
    %1063 = arith.muli %c7_i32_262, %c8_i32_263 : i32
    %1064 = tpu.assume_multiple %1063, 8 : i32
    %c7_i32_264 = arith.constant 7 : i32
    %1065 = arith.subi %c7_i32_264, %c7_i32_262 : i32
    %c8_i32_265 = arith.constant 8 : i32
    %1066 = arith.muli %1065, %c8_i32_265 : i32
    %1067 = tpu.assume_multiple %1066, 8 : i32
    %1068 = arith.truncf %1033 : vector<8x32xf32> to vector<8x32xbf16>
    %cst_266 = arith.constant dense<0.000000e+00> : vector<8x128xf32>
    %1069 = tpu.matmul %1068, %577, %cst_266 {dimension_numbers = #tpu.dot_dimension_numbers<[1], [0], [0], [1], [0, 0, 1, 1], [], []>} : vector<8x32xbf16>, vector<32x128xbf16>, vector<8x128xf32> -> vector<8x128xf32>
    %1070 = arith.truncf %1058 : vector<8x32xf32> to vector<8x32xbf16>
    %cst_267 = arith.constant dense<0.000000e+00> : vector<8x128xf32>
    %1071 = tpu.matmul %1070, %578, %cst_267 {dimension_numbers = #tpu.dot_dimension_numbers<[1], [0], [0], [1], [0, 0, 1, 1], [], []>} : vector<8x32xbf16>, vector<32x128xbf16>, vector<8x128xf32> -> vector<8x128xf32>
    %1072 = arith.index_cast %1064 : i32 to index
    %c0_268 = arith.constant 0 : index
    %1073 = vector.load %arg14[%1072, %c0_268] : memref<64x256xf32, #tpu.memory_space<vmem>>, vector<8x128xf32>
    %1074 = arith.addf %1073, %1069 : vector<8x128xf32>
    %1075 = arith.index_cast %1067 : i32 to index
    %c128_269 = arith.constant 128 : index
    %1076 = vector.load %arg14[%1075, %c128_269] : memref<64x256xf32, #tpu.memory_space<vmem>>, vector<8x128xf32>
    %1077 = arith.addf %1076, %1071 : vector<8x128xf32>
    %1078 = vector.extract_strided_slice %1074 {offsets = [0, 0], sizes = [8, 32], strides = [1, 1]} : vector<8x128xf32> to vector<8x32xf32>
    %1079 = arith.negf %1078 : vector<8x32xf32>
    %1080 = math.exp %1079 : vector<8x32xf32>
    %cst_270 = arith.constant 1.000000e+00 : f32
    %1081 = vector.broadcast %cst_270 : f32 to vector<8x32xf32>
    %1082 = arith.addf %1081, %1080 : vector<8x32xf32>
    %1083 = arith.divf %1081, %1082 : vector<8x32xf32>
    %1084 = vector.extract_strided_slice %1074 {offsets = [0, 32], sizes = [8, 32], strides = [1, 1]} : vector<8x128xf32> to vector<8x32xf32>
    %1085 = arith.negf %1084 : vector<8x32xf32>
    %1086 = math.exp %1085 : vector<8x32xf32>
    %cst_271 = arith.constant 1.000000e+00 : f32
    %1087 = vector.broadcast %cst_271 : f32 to vector<8x32xf32>
    %1088 = arith.addf %1087, %1086 : vector<8x32xf32>
    %1089 = arith.divf %1087, %1088 : vector<8x32xf32>
    %1090 = vector.extract_strided_slice %1074 {offsets = [0, 64], sizes = [8, 32], strides = [1, 1]} : vector<8x128xf32> to vector<8x32xf32>
    %1091 = math.tanh %1090 : vector<8x32xf32>
    %1092 = vector.extract_strided_slice %1074 {offsets = [0, 96], sizes = [8, 32], strides = [1, 1]} : vector<8x128xf32> to vector<8x32xf32>
    %1093 = arith.negf %1092 : vector<8x32xf32>
    %1094 = math.exp %1093 : vector<8x32xf32>
    %cst_272 = arith.constant 1.000000e+00 : f32
    %1095 = vector.broadcast %cst_272 : f32 to vector<8x32xf32>
    %1096 = arith.addf %1095, %1094 : vector<8x32xf32>
    %1097 = arith.divf %1095, %1096 : vector<8x32xf32>
    %1098 = arith.mulf %1089, %1031 : vector<8x32xf32>
    %1099 = arith.mulf %1083, %1091 : vector<8x32xf32>
    %1100 = arith.addf %1098, %1099 : vector<8x32xf32>
    %1101 = math.tanh %1100 : vector<8x32xf32>
    %1102 = arith.mulf %1097, %1101 : vector<8x32xf32>
    %1103 = vector.extract_strided_slice %1077 {offsets = [0, 0], sizes = [8, 32], strides = [1, 1]} : vector<8x128xf32> to vector<8x32xf32>
    %1104 = arith.negf %1103 : vector<8x32xf32>
    %1105 = math.exp %1104 : vector<8x32xf32>
    %cst_273 = arith.constant 1.000000e+00 : f32
    %1106 = vector.broadcast %cst_273 : f32 to vector<8x32xf32>
    %1107 = arith.addf %1106, %1105 : vector<8x32xf32>
    %1108 = arith.divf %1106, %1107 : vector<8x32xf32>
    %1109 = vector.extract_strided_slice %1077 {offsets = [0, 32], sizes = [8, 32], strides = [1, 1]} : vector<8x128xf32> to vector<8x32xf32>
    %1110 = arith.negf %1109 : vector<8x32xf32>
    %1111 = math.exp %1110 : vector<8x32xf32>
    %cst_274 = arith.constant 1.000000e+00 : f32
    %1112 = vector.broadcast %cst_274 : f32 to vector<8x32xf32>
    %1113 = arith.addf %1112, %1111 : vector<8x32xf32>
    %1114 = arith.divf %1112, %1113 : vector<8x32xf32>
    %1115 = vector.extract_strided_slice %1077 {offsets = [0, 64], sizes = [8, 32], strides = [1, 1]} : vector<8x128xf32> to vector<8x32xf32>
    %1116 = math.tanh %1115 : vector<8x32xf32>
    %1117 = vector.extract_strided_slice %1077 {offsets = [0, 96], sizes = [8, 32], strides = [1, 1]} : vector<8x128xf32> to vector<8x32xf32>
    %1118 = arith.negf %1117 : vector<8x32xf32>
    %1119 = math.exp %1118 : vector<8x32xf32>
    %cst_275 = arith.constant 1.000000e+00 : f32
    %1120 = vector.broadcast %cst_275 : f32 to vector<8x32xf32>
    %1121 = arith.addf %1120, %1119 : vector<8x32xf32>
    %1122 = arith.divf %1120, %1121 : vector<8x32xf32>
    %1123 = arith.mulf %1114, %1056 : vector<8x32xf32>
    %1124 = arith.mulf %1108, %1116 : vector<8x32xf32>
    %1125 = arith.addf %1123, %1124 : vector<8x32xf32>
    %1126 = math.tanh %1125 : vector<8x32xf32>
    %1127 = arith.mulf %1122, %1126 : vector<8x32xf32>
    %1128 = arith.index_cast %1064 : i32 to index
    %c0_276 = arith.constant 0 : index
    %1129 = vector.load %arg15[%1128, %c0_276] : memref<64x32xf32, #tpu.memory_space<vmem>>, vector<8x32xf32>
    tpu.vector_store %arg15[%1128, %c0_276], %1102 {strides = array<i32>} : memref<64x32xf32, #tpu.memory_space<vmem>>, vector<8x32xf32>,
    %1130 = arith.index_cast %1067 : i32 to index
    %c0_277 = arith.constant 0 : index
    %1131 = vector.load %arg16[%1130, %c0_277] : memref<64x32xf32, #tpu.memory_space<vmem>>, vector<8x32xf32>
    tpu.vector_store %arg16[%1130, %c0_277], %1127 {strides = array<i32>} : memref<64x32xf32, #tpu.memory_space<vmem>>, vector<8x32xf32>,
    %c8_i32_278 = arith.constant 8 : i32
    %c0_279 = arith.constant 0 : index
    %c0_280 = arith.constant 0 : index
    %1132 = vector.load %arg15[%c0_279, %c0_280] : memref<64x32xf32, #tpu.memory_space<vmem>>, vector<64x32xf32>
    %1133 = math.tanh %1132 : vector<64x32xf32>
    %c0_281 = arith.constant 0 : index
    %c0_282 = arith.constant 0 : index
    %1134 = vector.load %arg10[%c0_281, %c0_282] : memref<64x1xf32, #tpu.memory_space<vmem>>, vector<32x1xf32>
    %cst_283 = arith.constant dense<0.000000e+00> : vector<64x1xf32>
    %1135 = tpu.matmul %1133, %1134, %cst_283 {dimension_numbers = #tpu.dot_dimension_numbers<[1], [0], [0], [1], [0, 0, 1, 1], [], []>} : vector<64x32xf32>, vector<32x1xf32>, vector<64x1xf32> -> vector<64x1xf32>
    %c0_284 = arith.constant 0 : index
    %c0_285 = arith.constant 0 : index
    %1136 = vector.load %arg16[%c0_284, %c0_285] : memref<64x32xf32, #tpu.memory_space<vmem>>, vector<64x32xf32>
    %1137 = math.tanh %1136 : vector<64x32xf32>
    %c32_286 = arith.constant 32 : index
    %c0_287 = arith.constant 0 : index
    %1138 = vector.load %arg10[%c32_286, %c0_287] : memref<64x1xf32, #tpu.memory_space<vmem>>, vector<32x1xf32>
    %cst_288 = arith.constant dense<0.000000e+00> : vector<64x1xf32>
    %1139 = tpu.matmul %1137, %1138, %cst_288 {dimension_numbers = #tpu.dot_dimension_numbers<[1], [0], [0], [1], [0, 0, 1, 1], [], []>} : vector<64x32xf32>, vector<32x1xf32>, vector<64x1xf32> -> vector<64x1xf32>
    %1140 = arith.addf %1135, %1139 : vector<64x1xf32>
    %c0_289 = arith.constant 0 : index
    %c0_290 = arith.constant 0 : index
    %1141 = vector.load %arg17[%c0_289, %c0_290] : memref<64x1xf32, #tpu.memory_space<vmem>>, vector<64x1xf32>
    tpu.vector_store %arg17[%c0_289, %c0_290], %1140 {strides = array<i32>} : memref<64x1xf32, #tpu.memory_space<vmem>>, vector<64x1xf32>,
    %cst_291 = arith.constant 0xFF800000 : f32
    %1142 = vector.broadcast %cst_291 : f32 to vector<8x1xf32>
    %c0_i32_292 = arith.constant 0 : i32
    %c8_i32_293 = arith.constant 8 : i32
    %1143 = arith.muli %c0_i32_292, %c8_i32_293 : i32
    %1144 = tpu.assume_multiple %1143, 8 : i32
    %1145 = arith.index_cast %1144 : i32 to index
    %c0_294 = arith.constant 0 : index
    %1146 = vector.load %arg17[%1145, %c0_294] : memref<64x1xf32, #tpu.memory_space<vmem>>, vector<8x1xf32>
    %1147 = arith.maximumf %1142, %1146 : vector<8x1xf32>
    %c1_i32_295 = arith.constant 1 : i32
    %c8_i32_296 = arith.constant 8 : i32
    %1148 = arith.muli %c1_i32_295, %c8_i32_296 : i32
    %1149 = tpu.assume_multiple %1148, 8 : i32
    %1150 = arith.index_cast %1149 : i32 to index
    %c0_297 = arith.constant 0 : index
    %1151 = vector.load %arg17[%1150, %c0_297] : memref<64x1xf32, #tpu.memory_space<vmem>>, vector<8x1xf32>
    %1152 = arith.maximumf %1147, %1151 : vector<8x1xf32>
    %c2_i32_298 = arith.constant 2 : i32
    %c8_i32_299 = arith.constant 8 : i32
    %1153 = arith.muli %c2_i32_298, %c8_i32_299 : i32
    %1154 = tpu.assume_multiple %1153, 8 : i32
    %1155 = arith.index_cast %1154 : i32 to index
    %c0_300 = arith.constant 0 : index
    %1156 = vector.load %arg17[%1155, %c0_300] : memref<64x1xf32, #tpu.memory_space<vmem>>, vector<8x1xf32>
    %1157 = arith.maximumf %1152, %1156 : vector<8x1xf32>
    %c3_i32_301 = arith.constant 3 : i32
    %c8_i32_302 = arith.constant 8 : i32
    %1158 = arith.muli %c3_i32_301, %c8_i32_302 : i32
    %1159 = tpu.assume_multiple %1158, 8 : i32
    %1160 = arith.index_cast %1159 : i32 to index
    %c0_303 = arith.constant 0 : index
    %1161 = vector.load %arg17[%1160, %c0_303] : memref<64x1xf32, #tpu.memory_space<vmem>>, vector<8x1xf32>
    %1162 = arith.maximumf %1157, %1161 : vector<8x1xf32>
    %c4_i32_304 = arith.constant 4 : i32
    %c8_i32_305 = arith.constant 8 : i32
    %1163 = arith.muli %c4_i32_304, %c8_i32_305 : i32
    %1164 = tpu.assume_multiple %1163, 8 : i32
    %1165 = arith.index_cast %1164 : i32 to index
    %c0_306 = arith.constant 0 : index
    %1166 = vector.load %arg17[%1165, %c0_306] : memref<64x1xf32, #tpu.memory_space<vmem>>, vector<8x1xf32>
    %1167 = arith.maximumf %1162, %1166 : vector<8x1xf32>
    %c5_i32_307 = arith.constant 5 : i32
    %c8_i32_308 = arith.constant 8 : i32
    %1168 = arith.muli %c5_i32_307, %c8_i32_308 : i32
    %1169 = tpu.assume_multiple %1168, 8 : i32
    %1170 = arith.index_cast %1169 : i32 to index
    %c0_309 = arith.constant 0 : index
    %1171 = vector.load %arg17[%1170, %c0_309] : memref<64x1xf32, #tpu.memory_space<vmem>>, vector<8x1xf32>
    %1172 = arith.maximumf %1167, %1171 : vector<8x1xf32>
    %c6_i32_310 = arith.constant 6 : i32
    %c8_i32_311 = arith.constant 8 : i32
    %1173 = arith.muli %c6_i32_310, %c8_i32_311 : i32
    %1174 = tpu.assume_multiple %1173, 8 : i32
    %1175 = arith.index_cast %1174 : i32 to index
    %c0_312 = arith.constant 0 : index
    %1176 = vector.load %arg17[%1175, %c0_312] : memref<64x1xf32, #tpu.memory_space<vmem>>, vector<8x1xf32>
    %1177 = arith.maximumf %1172, %1176 : vector<8x1xf32>
    %c7_i32_313 = arith.constant 7 : i32
    %c8_i32_314 = arith.constant 8 : i32
    %1178 = arith.muli %c7_i32_313, %c8_i32_314 : i32
    %1179 = tpu.assume_multiple %1178, 8 : i32
    %1180 = arith.index_cast %1179 : i32 to index
    %c0_315 = arith.constant 0 : index
    %1181 = vector.load %arg17[%1180, %c0_315] : memref<64x1xf32, #tpu.memory_space<vmem>>, vector<8x1xf32>
    %1182 = arith.maximumf %1177, %1181 : vector<8x1xf32>
    %c8_i32_316 = arith.constant 8 : i32
    %cst_317 = arith.constant 0.000000e+00 : f32
    %1183 = vector.broadcast %cst_317 : f32 to vector<8x1xf32>
    %cst_318 = arith.constant 0.000000e+00 : f32
    %1184 = vector.broadcast %cst_318 : f32 to vector<8x32xf32>
    %cst_319 = arith.constant 0.000000e+00 : f32
    %1185 = vector.broadcast %cst_319 : f32 to vector<8x32xf32>
    %c0_i32_320 = arith.constant 0 : i32
    %c8_i32_321 = arith.constant 8 : i32
    %1186 = arith.muli %c0_i32_320, %c8_i32_321 : i32
    %1187 = tpu.assume_multiple %1186, 8 : i32
    %1188 = arith.index_cast %1187 : i32 to index
    %c0_322 = arith.constant 0 : index
    %1189 = vector.load %arg17[%1188, %c0_322] : memref<64x1xf32, #tpu.memory_space<vmem>>, vector<8x1xf32>
    %1190 = arith.subf %1189, %1182 : vector<8x1xf32>
    %1191 = math.exp %1190 : vector<8x1xf32>
    %1192 = arith.index_cast %1187 : i32 to index
    %c0_323 = arith.constant 0 : index
    %1193 = vector.load %arg15[%1192, %c0_323] : memref<64x32xf32, #tpu.memory_space<vmem>>, vector<8x32xf32>
    %1194 = vector.broadcast %1191 : vector<8x1xf32> to vector<8x32xf32>
    %1195 = arith.mulf %1194, %1193 : vector<8x32xf32>
    %1196 = arith.addf %1184, %1195 : vector<8x32xf32>
    %1197 = arith.index_cast %1187 : i32 to index
    %c0_324 = arith.constant 0 : index
    %1198 = vector.load %arg16[%1197, %c0_324] : memref<64x32xf32, #tpu.memory_space<vmem>>, vector<8x32xf32>
    %1199 = vector.broadcast %1191 : vector<8x1xf32> to vector<8x32xf32>
    %1200 = arith.mulf %1199, %1198 : vector<8x32xf32>
    %1201 = arith.addf %1185, %1200 : vector<8x32xf32>
    %1202 = arith.addf %1183, %1191 : vector<8x1xf32>
    %c1_i32_325 = arith.constant 1 : i32
    %c8_i32_326 = arith.constant 8 : i32
    %1203 = arith.muli %c1_i32_325, %c8_i32_326 : i32
    %1204 = tpu.assume_multiple %1203, 8 : i32
    %1205 = arith.index_cast %1204 : i32 to index
    %c0_327 = arith.constant 0 : index
    %1206 = vector.load %arg17[%1205, %c0_327] : memref<64x1xf32, #tpu.memory_space<vmem>>, vector<8x1xf32>
    %1207 = arith.subf %1206, %1182 : vector<8x1xf32>
    %1208 = math.exp %1207 : vector<8x1xf32>
    %1209 = arith.index_cast %1204 : i32 to index
    %c0_328 = arith.constant 0 : index
    %1210 = vector.load %arg15[%1209, %c0_328] : memref<64x32xf32, #tpu.memory_space<vmem>>, vector<8x32xf32>
    %1211 = vector.broadcast %1208 : vector<8x1xf32> to vector<8x32xf32>
    %1212 = arith.mulf %1211, %1210 : vector<8x32xf32>
    %1213 = arith.addf %1196, %1212 : vector<8x32xf32>
    %1214 = arith.index_cast %1204 : i32 to index
    %c0_329 = arith.constant 0 : index
    %1215 = vector.load %arg16[%1214, %c0_329] : memref<64x32xf32, #tpu.memory_space<vmem>>, vector<8x32xf32>
    %1216 = vector.broadcast %1208 : vector<8x1xf32> to vector<8x32xf32>
    %1217 = arith.mulf %1216, %1215 : vector<8x32xf32>
    %1218 = arith.addf %1201, %1217 : vector<8x32xf32>
    %1219 = arith.addf %1202, %1208 : vector<8x1xf32>
    %c2_i32_330 = arith.constant 2 : i32
    %c8_i32_331 = arith.constant 8 : i32
    %1220 = arith.muli %c2_i32_330, %c8_i32_331 : i32
    %1221 = tpu.assume_multiple %1220, 8 : i32
    %1222 = arith.index_cast %1221 : i32 to index
    %c0_332 = arith.constant 0 : index
    %1223 = vector.load %arg17[%1222, %c0_332] : memref<64x1xf32, #tpu.memory_space<vmem>>, vector<8x1xf32>
    %1224 = arith.subf %1223, %1182 : vector<8x1xf32>
    %1225 = math.exp %1224 : vector<8x1xf32>
    %1226 = arith.index_cast %1221 : i32 to index
    %c0_333 = arith.constant 0 : index
    %1227 = vector.load %arg15[%1226, %c0_333] : memref<64x32xf32, #tpu.memory_space<vmem>>, vector<8x32xf32>
    %1228 = vector.broadcast %1225 : vector<8x1xf32> to vector<8x32xf32>
    %1229 = arith.mulf %1228, %1227 : vector<8x32xf32>
    %1230 = arith.addf %1213, %1229 : vector<8x32xf32>
    %1231 = arith.index_cast %1221 : i32 to index
    %c0_334 = arith.constant 0 : index
    %1232 = vector.load %arg16[%1231, %c0_334] : memref<64x32xf32, #tpu.memory_space<vmem>>, vector<8x32xf32>
    %1233 = vector.broadcast %1225 : vector<8x1xf32> to vector<8x32xf32>
    %1234 = arith.mulf %1233, %1232 : vector<8x32xf32>
    %1235 = arith.addf %1218, %1234 : vector<8x32xf32>
    %1236 = arith.addf %1219, %1225 : vector<8x1xf32>
    %c3_i32_335 = arith.constant 3 : i32
    %c8_i32_336 = arith.constant 8 : i32
    %1237 = arith.muli %c3_i32_335, %c8_i32_336 : i32
    %1238 = tpu.assume_multiple %1237, 8 : i32
    %1239 = arith.index_cast %1238 : i32 to index
    %c0_337 = arith.constant 0 : index
    %1240 = vector.load %arg17[%1239, %c0_337] : memref<64x1xf32, #tpu.memory_space<vmem>>, vector<8x1xf32>
    %1241 = arith.subf %1240, %1182 : vector<8x1xf32>
    %1242 = math.exp %1241 : vector<8x1xf32>
    %1243 = arith.index_cast %1238 : i32 to index
    %c0_338 = arith.constant 0 : index
    %1244 = vector.load %arg15[%1243, %c0_338] : memref<64x32xf32, #tpu.memory_space<vmem>>, vector<8x32xf32>
    %1245 = vector.broadcast %1242 : vector<8x1xf32> to vector<8x32xf32>
    %1246 = arith.mulf %1245, %1244 : vector<8x32xf32>
    %1247 = arith.addf %1230, %1246 : vector<8x32xf32>
    %1248 = arith.index_cast %1238 : i32 to index
    %c0_339 = arith.constant 0 : index
    %1249 = vector.load %arg16[%1248, %c0_339] : memref<64x32xf32, #tpu.memory_space<vmem>>, vector<8x32xf32>
    %1250 = vector.broadcast %1242 : vector<8x1xf32> to vector<8x32xf32>
    %1251 = arith.mulf %1250, %1249 : vector<8x32xf32>
    %1252 = arith.addf %1235, %1251 : vector<8x32xf32>
    %1253 = arith.addf %1236, %1242 : vector<8x1xf32>
    %c4_i32_340 = arith.constant 4 : i32
    %c8_i32_341 = arith.constant 8 : i32
    %1254 = arith.muli %c4_i32_340, %c8_i32_341 : i32
    %1255 = tpu.assume_multiple %1254, 8 : i32
    %1256 = arith.index_cast %1255 : i32 to index
    %c0_342 = arith.constant 0 : index
    %1257 = vector.load %arg17[%1256, %c0_342] : memref<64x1xf32, #tpu.memory_space<vmem>>, vector<8x1xf32>
    %1258 = arith.subf %1257, %1182 : vector<8x1xf32>
    %1259 = math.exp %1258 : vector<8x1xf32>
    %1260 = arith.index_cast %1255 : i32 to index
    %c0_343 = arith.constant 0 : index
    %1261 = vector.load %arg15[%1260, %c0_343] : memref<64x32xf32, #tpu.memory_space<vmem>>, vector<8x32xf32>
    %1262 = vector.broadcast %1259 : vector<8x1xf32> to vector<8x32xf32>
    %1263 = arith.mulf %1262, %1261 : vector<8x32xf32>
    %1264 = arith.addf %1247, %1263 : vector<8x32xf32>
    %1265 = arith.index_cast %1255 : i32 to index
    %c0_344 = arith.constant 0 : index
    %1266 = vector.load %arg16[%1265, %c0_344] : memref<64x32xf32, #tpu.memory_space<vmem>>, vector<8x32xf32>
    %1267 = vector.broadcast %1259 : vector<8x1xf32> to vector<8x32xf32>
    %1268 = arith.mulf %1267, %1266 : vector<8x32xf32>
    %1269 = arith.addf %1252, %1268 : vector<8x32xf32>
    %1270 = arith.addf %1253, %1259 : vector<8x1xf32>
    %c5_i32_345 = arith.constant 5 : i32
    %c8_i32_346 = arith.constant 8 : i32
    %1271 = arith.muli %c5_i32_345, %c8_i32_346 : i32
    %1272 = tpu.assume_multiple %1271, 8 : i32
    %1273 = arith.index_cast %1272 : i32 to index
    %c0_347 = arith.constant 0 : index
    %1274 = vector.load %arg17[%1273, %c0_347] : memref<64x1xf32, #tpu.memory_space<vmem>>, vector<8x1xf32>
    %1275 = arith.subf %1274, %1182 : vector<8x1xf32>
    %1276 = math.exp %1275 : vector<8x1xf32>
    %1277 = arith.index_cast %1272 : i32 to index
    %c0_348 = arith.constant 0 : index
    %1278 = vector.load %arg15[%1277, %c0_348] : memref<64x32xf32, #tpu.memory_space<vmem>>, vector<8x32xf32>
    %1279 = vector.broadcast %1276 : vector<8x1xf32> to vector<8x32xf32>
    %1280 = arith.mulf %1279, %1278 : vector<8x32xf32>
    %1281 = arith.addf %1264, %1280 : vector<8x32xf32>
    %1282 = arith.index_cast %1272 : i32 to index
    %c0_349 = arith.constant 0 : index
    %1283 = vector.load %arg16[%1282, %c0_349] : memref<64x32xf32, #tpu.memory_space<vmem>>, vector<8x32xf32>
    %1284 = vector.broadcast %1276 : vector<8x1xf32> to vector<8x32xf32>
    %1285 = arith.mulf %1284, %1283 : vector<8x32xf32>
    %1286 = arith.addf %1269, %1285 : vector<8x32xf32>
    %1287 = arith.addf %1270, %1276 : vector<8x1xf32>
    %c6_i32_350 = arith.constant 6 : i32
    %c8_i32_351 = arith.constant 8 : i32
    %1288 = arith.muli %c6_i32_350, %c8_i32_351 : i32
    %1289 = tpu.assume_multiple %1288, 8 : i32
    %1290 = arith.index_cast %1289 : i32 to index
    %c0_352 = arith.constant 0 : index
    %1291 = vector.load %arg17[%1290, %c0_352] : memref<64x1xf32, #tpu.memory_space<vmem>>, vector<8x1xf32>
    %1292 = arith.subf %1291, %1182 : vector<8x1xf32>
    %1293 = math.exp %1292 : vector<8x1xf32>
    %1294 = arith.index_cast %1289 : i32 to index
    %c0_353 = arith.constant 0 : index
    %1295 = vector.load %arg15[%1294, %c0_353] : memref<64x32xf32, #tpu.memory_space<vmem>>, vector<8x32xf32>
    %1296 = vector.broadcast %1293 : vector<8x1xf32> to vector<8x32xf32>
    %1297 = arith.mulf %1296, %1295 : vector<8x32xf32>
    %1298 = arith.addf %1281, %1297 : vector<8x32xf32>
    %1299 = arith.index_cast %1289 : i32 to index
    %c0_354 = arith.constant 0 : index
    %1300 = vector.load %arg16[%1299, %c0_354] : memref<64x32xf32, #tpu.memory_space<vmem>>, vector<8x32xf32>
    %1301 = vector.broadcast %1293 : vector<8x1xf32> to vector<8x32xf32>
    %1302 = arith.mulf %1301, %1300 : vector<8x32xf32>
    %1303 = arith.addf %1286, %1302 : vector<8x32xf32>
    %1304 = arith.addf %1287, %1293 : vector<8x1xf32>
    %c7_i32_355 = arith.constant 7 : i32
    %c8_i32_356 = arith.constant 8 : i32
    %1305 = arith.muli %c7_i32_355, %c8_i32_356 : i32
    %1306 = tpu.assume_multiple %1305, 8 : i32
    %1307 = arith.index_cast %1306 : i32 to index
    %c0_357 = arith.constant 0 : index
    %1308 = vector.load %arg17[%1307, %c0_357] : memref<64x1xf32, #tpu.memory_space<vmem>>, vector<8x1xf32>
    %1309 = arith.subf %1308, %1182 : vector<8x1xf32>
    %1310 = math.exp %1309 : vector<8x1xf32>
    %1311 = arith.index_cast %1306 : i32 to index
    %c0_358 = arith.constant 0 : index
    %1312 = vector.load %arg15[%1311, %c0_358] : memref<64x32xf32, #tpu.memory_space<vmem>>, vector<8x32xf32>
    %1313 = vector.broadcast %1310 : vector<8x1xf32> to vector<8x32xf32>
    %1314 = arith.mulf %1313, %1312 : vector<8x32xf32>
    %1315 = arith.addf %1298, %1314 : vector<8x32xf32>
    %1316 = arith.index_cast %1306 : i32 to index
    %c0_359 = arith.constant 0 : index
    %1317 = vector.load %arg16[%1316, %c0_359] : memref<64x32xf32, #tpu.memory_space<vmem>>, vector<8x32xf32>
    %1318 = vector.broadcast %1310 : vector<8x1xf32> to vector<8x32xf32>
    %1319 = arith.mulf %1318, %1317 : vector<8x32xf32>
    %1320 = arith.addf %1303, %1319 : vector<8x32xf32>
    %1321 = arith.addf %1304, %1310 : vector<8x1xf32>
    %c8_i32_360 = arith.constant 8 : i32
    %cst_361 = arith.constant 1.000000e+00 : f32
    %1322 = vector.broadcast %cst_361 : f32 to vector<8x1xf32>
    %1323 = arith.divf %1322, %1321 : vector<8x1xf32>
    %1324 = vector.broadcast %1323 : vector<8x1xf32> to vector<8x32xf32>
    %1325 = arith.mulf %1315, %1324 : vector<8x32xf32>
    %c0_362 = arith.constant 0 : index
    %c0_363 = arith.constant 0 : index
    %1326 = vector.load %arg11[%c0_362, %c0_363] : memref<64x15xf32, #tpu.memory_space<vmem>>, vector<32x15xf32>
    %cst_364 = arith.constant dense<0.000000e+00> : vector<8x15xf32>
    %1327 = tpu.matmul %1325, %1326, %cst_364 {dimension_numbers = #tpu.dot_dimension_numbers<[1], [0], [0], [1], [0, 0, 1, 1], [], []>} : vector<8x32xf32>, vector<32x15xf32>, vector<8x15xf32> -> vector<8x15xf32>
    %1328 = vector.broadcast %1323 : vector<8x1xf32> to vector<8x32xf32>
    %1329 = arith.mulf %1320, %1328 : vector<8x32xf32>
    %c32_365 = arith.constant 32 : index
    %c0_366 = arith.constant 0 : index
    %1330 = vector.load %arg11[%c32_365, %c0_366] : memref<64x15xf32, #tpu.memory_space<vmem>>, vector<32x15xf32>
    %cst_367 = arith.constant dense<0.000000e+00> : vector<8x15xf32>
    %1331 = tpu.matmul %1329, %1330, %cst_367 {dimension_numbers = #tpu.dot_dimension_numbers<[1], [0], [0], [1], [0, 0, 1, 1], [], []>} : vector<8x32xf32>, vector<32x15xf32>, vector<8x15xf32> -> vector<8x15xf32>
    %1332 = arith.addf %1327, %1331 : vector<8x15xf32>
    %c0_368 = arith.constant 0 : index
    %c0_369 = arith.constant 0 : index
    %1333 = vector.load %arg12[%c0_368, %c0_369] : memref<1x15xf32, #tpu.memory_space<vmem>>, vector<1x15xf32>
    %1334 = vector.broadcast %1333 : vector<1x15xf32> to vector<8x15xf32>
    %1335 = arith.addf %1332, %1334 : vector<8x15xf32>
    %c0_370 = arith.constant 0 : index
    %c0_371 = arith.constant 0 : index
    %1336 = vector.load %arg13[%c0_370, %c0_371] : memref<8x15xf32, #tpu.memory_space<vmem>>, vector<8x15xf32>
    tpu.vector_store %arg13[%c0_370, %c0_371], %1335 {strides = array<i32>} : memref<8x15xf32, #tpu.memory_space<vmem>>, vector<8x15xf32>,
    return
  }
  func.func @transform_0(%arg0: i32) -> (i32, i32, i32) {
    %c0_i32 = arith.constant 0 : i32
    %c0_i32_0 = arith.constant 0 : i32
    %c0_i32_1 = arith.constant 0 : i32
    return %arg0, %c0_i32, %c0_i32_0 : i32, i32, i32
  }
  func.func @transform_1(%arg0: i32) -> (i32, i32) {
    %c0_i32 = arith.constant 0 : i32
    %c0_i32_0 = arith.constant 0 : i32
    %c0_i32_1 = arith.constant 0 : i32
    return %c0_i32, %c0_i32_0 : i32, i32
  }
  func.func @transform_2(%arg0: i32) -> (i32, i32) {
    %c0_i32 = arith.constant 0 : i32
    %c0_i32_0 = arith.constant 0 : i32
    %c0_i32_1 = arith.constant 0 : i32
    return %c0_i32, %c0_i32_0 : i32, i32
  }
  func.func @transform_3(%arg0: i32) -> (i32, i32) {
    %c0_i32 = arith.constant 0 : i32
    %c0_i32_0 = arith.constant 0 : i32
    %c0_i32_1 = arith.constant 0 : i32
    return %c0_i32, %c0_i32_0 : i32, i32
  }
  func.func @transform_4(%arg0: i32) -> (i32, i32) {
    %c0_i32 = arith.constant 0 : i32
    %c0_i32_0 = arith.constant 0 : i32
    %c0_i32_1 = arith.constant 0 : i32
    return %c0_i32, %c0_i32_0 : i32, i32
  }
  func.func @transform_5(%arg0: i32) -> (i32, i32) {
    %c0_i32 = arith.constant 0 : i32
    %c0_i32_0 = arith.constant 0 : i32
    %c0_i32_1 = arith.constant 0 : i32
    return %c0_i32, %c0_i32_0 : i32, i32
  }
  func.func @transform_6(%arg0: i32) -> (i32, i32) {
    %c0_i32 = arith.constant 0 : i32
    %c0_i32_0 = arith.constant 0 : i32
    %c0_i32_1 = arith.constant 0 : i32
    return %c0_i32, %c0_i32_0 : i32, i32
  }
  func.func @transform_7(%arg0: i32) -> (i32, i32) {
    %c0_i32 = arith.constant 0 : i32
    %c0_i32_0 = arith.constant 0 : i32
    %c0_i32_1 = arith.constant 0 : i32
    return %c0_i32, %c0_i32_0 : i32, i32
  }
  func.func @transform_8(%arg0: i32) -> (i32, i32) {
    %c0_i32 = arith.constant 0 : i32
    %c0_i32_0 = arith.constant 0 : i32
    %c0_i32_1 = arith.constant 0 : i32
    return %c0_i32, %c0_i32_0 : i32, i32
  }
  func.func @transform_9(%arg0: i32) -> (i32, i32) {
    %c0_i32 = arith.constant 0 : i32
    %c0_i32_0 = arith.constant 0 : i32
    %c0_i32_1 = arith.constant 0 : i32
    return %c0_i32, %c0_i32_0 : i32, i32
  }
  func.func @transform_10(%arg0: i32) -> (i32, i32) {
    %c0_i32 = arith.constant 0 : i32
    %c0_i32_0 = arith.constant 0 : i32
    %c0_i32_1 = arith.constant 0 : i32
    return %c0_i32, %c0_i32_0 : i32, i32
  }
  func.func @transform_11(%arg0: i32) -> (i32, i32) {
    %c0_i32 = arith.constant 0 : i32
    %c0_i32_0 = arith.constant 0 : i32
    %c0_i32_1 = arith.constant 0 : i32
    return %c0_i32, %c0_i32_0 : i32, i32
  }
  func.func @transform_12(%arg0: i32) -> (i32, i32) {
    %c0_i32 = arith.constant 0 : i32
    %c0_i32_0 = arith.constant 0 : i32
    return %arg0, %c0_i32 : i32, i32
  }
}

</mosaic_0001>

<llo_original>
// kernel: att_blstm_forward.1
$region0: #{att_blstm_forward.1}
  #allocation0 [shape = 'u32[]', space=smem, size = 0x4, offset = 0x4, fixed_abs, tag = 'smem constant byte address 0x4 - core index']
  #allocation1 [shape = 'u32[72,128]{1,0:T(1,128)}', space=vmem, size = 0x9000, scoped, tag = 'internal scratch']
  #allocation2 [shape = 'f32[64,256]{1,0:T(8,128)}', space=vmem, size = 0x10000, scoped, tag = 'scratch operand']
  #allocation3 [shape = 'f32[64,32]{1,0:T(8,128)}', space=vmem, size = 0x8000, scoped, tag = 'scratch operand']
  #allocation4 [shape = 'f32[64,32]{1,0:T(8,128)}', space=vmem, size = 0x8000, scoped, tag = 'scratch operand']
  #allocation5 [shape = 'f32[64,1]{1,0:T(8,128)}', space=vmem, size = 0x8000, scoped, tag = 'scratch operand']
  %s0 = inlined_call_operand.vmem [shape: f32[1,64,15], index: 0, kind: input, shape index: {}]
  %s1 = inlined_call_operand.vmem [shape: bf16[15,256], index: 1, kind: input, shape index: {}]
  %s2 = inlined_call_operand.vmem [shape: bf16[32,128], index: 2, kind: input, shape index: {}]
  %s3 = inlined_call_operand.vmem [shape: bf16[32,128], index: 3, kind: input, shape index: {}]
  %s4 = inlined_call_operand.vmem [shape: f32[1,256], index: 4, kind: input, shape index: {}]
  %s5 = inlined_call_operand.vmem [shape: bf16[64,256], index: 5, kind: input, shape index: {}]
  %s6 = inlined_call_operand.vmem [shape: bf16[32,128], index: 6, kind: input, shape index: {}]
  %s7 = inlined_call_operand.vmem [shape: bf16[32,128], index: 7, kind: input, shape index: {}]
  %s8 = inlined_call_operand.vmem [shape: f32[1,256], index: 8, kind: input, shape index: {}]
  %s9 = inlined_call_operand.vmem [shape: f32[64,1], index: 9, kind: input, shape index: {}]
  %s10 = inlined_call_operand.vmem [shape: f32[64,15], index: 10, kind: input, shape index: {}]
  %s11 = inlined_call_operand.vmem [shape: f32[1,15], index: 11, kind: input, shape index: {}]
  %s12 = inlined_call_operand.vmem [shape: f32[8,15], index: 12, kind: output, shape index: {}]
  %s13 = sld [smem:[#allocation0]]
  $region58: #{att_blstm_forward.1} parent=0
    _
  %s15 = ssub.s32 1, %s13
  %s16 = scalar_select 0, %s15, %s13
  // Predicated region
  $region2: #{att_blstm_forward.1} parent=0 // pred_check
    _
  $region3: #{att_blstm_forward.1} parent=0 // pred_check_branch
    %18 = sbr.rel (0) target = $region5
  $region4: #{att_blstm_forward.1} parent=0 // pred_region
    _
  $region5: #{att_blstm_forward.1} parent=0 // pred_fallthru
    _
  // Predicated region
  $region6: #{att_blstm_forward.1} parent=0 // pred_check
    _
  $region7: #{att_blstm_forward.1} parent=0 // pred_check_branch
    %20 = sbr.rel (0) target = $region9
  $region8: #{att_blstm_forward.1} parent=0 // pred_region
    _
  $region9: #{att_blstm_forward.1} parent=0 // pred_fallthru
    _
  // Predicated region
  $region10: #{att_blstm_forward.1} parent=0 // pred_check
    _
  $region11: #{att_blstm_forward.1} parent=0 // pred_check_branch
    %22 = sbr.rel (0) target = $region13
  $region12: #{att_blstm_forward.1} parent=0 // pred_region
    _
  $region13: #{att_blstm_forward.1} parent=0 // pred_fallthru
    _
  // Predicated region
  $region14: #{att_blstm_forward.1} parent=0 // pred_check
    _
  $region15: #{att_blstm_forward.1} parent=0 // pred_check_branch
    %24 = sbr.rel (0) target = $region17
  $region16: #{att_blstm_forward.1} parent=0 // pred_region
    _
  $region17: #{att_blstm_forward.1} parent=0 // pred_fallthru
    _
  // Predicated region
  $region18: #{att_blstm_forward.1} parent=0 // pred_check
    _
  $region19: #{att_blstm_forward.1} parent=0 // pred_check_branch
    %26 = sbr.rel (0) target = $region21
  $region20: #{att_blstm_forward.1} parent=0 // pred_region
    _
  $region21: #{att_blstm_forward.1} parent=0 // pred_fallthru
    _
  // Predicated region
  $region22: #{att_blstm_forward.1} parent=0 // pred_check
    _
  $region23: #{att_blstm_forward.1} parent=0 // pred_check_branch
    %28 = sbr.rel (0) target = $region25
  $region24: #{att_blstm_forward.1} parent=0 // pred_region
    _
  $region25: #{att_blstm_forward.1} parent=0 // pred_fallthru
    _
  // Predicated region
  $region26: #{att_blstm_forward.1} parent=0 // pred_check
    _
  $region27: #{att_blstm_forward.1} parent=0 // pred_check_branch
    %30 = sbr.rel (0) target = $region29
  $region28: #{att_blstm_forward.1} parent=0 // pred_region
    _
  $region29: #{att_blstm_forward.1} parent=0 // pred_fallthru
    _
  // Predicated region
  $region30: #{att_blstm_forward.1} parent=0 // pred_check
    _
  $region31: #{att_blstm_forward.1} parent=0 // pred_check_branch
    %32 = sbr.rel (0) target = $region33
  $region32: #{att_blstm_forward.1} parent=0 // pred_region
    _
  $region33: #{att_blstm_forward.1} parent=0 // pred_fallthru
    _
  // Predicated region
  $region34: #{att_blstm_forward.1} parent=0 // pred_check
    _
  $region35: #{att_blstm_forward.1} parent=0 // pred_check_branch
    %34 = sbr.rel (0) target = $region37
  $region36: #{att_blstm_forward.1} parent=0 // pred_region
    _
  $region37: #{att_blstm_forward.1} parent=0 // pred_fallthru
    _
  // Predicated region
  $region38: #{att_blstm_forward.1} parent=0 // pred_check
    _
  $region39: #{att_blstm_forward.1} parent=0 // pred_check_branch
    %36 = sbr.rel (0) target = $region41
  $region40: #{att_blstm_forward.1} parent=0 // pred_region
    _
  $region41: #{att_blstm_forward.1} parent=0 // pred_fallthru
    _
  // Predicated region
  $region42: #{att_blstm_forward.1} parent=0 // pred_check
    _
  $region43: #{att_blstm_forward.1} parent=0 // pred_check_branch
    %38 = sbr.rel (0) target = $region45
  $region44: #{att_blstm_forward.1} parent=0 // pred_region
    _
  $region45: #{att_blstm_forward.1} parent=0 // pred_fallthru
    _
  // Predicated region
  $region46: #{att_blstm_forward.1} parent=0 // pred_check
    _
  $region47: #{att_blstm_forward.1} parent=0 // pred_check_branch
    %40 = sbr.rel (0) target = $region49
  $region48: #{att_blstm_forward.1} parent=0 // pred_region
    _
  $region49: #{att_blstm_forward.1} parent=0 // pred_fallthru
    _
  %v42 = vld [vmem:[%s0] sm:$0xff]
  %v43 = vld [vmem:[%s0 + $0x8] sm:$0xff]
  %v44 = vld [vmem:[%s0 + $0x10] sm:$0xff]
  %v45 = vld [vmem:[%s0 + $0x18] sm:$0xff]
  %v46 = vld [vmem:[%s0 + $0x20] sm:$0xff]
  %v47 = vld [vmem:[%s0 + $0x28] sm:$0xff]
  %v48 = vld [vmem:[%s0 + $0x30] sm:$0xff]
  %v49 = vld [vmem:[%s0 + $0x38] sm:$0xff]
  %v50 = vpack.c.bf16 %v43, %v42
  %v51 = vpack.c.bf16 %v45, %v44
  %v52 = vpack.c.bf16 %v47, %v46
  %v53 = vpack.c.bf16 %v49, %v48
  %v54 = vld [vmem:[%s1] sm:$0xff]
  %v55 = vld [vmem:[%s1 + $0x8] sm:$0xff]
  %v56 = vld [vmem:[%s4] sm:$0x3]
  %v58 = vperm.slane %v56, 0
  %v59 = vperm.slane %v56, 1
  %v64 = vunpack.c.l.b16 %v54
  %v65 = vunpack.c.h.b16 %v54
  %v66 = vunpack.c.l.b16 %v55
  %v67 = vunpack.c.h.b16 %v55
  %v68 = vpack.c.b16 %v66, %v64
  %v69 = vpack.c.b16 %v67, %v65
  %vm70 = vcmask 121856
  %v72 = vsel %vm70, %v50, 0
  %v75 = vsel %vm70, %v51, 0
  %v78 = vsel %vm70, %v52, 0
  %v81 = vsel %vm70, %v53, 0
  %vm83 = vcmask 1046528
  %vm84 = vcmask 1047552
  %v85 = vsel %vm83, 4294967295, 65535
  %v86 = vsel %vm84, %v85, 0
  %v88 = vand.u32 %v68, %v86
  %v91 = vand.u32 %v69, %v86
  %93 = vmatpush.bf16.msra.mxu0 0
  %94 = vmatpush.bf16.msra.mxu0 0
  %95 = vmatpush.bf16.msra.mxu0 0
  %96 = vmatpush.bf16.msra.mxu0 0
  %97 = vmatpush.bf16.msra.mxu0 0
  %98 = vmatpush.bf16.msra.mxu0 0
  %99 = vmatpush.bf16.msra.mxu0 0
  %100 = vmatpush.bf16.msra.mxu0 %v88
  %101 = vmatmul.bf16.gmra.mxu0 %v72
  %v102 = vpop.f32.mrf.mxu0
  %v103 = vadd.f32 %v58, %v102
  %v104 = vpop.f32.mrf.mxu0
  %v105 = vadd.f32 %v58, %v104
  %106 = vmatmul.bf16.gmra.mxu0 %v75
  %v107 = vpop.f32.mrf.mxu0
  %v108 = vadd.f32 %v58, %v107
  %v109 = vpop.f32.mrf.mxu0
  %v110 = vadd.f32 %v58, %v109
  %111 = vmatmul.bf16.gmra.mxu0 %v78
  %v112 = vpop.f32.mrf.mxu0
  %v113 = vadd.f32 %v58, %v112
  %v114 = vpop.f32.mrf.mxu0
  %v115 = vadd.f32 %v58, %v114
  %116 = vmatmul.bf16.gmra.mxu0 %v81
  %v117 = vpop.f32.mrf.mxu0
  %v118 = vadd.f32 %v58, %v117
  %v119 = vpop.f32.mrf.mxu0
  %v120 = vadd.f32 %v58, %v119
  %121 = vdwg.mxu0
  %122 = vmatpush.bf16.msra.mxu0 0
  %123 = vmatpush.bf16.msra.mxu0 0
  %124 = vmatpush.bf16.msra.mxu0 0
  %125 = vmatpush.bf16.msra.mxu0 0
  %126 = vmatpush.bf16.msra.mxu0 0
  %127 = vmatpush.bf16.msra.mxu0 0
  %128 = vmatpush.bf16.msra.mxu0 0
  %129 = vmatpush.bf16.msra.mxu0 %v91
  %130 = vmatmul.bf16.gmra.mxu0 %v72
  %v131 = vpop.f32.mrf.mxu0
  %v132 = vadd.f32 %v59, %v131
  %v133 = vpop.f32.mrf.mxu0
  %v134 = vadd.f32 %v59, %v133
  %135 = vmatmul.bf16.gmra.mxu0 %v75
  %v136 = vpop.f32.mrf.mxu0
  %v137 = vadd.f32 %v59, %v136
  %v138 = vpop.f32.mrf.mxu0
  %v139 = vadd.f32 %v59, %v138
  %140 = vmatmul.bf16.gmra.mxu0 %v78
  %v141 = vpop.f32.mrf.mxu0
  %v142 = vadd.f32 %v59, %v141
  %v143 = vpop.f32.mrf.mxu0
  %v144 = vadd.f32 %v59, %v143
  %145 = vmatmul.bf16.gmra.mxu0 %v81
  %v146 = vpop.f32.mrf.mxu0
  %v147 = vadd.f32 %v59, %v146
  %v148 = vpop.f32.mrf.mxu0
  %v149 = vadd.f32 %v59, %v148
  %150 = vdwg.mxu0
  %151 = vst [vmem:[#allocation2] sm:$0xff] %v103
  %152 = vst [vmem:[#allocation2 + $0x8] sm:$0xff] %v132
  %153 = vst [vmem:[#allocation2 + $0x10] sm:$0xff] %v105
  %154 = vst [vmem:[#allocation2 + $0x18] sm:$0xff] %v134
  %155 = vst [vmem:[#allocation2 + $0x20] sm:$0xff] %v108
  %156 = vst [vmem:[#allocation2 + $0x28] sm:$0xff] %v137
  %157 = vst [vmem:[#allocation2 + $0x30] sm:$0xff] %v110
  %158 = vst [vmem:[#allocation2 + $0x38] sm:$0xff] %v139
  %159 = vst [vmem:[#allocation2 + $0x40] sm:$0xff] %v113
  %160 = vst [vmem:[#allocation2 + $0x48] sm:$0xff] %v142
  %161 = vst [vmem:[#allocation2 + $0x50] sm:$0xff] %v115
  %162 = vst [vmem:[#allocation2 + $0x58] sm:$0xff] %v144
  %163 = vst [vmem:[#allocation2 + $0x60] sm:$0xff] %v118
  %164 = vst [vmem:[#allocation2 + $0x68] sm:$0xff] %v147
  %165 = vst [vmem:[#allocation2 + $0x70] sm:$0xff] %v120
  %166 = vst [vmem:[#allocation2 + $0x78] sm:$0xff] %v149
  %v167 = vld [vmem:[%s2] sm:$0xf]
  %v168 = vld [vmem:[%s2 + $0x4] sm:$0xf]
  %v169 = vld [vmem:[%s2 + $0x8] sm:$0xf]
  %v170 = vld [vmem:[%s2 + $0xc] sm:$0xf]
  %v171 = vld [vmem:[%s3] sm:$0xf]
  %v172 = vld [vmem:[%s3 + $0x4] sm:$0xf]
  %v173 = vld [vmem:[%s3 + $0x8] sm:$0xf]
  %v174 = vld [vmem:[%s3 + $0xc] sm:$0xf]
  %v179 = vunpack.c.l.b16 %v167
  %v180 = vunpack.c.l.b16 %v168
  %v181 = vunpack.c.l.b16 %v169
  %v182 = vunpack.c.l.b16 %v170
  %v183 = vpack.c.b16 %v180, %v179
  %v184 = vpack.c.b16 %v182, %v181
  %vm187 = vcmask 261120
  %v189 = vsel %vm187, 0, 0
  %191 = vmatpush.bf16.msra.mxu0 0
  %192 = vmatpush.bf16.msra.mxu0 0
  %193 = vmatpush.bf16.msra.mxu0 0
  %194 = vmatpush.bf16.msra.mxu0 0
  %195 = vmatpush.bf16.msra.mxu0 0
  %196 = vmatpush.bf16.msra.mxu0 0
  %197 = vmatpush.bf16.msra.mxu0 %v184
  %198 = vmatpush.bf16.msra.mxu0 %v183
  %199 = vmatmul.bf16.gmra.mxu0 %v189
  %v200 = vpop.f32.mrf.mxu0
  %v201 = vadd.f32 0.0, %v200
  %v202 = vpop.f32.mrf.mxu0
  %203 = vdwg.mxu0
  %v208 = vunpack.c.l.b16 %v171
  %v209 = vunpack.c.l.b16 %v172
  %v210 = vunpack.c.l.b16 %v173
  %v211 = vunpack.c.l.b16 %v174
  %v212 = vpack.c.b16 %v209, %v208
  %v213 = vpack.c.b16 %v211, %v210
  %216 = vmatpush.bf16.msra.mxu0 0
  %217 = vmatpush.bf16.msra.mxu0 0
  %218 = vmatpush.bf16.msra.mxu0 0
  %219 = vmatpush.bf16.msra.mxu0 0
  %220 = vmatpush.bf16.msra.mxu0 0
  %221 = vmatpush.bf16.msra.mxu0 0
  %222 = vmatpush.bf16.msra.mxu0 %v213
  %223 = vmatpush.bf16.msra.mxu0 %v212
  %224 = vmatmul.bf16.gmra.mxu0 %v189
  %v225 = vpop.f32.mrf.mxu0
  %v226 = vadd.f32 0.0, %v225
  %v227 = vpop.f32.mrf.mxu0
  %228 = vdwg.mxu0
  %s229 = smul.u32 0, 2
  %s230 = smul.addr %s229, 8
  %s231 = scalar_lea.vmem [#allocation2], %s230
  %v232 = vld [vmem:[%s231] sm:$0xff]
  %v233 = vadd.f32 %v232, %v201
  %s234 = smul.u32 7, 2
  %s235 = smul.addr %s234, 8
  %s236 = scalar_lea.vmem [#allocation2], %s235
  %v237 = vld [vmem:[%s236 + $0x8] sm:$0xff]
  %v238 = vadd.f32 %v237, %v226
  %v239 = vxor.u32 %v233, 2147483648
  %v240 = vmul.f32 %v239, 1.442695
  %v241 = vpow.pop %v240
  %v242 = vadd.f32 %v241, 1.0
  %v243 = vrcp.pop %v242
  %v244 = vmul.f32 %v242, %v243
  %v245 = vsub.f32 1.0, %v244
  %v246 = vmul.f32 %v243, %v245
  %v247 = vadd.f32 %v243, %v246
  %vm248 = vweird.f32 %v242
  %vm249 = vweird.f32 %v243
  %vm250 = vmor %vm248, %vm249
  %v251 = vsel %vm250, %v243, %v247
  %v252 = vand.u32 2147483647, %v242
  %vm253 = vcmp.eq.f32.partialorder %v252, 8.507059e+37
  %v254 = vand.u32 %v242, 2147483648
  %v255 = vor.u32 1.1754944e-38, %v254
  %v256 = vsel %vm253, %v255, %v251
  %v257 = vmul.f32 1.0, %v256
  %v258 = vtanh.pop %v233
  %v259 = vmul.f32 %v257, 0.0
  %261 = vrot.lane.b32.xlu0 %v258, 64
  %v262 = vpop.permute.xlu0 %261
  %v264 = vmul.f32 %v257, %v262
  %266 = vrot.lane.b32.xlu0 %v264, 32
  %v267 = vpop.permute.xlu0 %266
  %v269 = vadd.f32 %v259, %v267
  %v270 = vtanh.pop %v269
  %272 = vrot.lane.b32.xlu0 %v270, 64
  %v273 = vpop.permute.xlu0 %272
  %v275 = vmul.f32 %v257, %v273
  %v276 = vxor.u32 %v238, 2147483648
  %v277 = vmul.f32 %v276, 1.442695
  %v278 = vpow.pop %v277
  %v279 = vadd.f32 %v278, 1.0
  %v280 = vrcp.pop %v279
  %v281 = vmul.f32 %v279, %v280
  %v282 = vsub.f32 1.0, %v281
  %v283 = vmul.f32 %v280, %v282
  %v284 = vadd.f32 %v280, %v283
  %vm285 = vweird.f32 %v279
  %vm286 = vweird.f32 %v280
  %vm287 = vmor %vm285, %vm286
  %v288 = vsel %vm287, %v280, %v284
  %v289 = vand.u32 2147483647, %v279
  %vm290 = vcmp.eq.f32.partialorder %v289, 8.507059e+37
  %v291 = vand.u32 %v279, 2147483648
  %v292 = vor.u32 1.1754944e-38, %v291
  %v293 = vsel %vm290, %v292, %v288
  %v294 = vmul.f32 1.0, %v293
  %v295 = vtanh.pop %v238
  %v296 = vmul.f32 %v294, 0.0
  %298 = vrot.lane.b32.xlu0 %v295, 64
  %v299 = vpop.permute.xlu0 %298
  %v301 = vmul.f32 %v294, %v299
  %303 = vrot.lane.b32.xlu0 %v301, 32
  %v304 = vpop.permute.xlu0 %303
  %v306 = vadd.f32 %v296, %v304
  %v307 = vtanh.pop %v306
  %309 = vrot.lane.b32.xlu0 %v307, 64
  %v310 = vpop.permute.xlu0 %309
  %v312 = vmul.f32 %v294, %v310
  %314 = vrot.lane.b32.xlu0 %v275, 32
  %v315 = vpop.permute.xlu0 %314
  %317 = vst.msk [vmem:[#allocation3] sm:$0xff] %vm187, %v315
  %319 = vrot.lane.b32.xlu0 %v312, 32
  %v320 = vpop.permute.xlu0 %319
  %s322 = scalar_lea.vmem [#allocation4], 56
  %323 = vst.msk [vmem:[%s322] sm:$0xff] %vm187, %v320
  %v324 = vpack.c.bf16 %v275, %v275
  %326 = vrot.lane.b32.xlu0 %v324, 32
  %v327 = vpop.permute.xlu0 %326
  %v329 = vsel %vm187, %v327, 0
  %331 = vmatpush.bf16.msra.mxu0 0
  %332 = vmatpush.bf16.msra.mxu0 0
  %333 = vmatpush.bf16.msra.mxu0 0
  %334 = vmatpush.bf16.msra.mxu0 0
  %335 = vmatpush.bf16.msra.mxu0 0
  %336 = vmatpush.bf16.msra.mxu0 0
  %337 = vmatpush.bf16.msra.mxu0 %v184
  %338 = vmatpush.bf16.msra.mxu0 %v183
  %339 = vmatmul.bf16.gmra.mxu0 %v329
  %v340 = vpop.f32.mrf.mxu0
  %v341 = vadd.f32 0.0, %v340
  %v342 = vpop.f32.mrf.mxu0
  %343 = vdwg.mxu0
  %v344 = vpack.c.bf16 %v312, %v312
  %346 = vrot.lane.b32.xlu0 %v344, 32
  %v347 = vpop.permute.xlu0 %346
  %v349 = vsel %vm187, %v347, 0
  %351 = vmatpush.bf16.msra.mxu0 0
  %352 = vmatpush.bf16.msra.mxu0 0
  %353 = vmatpush.bf16.msra.mxu0 0
  %354 = vmatpush.bf16.msra.mxu0 0
  %355 = vmatpush.bf16.msra.mxu0 0
  %356 = vmatpush.bf16.msra.mxu0 0
  %357 = vmatpush.bf16.msra.mxu0 %v213
  %358 = vmatpush.bf16.msra.mxu0 %v212
  %359 = vmatmul.bf16.gmra.mxu0 %v349
  %v360 = vpop.f32.mrf.mxu0
  %v361 = vadd.f32 0.0, %v360
  %v362 = vpop.f32.mrf.mxu0
  %363 = vdwg.mxu0
  %s364 = smul.u32 1, 2
  %s365 = smul.addr %s364, 8
  %s366 = scalar_lea.vmem [#allocation2], %s365
  %v367 = vld [vmem:[%s366] sm:$0xff]
  %v368 = vadd.f32 %v367, %v341
  %s369 = smul.u32 6, 2
  %s370 = smul.addr %s369, 8
  %s371 = scalar_lea.vmem [#allocation2], %s370
  %v372 = vld [vmem:[%s371 + $0x8] sm:$0xff]
  %v373 = vadd.f32 %v372, %v361
  %v374 = vxor.u32 %v368, 2147483648
  %v375 = vmul.f32 %v374, 1.442695
  %v376 = vpow.pop %v375
  %v377 = vadd.f32 %v376, 1.0
  %v378 = vrcp.pop %v377
  %v379 = vmul.f32 %v377, %v378
  %v380 = vsub.f32 1.0, %v379
  %v381 = vmul.f32 %v378, %v380
  %v382 = vadd.f32 %v378, %v381
  %vm383 = vweird.f32 %v377
  %vm384 = vweird.f32 %v378
  %vm385 = vmor %vm383, %vm384
  %v386 = vsel %vm385, %v378, %v382
  %v387 = vand.u32 2147483647, %v377
  %vm388 = vcmp.eq.f32.partialorder %v387, 8.507059e+37
  %v389 = vand.u32 %v377, 2147483648
  %v390 = vor.u32 1.1754944e-38, %v389
  %v391 = vsel %vm388, %v390, %v386
  %v392 = vmul.f32 1.0, %v391
  %v393 = vtanh.pop %v368
  %v394 = vmul.f32 %v392, %v269
  %396 = vrot.lane.b32.xlu0 %v393, 64
  %v397 = vpop.permute.xlu0 %396
  %v399 = vmul.f32 %v392, %v397
  %401 = vrot.lane.b32.xlu0 %v399, 32
  %v402 = vpop.permute.xlu0 %401
  %v404 = vadd.f32 %v394, %v402
  %v405 = vtanh.pop %v404
  %407 = vrot.lane.b32.xlu0 %v405, 64
  %v408 = vpop.permute.xlu0 %407
  %v410 = vmul.f32 %v392, %v408
  %v411 = vxor.u32 %v373, 2147483648
  %v412 = vmul.f32 %v411, 1.442695
  %v413 = vpow.pop %v412
  %v414 = vadd.f32 %v413, 1.0
  %v415 = vrcp.pop %v414
  %v416 = vmul.f32 %v414, %v415
  %v417 = vsub.f32 1.0, %v416
  %v418 = vmul.f32 %v415, %v417
  %v419 = vadd.f32 %v415, %v418
  %vm420 = vweird.f32 %v414
  %vm421 = vweird.f32 %v415
  %vm422 = vmor %vm420, %vm421
  %v423 = vsel %vm422, %v415, %v419
  %v424 = vand.u32 2147483647, %v414
  %vm425 = vcmp.eq.f32.partialorder %v424, 8.507059e+37
  %v426 = vand.u32 %v414, 2147483648
  %v427 = vor.u32 1.1754944e-38, %v426
  %v428 = vsel %vm425, %v427, %v423
  %v429 = vmul.f32 1.0, %v428
  %v430 = vtanh.pop %v373
  %v431 = vmul.f32 %v429, %v306
  %433 = vrot.lane.b32.xlu0 %v430, 64
  %v434 = vpop.permute.xlu0 %433
  %v436 = vmul.f32 %v429, %v434
  %438 = vrot.lane.b32.xlu0 %v436, 32
  %v439 = vpop.permute.xlu0 %438
  %v441 = vadd.f32 %v431, %v439
  %v442 = vtanh.pop %v441
  %444 = vrot.lane.b32.xlu0 %v442, 64
  %v445 = vpop.permute.xlu0 %444
  %v447 = vmul.f32 %v429, %v445
  %449 = vrot.lane.b32.xlu0 %v410, 32
  %v450 = vpop.permute.xlu0 %449
  %s452 = scalar_lea.vmem [#allocation3], 8
  %453 = vst.msk [vmem:[%s452] sm:$0xff] %vm187, %v450
  %455 = vrot.lane.b32.xlu0 %v447, 32
  %v456 = vpop.permute.xlu0 %455
  %s458 = scalar_lea.vmem [#allocation4], 48
  %459 = vst.msk [vmem:[%s458] sm:$0xff] %vm187, %v456
  %v460 = vpack.c.bf16 %v410, %v410
  %462 = vrot.lane.b32.xlu0 %v460, 32
  %v463 = vpop.permute.xlu0 %462
  %v465 = vsel %vm187, %v463, 0
  %467 = vmatpush.bf16.msra.mxu0 0
  %468 = vmatpush.bf16.msra.mxu0 0
  %469 = vmatpush.bf16.msra.mxu0 0
  %470 = vmatpush.bf16.msra.mxu0 0
  %471 = vmatpush.bf16.msra.mxu0 0
  %472 = vmatpush.bf16.msra.mxu0 0
  %473 = vmatpush.bf16.msra.mxu0 %v184
  %474 = vmatpush.bf16.msra.mxu0 %v183
  %475 = vmatmul.bf16.gmra.mxu0 %v465
  %v476 = vpop.f32.mrf.mxu0
  %v477 = vadd.f32 0.0, %v476
  %v478 = vpop.f32.mrf.mxu0
  %479 = vdwg.mxu0
  %v480 = vpack.c.bf16 %v447, %v447
  %482 = vrot.lane.b32.xlu0 %v480, 32
  %v483 = vpop.permute.xlu0 %482
  %v485 = vsel %vm187, %v483, 0
  %487 = vmatpush.bf16.msra.mxu0 0
  %488 = vmatpush.bf16.msra.mxu0 0
  %489 = vmatpush.bf16.msra.mxu0 0
  %490 = vmatpush.bf16.msra.mxu0 0
  %491 = vmatpush.bf16.msra.mxu0 0
  %492 = vmatpush.bf16.msra.mxu0 0
  %493 = vmatpush.bf16.msra.mxu0 %v213
  %494 = vmatpush.bf16.msra.mxu0 %v212
  %495 = vmatmul.bf16.gmra.mxu0 %v485
  %v496 = vpop.f32.mrf.mxu0
  %v497 = vadd.f32 0.0, %v496
  %v498 = vpop.f32.mrf.mxu0
  %499 = vdwg.mxu0
  %s500 = smul.u32 2, 2
  %s501 = smul.addr %s500, 8
  %s502 = scalar_lea.vmem [#allocation2], %s501
  %v503 = vld [vmem:[%s502] sm:$0xff]
  %v504 = vadd.f32 %v503, %v477
  %s505 = smul.u32 5, 2
  %s506 = smul.addr %s505, 8
  %s507 = scalar_lea.vmem [#allocation2], %s506
  %v508 = vld [vmem:[%s507 + $0x8] sm:$0xff]
  %v509 = vadd.f32 %v508, %v497
  %v510 = vxor.u32 %v504, 2147483648
  %v511 = vmul.f32 %v510, 1.442695
  %v512 = vpow.pop %v511
  %v513 = vadd.f32 %v512, 1.0
  %v514 = vrcp.pop %v513
  %v515 = vmul.f32 %v513, %v514
  %v516 = vsub.f32 1.0, %v515
  %v517 = vmul.f32 %v514, %v516
  %v518 = vadd.f32 %v514, %v517
  %vm519 = vweird.f32 %v513
  %vm520 = vweird.f32 %v514
  %vm521 = vmor %vm519, %vm520
  %v522 = vsel %vm521, %v514, %v518
  %v523 = vand.u32 2147483647, %v513
  %vm524 = vcmp.eq.f32.partialorder %v523, 8.507059e+37
  %v525 = vand.u32 %v513, 2147483648
  %v526 = vor.u32 1.1754944e-38, %v525
  %v527 = vsel %vm524, %v526, %v522
  %v528 = vmul.f32 1.0, %v527
  %v529 = vtanh.pop %v504
  %v530 = vmul.f32 %v528, %v404
  %532 = vrot.lane.b32.xlu0 %v529, 64
  %v533 = vpop.permute.xlu0 %532
  %v535 = vmul.f32 %v528, %v533
  %537 = vrot.lane.b32.xlu0 %v535, 32
  %v538 = vpop.permute.xlu0 %537
  %v540 = vadd.f32 %v530, %v538
  %v541 = vtanh.pop %v540
  %543 = vrot.lane.b32.xlu0 %v541, 64
  %v544 = vpop.permute.xlu0 %543
  %v546 = vmul.f32 %v528, %v544
  %v547 = vxor.u32 %v509, 2147483648
  %v548 = vmul.f32 %v547, 1.442695
  %v549 = vpow.pop %v548
  %v550 = vadd.f32 %v549, 1.0
  %v551 = vrcp.pop %v550
  %v552 = vmul.f32 %v550, %v551
  %v553 = vsub.f32 1.0, %v552
  %v554 = vmul.f32 %v551, %v553
  %v555 = vadd.f32 %v551, %v554
  %vm556 = vweird.f32 %v550
  %vm557 = vweird.f32 %v551
  %vm558 = vmor %vm556, %vm557
  %v559 = vsel %vm558, %v551, %v555
  %v560 = vand.u32 2147483647, %v550
  %vm561 = vcmp.eq.f32.partialorder %v560, 8.507059e+37
  %v562 = vand.u32 %v550, 2147483648
  %v563 = vor.u32 1.1754944e-38, %v562
  %v564 = vsel %vm561, %v563, %v559
  %v565 = vmul.f32 1.0, %v564
  %v566 = vtanh.pop %v509
  %v567 = vmul.f32 %v565, %v441
  %569 = vrot.lane.b32.xlu0 %v566, 64
  %v570 = vpop.permute.xlu0 %569
  %v572 = vmul.f32 %v565, %v570
  %574 = vrot.lane.b32.xlu0 %v572, 32
  %v575 = vpop.permute.xlu0 %574
  %v577 = vadd.f32 %v567, %v575
  %v578 = vtanh.pop %v577
  %580 = vrot.lane.b32.xlu0 %v578, 64
  %v581 = vpop.permute.xlu0 %580
  %v583 = vmul.f32 %v565, %v581
  %585 = vrot.lane.b32.xlu0 %v546, 32
  %v586 = vpop.permute.xlu0 %585
  %s588 = scalar_lea.vmem [#allocation3], 16
  %589 = vst.msk [vmem:[%s588] sm:$0xff] %vm187, %v586
  %591 = vrot.lane.b32.xlu0 %v583, 32
  %v592 = vpop.permute.xlu0 %591
  %s594 = scalar_lea.vmem [#allocation4], 40
  %595 = vst.msk [vmem:[%s594] sm:$0xff] %vm187, %v592
  %v596 = vpack.c.bf16 %v546, %v546
  %598 = vrot.lane.b32.xlu0 %v596, 32
  %v599 = vpop.permute.xlu0 %598
  %v601 = vsel %vm187, %v599, 0
  %603 = vmatpush.bf16.msra.mxu0 0
  %604 = vmatpush.bf16.msra.mxu0 0
  %605 = vmatpush.bf16.msra.mxu0 0
  %606 = vmatpush.bf16.msra.mxu0 0
  %607 = vmatpush.bf16.msra.mxu0 0
  %608 = vmatpush.bf16.msra.mxu0 0
  %609 = vmatpush.bf16.msra.mxu0 %v184
  %610 = vmatpush.bf16.msra.mxu0 %v183
  %611 = vmatmul.bf16.gmra.mxu0 %v601
  %v612 = vpop.f32.mrf.mxu0
  %v613 = vadd.f32 0.0, %v612
  %v614 = vpop.f32.mrf.mxu0
  %615 = vdwg.mxu0
  %v616 = vpack.c.bf16 %v583, %v583
  %618 = vrot.lane.b32.xlu0 %v616, 32
  %v619 = vpop.permute.xlu0 %618
  %v621 = vsel %vm187, %v619, 0
  %623 = vmatpush.bf16.msra.mxu0 0
  %624 = vmatpush.bf16.msra.mxu0 0
  %625 = vmatpush.bf16.msra.mxu0 0
  %626 = vmatpush.bf16.msra.mxu0 0
  %627 = vmatpush.bf16.msra.mxu0 0
  %628 = vmatpush.bf16.msra.mxu0 0
  %629 = vmatpush.bf16.msra.mxu0 %v213
  %630 = vmatpush.bf16.msra.mxu0 %v212
  %631 = vmatmul.bf16.gmra.mxu0 %v621
  %v632 = vpop.f32.mrf.mxu0
  %v633 = vadd.f32 0.0, %v632
  %v634 = vpop.f32.mrf.mxu0
  %635 = vdwg.mxu0
  %s636 = smul.u32 3, 2
  %s637 = smul.addr %s636, 8
  %s638 = scalar_lea.vmem [#allocation2], %s637
  %v639 = vld [vmem:[%s638] sm:$0xff]
  %v640 = vadd.f32 %v639, %v613
  %s641 = smul.u32 4, 2
  %s642 = smul.addr %s641, 8
  %s643 = scalar_lea.vmem [#allocation2], %s642
  %v644 = vld [vmem:[%s643 + $0x8] sm:$0xff]
  %v645 = vadd.f32 %v644, %v633
  %v646 = vxor.u32 %v640, 2147483648
  %v647 = vmul.f32 %v646, 1.442695
  %v648 = vpow.pop %v647
  %v649 = vadd.f32 %v648, 1.0
  %v650 = vrcp.pop %v649
  %v651 = vmul.f32 %v649, %v650
  %v652 = vsub.f32 1.0, %v651
  %v653 = vmul.f32 %v650, %v652
  %v654 = vadd.f32 %v650, %v653
  %vm655 = vweird.f32 %v649
  %vm656 = vweird.f32 %v650
  %vm657 = vmor %vm655, %vm656
  %v658 = vsel %vm657, %v650, %v654
  %v659 = vand.u32 2147483647, %v649
  %vm660 = vcmp.eq.f32.partialorder %v659, 8.507059e+37
  %v661 = vand.u32 %v649, 2147483648
  %v662 = vor.u32 1.1754944e-38, %v661
  %v663 = vsel %vm660, %v662, %v658
  %v664 = vmul.f32 1.0, %v663
  %v665 = vtanh.pop %v640
  %v666 = vmul.f32 %v664, %v540
  %668 = vrot.lane.b32.xlu0 %v665, 64
  %v669 = vpop.permute.xlu0 %668
  %v671 = vmul.f32 %v664, %v669
  %673 = vrot.lane.b32.xlu0 %v671, 32
  %v674 = vpop.permute.xlu0 %673
  %v676 = vadd.f32 %v666, %v674
  %v677 = vtanh.pop %v676
  %679 = vrot.lane.b32.xlu0 %v677, 64
  %v680 = vpop.permute.xlu0 %679
  %v682 = vmul.f32 %v664, %v680
  %v683 = vxor.u32 %v645, 2147483648
  %v684 = vmul.f32 %v683, 1.442695
  %v685 = vpow.pop %v684
  %v686 = vadd.f32 %v685, 1.0
  %v687 = vrcp.pop %v686
  %v688 = vmul.f32 %v686, %v687
  %v689 = vsub.f32 1.0, %v688
  %v690 = vmul.f32 %v687, %v689
  %v691 = vadd.f32 %v687, %v690
  %vm692 = vweird.f32 %v686
  %vm693 = vweird.f32 %v687
  %vm694 = vmor %vm692, %vm693
  %v695 = vsel %vm694, %v687, %v691
  %v696 = vand.u32 2147483647, %v686
  %vm697 = vcmp.eq.f32.partialorder %v696, 8.507059e+37
  %v698 = vand.u32 %v686, 2147483648
  %v699 = vor.u32 1.1754944e-38, %v698
  %v700 = vsel %vm697, %v699, %v695
  %v701 = vmul.f32 1.0, %v700
  %v702 = vtanh.pop %v645
  %v703 = vmul.f32 %v701, %v577
  %705 = vrot.lane.b32.xlu0 %v702, 64
  %v706 = vpop.permute.xlu0 %705
  %v708 = vmul.f32 %v701, %v706
  %710 = vrot.lane.b32.xlu0 %v708, 32
  %v711 = vpop.permute.xlu0 %710
  %v713 = vadd.f32 %v703, %v711
  %v714 = vtanh.pop %v713
  %716 = vrot.lane.b32.xlu0 %v714, 64
  %v717 = vpop.permute.xlu0 %716
  %v719 = vmul.f32 %v701, %v717
  %721 = vrot.lane.b32.xlu0 %v682, 32
  %v722 = vpop.permute.xlu0 %721
  %s724 = scalar_lea.vmem [#allocation3], 24
  %725 = vst.msk [vmem:[%s724] sm:$0xff] %vm187, %v722
  %727 = vrot.lane.b32.xlu0 %v719, 32
  %v728 = vpop.permute.xlu0 %727
  %s730 = scalar_lea.vmem [#allocation4], 32
  %731 = vst.msk [vmem:[%s730] sm:$0xff] %vm187, %v728
  %v732 = vpack.c.bf16 %v682, %v682
  %734 = vrot.lane.b32.xlu0 %v732, 32
  %v735 = vpop.permute.xlu0 %734
  %v737 = vsel %vm187, %v735, 0
  %739 = vmatpush.bf16.msra.mxu0 0
  %740 = vmatpush.bf16.msra.mxu0 0
  %741 = vmatpush.bf16.msra.mxu0 0
  %742 = vmatpush.bf16.msra.mxu0 0
  %743 = vmatpush.bf16.msra.mxu0 0
  %744 = vmatpush.bf16.msra.mxu0 0
  %745 = vmatpush.bf16.msra.mxu0 %v184
  %746 = vmatpush.bf16.msra.mxu0 %v183
  %747 = vmatmul.bf16.gmra.mxu0 %v737
  %v748 = vpop.f32.mrf.mxu0
  %v749 = vadd.f32 0.0, %v748
  %v750 = vpop.f32.mrf.mxu0
  %751 = vdwg.mxu0
  %v752 = vpack.c.bf16 %v719, %v719
  %754 = vrot.lane.b32.xlu0 %v752, 32
  %v755 = vpop.permute.xlu0 %754
  %v757 = vsel %vm187, %v755, 0
  %759 = vmatpush.bf16.msra.mxu0 0
  %760 = vmatpush.bf16.msra.mxu0 0
  %761 = vmatpush.bf16.msra.mxu0 0
  %762 = vmatpush.bf16.msra.mxu0 0
  %763 = vmatpush.bf16.msra.mxu0 0
  %764 = vmatpush.bf16.msra.mxu0 0
  %765 = vmatpush.bf16.msra.mxu0 %v213
  %766 = vmatpush.bf16.msra.mxu0 %v212
  %767 = vmatmul.bf16.gmra.mxu0 %v757
  %v768 = vpop.f32.mrf.mxu0
  %v769 = vadd.f32 0.0, %v768
  %v770 = vpop.f32.mrf.mxu0
  %771 = vdwg.mxu0
  %v772 = vld [vmem:[%s643] sm:$0xff]
  %v773 = vadd.f32 %v772, %v749
  %v774 = vld [vmem:[%s638 + $0x8] sm:$0xff]
  %v775 = vadd.f32 %v774, %v769
  %v776 = vxor.u32 %v773, 2147483648
  %v777 = vmul.f32 %v776, 1.442695
  %v778 = vpow.pop %v777
  %v779 = vadd.f32 %v778, 1.0
  %v780 = vrcp.pop %v779
  %v781 = vmul.f32 %v779, %v780
  %v782 = vsub.f32 1.0, %v781
  %v783 = vmul.f32 %v780, %v782
  %v784 = vadd.f32 %v780, %v783
  %vm785 = vweird.f32 %v779
  %vm786 = vweird.f32 %v780
  %vm787 = vmor %vm785, %vm786
  %v788 = vsel %vm787, %v780, %v784
  %v789 = vand.u32 2147483647, %v779
  %vm790 = vcmp.eq.f32.partialorder %v789, 8.507059e+37
  %v791 = vand.u32 %v779, 2147483648
  %v792 = vor.u32 1.1754944e-38, %v791
  %v793 = vsel %vm790, %v792, %v788
  %v794 = vmul.f32 1.0, %v793
  %v795 = vtanh.pop %v773
  %v796 = vmul.f32 %v794, %v676
  %798 = vrot.lane.b32.xlu0 %v795, 64
  %v799 = vpop.permute.xlu0 %798
  %v801 = vmul.f32 %v794, %v799
  %803 = vrot.lane.b32.xlu0 %v801, 32
  %v804 = vpop.permute.xlu0 %803
  %v806 = vadd.f32 %v796, %v804
  %v807 = vtanh.pop %v806
  %809 = vrot.lane.b32.xlu0 %v807, 64
  %v810 = vpop.permute.xlu0 %809
  %v812 = vmul.f32 %v794, %v810
  %v813 = vxor.u32 %v775, 2147483648
  %v814 = vmul.f32 %v813, 1.442695
  %v815 = vpow.pop %v814
  %v816 = vadd.f32 %v815, 1.0
  %v817 = vrcp.pop %v816
  %v818 = vmul.f32 %v816, %v817
  %v819 = vsub.f32 1.0, %v818
  %v820 = vmul.f32 %v817, %v819
  %v821 = vadd.f32 %v817, %v820
  %vm822 = vweird.f32 %v816
  %vm823 = vweird.f32 %v817
  %vm824 = vmor %vm822, %vm823
  %v825 = vsel %vm824, %v817, %v821
  %v826 = vand.u32 2147483647, %v816
  %vm827 = vcmp.eq.f32.partialorder %v826, 8.507059e+37
  %v828 = vand.u32 %v816, 2147483648
  %v829 = vor.u32 1.1754944e-38, %v828
  %v830 = vsel %vm827, %v829, %v825
  %v831 = vmul.f32 1.0, %v830
  %v832 = vtanh.pop %v775
  %v833 = vmul.f32 %v831, %v713
  %835 = vrot.lane.b32.xlu0 %v832, 64
  %v836 = vpop.permute.xlu0 %835
  %v838 = vmul.f32 %v831, %v836
  %840 = vrot.lane.b32.xlu0 %v838, 32
  %v841 = vpop.permute.xlu0 %840
  %v843 = vadd.f32 %v833, %v841
  %v844 = vtanh.pop %v843
  %846 = vrot.lane.b32.xlu0 %v844, 64
  %v847 = vpop.permute.xlu0 %846
  %v849 = vmul.f32 %v831, %v847
  %851 = vrot.lane.b32.xlu0 %v812, 32
  %v852 = vpop.permute.xlu0 %851
  %s854 = scalar_lea.vmem [#allocation3], 32
  %855 = vst.msk [vmem:[%s854] sm:$0xff] %vm187, %v852
  %857 = vrot.lane.b32.xlu0 %v849, 32
  %v858 = vpop.permute.xlu0 %857
  %s860 = scalar_lea.vmem [#allocation4], 24
  %861 = vst.msk [vmem:[%s860] sm:$0xff] %vm187, %v858
  %v862 = vpack.c.bf16 %v812, %v812
  %864 = vrot.lane.b32.xlu0 %v862, 32
  %v865 = vpop.permute.xlu0 %864
  %v867 = vsel %vm187, %v865, 0
  %869 = vmatpush.bf16.msra.mxu0 0
  %870 = vmatpush.bf16.msra.mxu0 0
  %871 = vmatpush.bf16.msra.mxu0 0
  %872 = vmatpush.bf16.msra.mxu0 0
  %873 = vmatpush.bf16.msra.mxu0 0
  %874 = vmatpush.bf16.msra.mxu0 0
  %875 = vmatpush.bf16.msra.mxu0 %v184
  %876 = vmatpush.bf16.msra.mxu0 %v183
  %877 = vmatmul.bf16.gmra.mxu0 %v867
  %v878 = vpop.f32.mrf.mxu0
  %v879 = vadd.f32 0.0, %v878
  %v880 = vpop.f32.mrf.mxu0
  %881 = vdwg.mxu0
  %v882 = vpack.c.bf16 %v849, %v849
  %884 = vrot.lane.b32.xlu0 %v882, 32
  %v885 = vpop.permute.xlu0 %884
  %v887 = vsel %vm187, %v885, 0
  %889 = vmatpush.bf16.msra.mxu0 0
  %890 = vmatpush.bf16.msra.mxu0 0
  %891 = vmatpush.bf16.msra.mxu0 0
  %892 = vmatpush.bf16.msra.mxu0 0
  %893 = vmatpush.bf16.msra.mxu0 0
  %894 = vmatpush.bf16.msra.mxu0 0
  %895 = vmatpush.bf16.msra.mxu0 %v213
  %896 = vmatpush.bf16.msra.mxu0 %v212
  %897 = vmatmul.bf16.gmra.mxu0 %v887
  %v898 = vpop.f32.mrf.mxu0
  %v899 = vadd.f32 0.0, %v898
  %v900 = vpop.f32.mrf.mxu0
  %901 = vdwg.mxu0
  %v902 = vld [vmem:[%s507] sm:$0xff]
  %v903 = vadd.f32 %v902, %v879
  %v904 = vld [vmem:[%s502 + $0x8] sm:$0xff]
  %v905 = vadd.f32 %v904, %v899
  %v906 = vxor.u32 %v903, 2147483648
  %v907 = vmul.f32 %v906, 1.442695
  %v908 = vpow.pop %v907
  %v909 = vadd.f32 %v908, 1.0
  %v910 = vrcp.pop %v909
  %v911 = vmul.f32 %v909, %v910
  %v912 = vsub.f32 1.0, %v911
  %v913 = vmul.f32 %v910, %v912
  %v914 = vadd.f32 %v910, %v913
  %vm915 = vweird.f32 %v909
  %vm916 = vweird.f32 %v910
  %vm917 = vmor %vm915, %vm916
  %v918 = vsel %vm917, %v910, %v914
  %v919 = vand.u32 2147483647, %v909
  %vm920 = vcmp.eq.f32.partialorder %v919, 8.507059e+37
  %v921 = vand.u32 %v909, 2147483648
  %v922 = vor.u32 1.1754944e-38, %v921
  %v923 = vsel %vm920, %v922, %v918
  %v924 = vmul.f32 1.0, %v923
  %v925 = vtanh.pop %v903
  %v926 = vmul.f32 %v924, %v806
  %928 = vrot.lane.b32.xlu0 %v925, 64
  %v929 = vpop.permute.xlu0 %928
  %v931 = vmul.f32 %v924, %v929
  %933 = vrot.lane.b32.xlu0 %v931, 32
  %v934 = vpop.permute.xlu0 %933
  %v936 = vadd.f32 %v926, %v934
  %v937 = vtanh.pop %v936
  %939 = vrot.lane.b32.xlu0 %v937, 64
  %v940 = vpop.permute.xlu0 %939
  %v942 = vmul.f32 %v924, %v940
  %v943 = vxor.u32 %v905, 2147483648
  %v944 = vmul.f32 %v943, 1.442695
  %v945 = vpow.pop %v944
  %v946 = vadd.f32 %v945, 1.0
  %v947 = vrcp.pop %v946
  %v948 = vmul.f32 %v946, %v947
  %v949 = vsub.f32 1.0, %v948
  %v950 = vmul.f32 %v947, %v949
  %v951 = vadd.f32 %v947, %v950
  %vm952 = vweird.f32 %v946
  %vm953 = vweird.f32 %v947
  %vm954 = vmor %vm952, %vm953
  %v955 = vsel %vm954, %v947, %v951
  %v956 = vand.u32 2147483647, %v946
  %vm957 = vcmp.eq.f32.partialorder %v956, 8.507059e+37
  %v958 = vand.u32 %v946, 2147483648
  %v959 = vor.u32 1.1754944e-38, %v958
  %v960 = vsel %vm957, %v959, %v955
  %v961 = vmul.f32 1.0, %v960
  %v962 = vtanh.pop %v905
  %v963 = vmul.f32 %v961, %v843
  %965 = vrot.lane.b32.xlu0 %v962, 64
  %v966 = vpop.permute.xlu0 %965
  %v968 = vmul.f32 %v961, %v966
  %970 = vrot.lane.b32.xlu0 %v968, 32
  %v971 = vpop.permute.xlu0 %970
  %v973 = vadd.f32 %v963, %v971
  %v974 = vtanh.pop %v973
  %976 = vrot.lane.b32.xlu0 %v974, 64
  %v977 = vpop.permute.xlu0 %976
  %v979 = vmul.f32 %v961, %v977
  %981 = vrot.lane.b32.xlu0 %v942, 32
  %v982 = vpop.permute.xlu0 %981
  %s984 = scalar_lea.vmem [#allocation3], 40
  %985 = vst.msk [vmem:[%s984] sm:$0xff] %vm187, %v982
  %987 = vrot.lane.b32.xlu0 %v979, 32
  %v988 = vpop.permute.xlu0 %987
  %s990 = scalar_lea.vmem [#allocation4], 16
  %991 = vst.msk [vmem:[%s990] sm:$0xff] %vm187, %v988
  %v992 = vpack.c.bf16 %v942, %v942
  %994 = vrot.lane.b32.xlu0 %v992, 32
  %v995 = vpop.permute.xlu0 %994
  %v997 = vsel %vm187, %v995, 0
  %999 = vmatpush.bf16.msra.mxu0 0
  %1000 = vmatpush.bf16.msra.mxu0 0
  %1001 = vmatpush.bf16.msra.mxu0 0
  %1002 = vmatpush.bf16.msra.mxu0 0
  %1003 = vmatpush.bf16.msra.mxu0 0
  %1004 = vmatpush.bf16.msra.mxu0 0
  %1005 = vmatpush.bf16.msra.mxu0 %v184
  %1006 = vmatpush.bf16.msra.mxu0 %v183
  %1007 = vmatmul.bf16.gmra.mxu0 %v997
  %v1008 = vpop.f32.mrf.mxu0
  %v1009 = vadd.f32 0.0, %v1008
  %v1010 = vpop.f32.mrf.mxu0
  %1011 = vdwg.mxu0
  %v1012 = vpack.c.bf16 %v979, %v979
  %1014 = vrot.lane.b32.xlu0 %v1012, 32
  %v1015 = vpop.permute.xlu0 %1014
  %v1017 = vsel %vm187, %v1015, 0
  %1019 = vmatpush.bf16.msra.mxu0 0
  %1020 = vmatpush.bf16.msra.mxu0 0
  %1021 = vmatpush.bf16.msra.mxu0 0
  %1022 = vmatpush.bf16.msra.mxu0 0
  %1023 = vmatpush.bf16.msra.mxu0 0
  %1024 = vmatpush.bf16.msra.mxu0 0
  %1025 = vmatpush.bf16.msra.mxu0 %v213
  %1026 = vmatpush.bf16.msra.mxu0 %v212
  %1027 = vmatmul.bf16.gmra.mxu0 %v1017
  %v1028 = vpop.f32.mrf.mxu0
  %v1029 = vadd.f32 0.0, %v1028
  %v1030 = vpop.f32.mrf.mxu0
  %1031 = vdwg.mxu0
  %v1032 = vld [vmem:[%s371] sm:$0xff]
  %v1033 = vadd.f32 %v1032, %v1009
  %v1034 = vld [vmem:[%s366 + $0x8] sm:$0xff]
  %v1035 = vadd.f32 %v1034, %v1029
  %v1036 = vxor.u32 %v1033, 2147483648
  %v1037 = vmul.f32 %v1036, 1.442695
  %v1038 = vpow.pop %v1037
  %v1039 = vadd.f32 %v1038, 1.0
  %v1040 = vrcp.pop %v1039
  %v1041 = vmul.f32 %v1039, %v1040
  %v1042 = vsub.f32 1.0, %v1041
  %v1043 = vmul.f32 %v1040, %v1042
  %v1044 = vadd.f32 %v1040, %v1043
  %vm1045 = vweird.f32 %v1039
  %vm1046 = vweird.f32 %v1040
  %vm1047 = vmor %vm1045, %vm1046
  %v1048 = vsel %vm1047, %v1040, %v1044
  %v1049 = vand.u32 2147483647, %v1039
  %vm1050 = vcmp.eq.f32.partialorder %v1049, 8.507059e+37
  %v1051 = vand.u32 %v1039, 2147483648
  %v1052 = vor.u32 1.1754944e-38, %v1051
  %v1053 = vsel %vm1050, %v1052, %v1048
  %v1054 = vmul.f32 1.0, %v1053
  %v1055 = vtanh.pop %v1033
  %v1056 = vmul.f32 %v1054, %v936
  %1058 = vrot.lane.b32.xlu0 %v1055, 64
  %v1059 = vpop.permute.xlu0 %1058
  %v1061 = vmul.f32 %v1054, %v1059
  %1063 = vrot.lane.b32.xlu0 %v1061, 32
  %v1064 = vpop.permute.xlu0 %1063
  %v1066 = vadd.f32 %v1056, %v1064
  %v1067 = vtanh.pop %v1066
  %1069 = vrot.lane.b32.xlu0 %v1067, 64
  %v1070 = vpop.permute.xlu0 %1069
  %v1072 = vmul.f32 %v1054, %v1070
  %v1073 = vxor.u32 %v1035, 2147483648
  %v1074 = vmul.f32 %v1073, 1.442695
  %v1075 = vpow.pop %v1074
  %v1076 = vadd.f32 %v1075, 1.0
  %v1077 = vrcp.pop %v1076
  %v1078 = vmul.f32 %v1076, %v1077
  %v1079 = vsub.f32 1.0, %v1078
  %v1080 = vmul.f32 %v1077, %v1079
  %v1081 = vadd.f32 %v1077, %v1080
  %vm1082 = vweird.f32 %v1076
  %vm1083 = vweird.f32 %v1077
  %vm1084 = vmor %vm1082, %vm1083
  %v1085 = vsel %vm1084, %v1077, %v1081
  %v1086 = vand.u32 2147483647, %v1076
  %vm1087 = vcmp.eq.f32.partialorder %v1086, 8.507059e+37
  %v1088 = vand.u32 %v1076, 2147483648
  %v1089 = vor.u32 1.1754944e-38, %v1088
  %v1090 = vsel %vm1087, %v1089, %v1085
  %v1091 = vmul.f32 1.0, %v1090
  %v1092 = vtanh.pop %v1035
  %v1093 = vmul.f32 %v1091, %v973
  %1095 = vrot.lane.b32.xlu0 %v1092, 64
  %v1096 = vpop.permute.xlu0 %1095
  %v1098 = vmul.f32 %v1091, %v1096
  %1100 = vrot.lane.b32.xlu0 %v1098, 32
  %v1101 = vpop.permute.xlu0 %1100
  %v1103 = vadd.f32 %v1093, %v1101
  %v1104 = vtanh.pop %v1103
  %1106 = vrot.lane.b32.xlu0 %v1104, 64
  %v1107 = vpop.permute.xlu0 %1106
  %v1109 = vmul.f32 %v1091, %v1107
  %1111 = vrot.lane.b32.xlu0 %v1072, 32
  %v1112 = vpop.permute.xlu0 %1111
  %s1114 = scalar_lea.vmem [#allocation3], 48
  %1115 = vst.msk [vmem:[%s1114] sm:$0xff] %vm187, %v1112
  %1117 = vrot.lane.b32.xlu0 %v1109, 32
  %v1118 = vpop.permute.xlu0 %1117
  %s1120 = scalar_lea.vmem [#allocation4], 8
  %1121 = vst.msk [vmem:[%s1120] sm:$0xff] %vm187, %v1118
  %v1122 = vpack.c.bf16 %v1072, %v1072
  %1124 = vrot.lane.b32.xlu0 %v1122, 32
  %v1125 = vpop.permute.xlu0 %1124
  %v1127 = vsel %vm187, %v1125, 0
  %1129 = vmatpush.bf16.msra.mxu0 0
  %1130 = vmatpush.bf16.msra.mxu0 0
  %1131 = vmatpush.bf16.msra.mxu0 0
  %1132 = vmatpush.bf16.msra.mxu0 0
  %1133 = vmatpush.bf16.msra.mxu0 0
  %1134 = vmatpush.bf16.msra.mxu0 0
  %1135 = vmatpush.bf16.msra.mxu0 %v184
  %1136 = vmatpush.bf16.msra.mxu0 %v183
  %1137 = vmatmul.bf16.gmra.mxu0 %v1127
  %v1138 = vpop.f32.mrf.mxu0
  %v1139 = vadd.f32 0.0, %v1138
  %v1140 = vpop.f32.mrf.mxu0
  %1141 = vdwg.mxu0
  %v1142 = vpack.c.bf16 %v1109, %v1109
  %1144 = vrot.lane.b32.xlu0 %v1142, 32
  %v1145 = vpop.permute.xlu0 %1144
  %v1147 = vsel %vm187, %v1145, 0
  %1149 = vmatpush.bf16.msra.mxu0 0
  %1150 = vmatpush.bf16.msra.mxu0 0
  %1151 = vmatpush.bf16.msra.mxu0 0
  %1152 = vmatpush.bf16.msra.mxu0 0
  %1153 = vmatpush.bf16.msra.mxu0 0
  %1154 = vmatpush.bf16.msra.mxu0 0
  %1155 = vmatpush.bf16.msra.mxu0 %v213
  %1156 = vmatpush.bf16.msra.mxu0 %v212
  %1157 = vmatmul.bf16.gmra.mxu0 %v1147
  %v1158 = vpop.f32.mrf.mxu0
  %v1159 = vadd.f32 0.0, %v1158
  %v1160 = vpop.f32.mrf.mxu0
  %1161 = vdwg.mxu0
  %v1162 = vld [vmem:[%s236] sm:$0xff]
  %v1163 = vadd.f32 %v1162, %v1139
  %v1164 = vld [vmem:[%s231 + $0x8] sm:$0xff]
  %v1165 = vadd.f32 %v1164, %v1159
  %v1166 = vxor.u32 %v1163, 2147483648
  %v1167 = vmul.f32 %v1166, 1.442695
  %v1168 = vpow.pop %v1167
  %v1169 = vadd.f32 %v1168, 1.0
  %v1170 = vrcp.pop %v1169
  %v1171 = vmul.f32 %v1169, %v1170
  %v1172 = vsub.f32 1.0, %v1171
  %v1173 = vmul.f32 %v1170, %v1172
  %v1174 = vadd.f32 %v1170, %v1173
  %vm1175 = vweird.f32 %v1169
  %vm1176 = vweird.f32 %v1170
  %vm1177 = vmor %vm1175, %vm1176
  %v1178 = vsel %vm1177, %v1170, %v1174
  %v1179 = vand.u32 2147483647, %v1169
  %vm1180 = vcmp.eq.f32.partialorder %v1179, 8.507059e+37
  %v1181 = vand.u32 %v1169, 2147483648
  %v1182 = vor.u32 1.1754944e-38, %v1181
  %v1183 = vsel %vm1180, %v1182, %v1178
  %v1184 = vmul.f32 1.0, %v1183
  %v1185 = vtanh.pop %v1163
  %v1186 = vmul.f32 %v1184, %v1066
  %1188 = vrot.lane.b32.xlu0 %v1185, 64
  %v1189 = vpop.permute.xlu0 %1188
  %v1191 = vmul.f32 %v1184, %v1189
  %1193 = vrot.lane.b32.xlu0 %v1191, 32
  %v1194 = vpop.permute.xlu0 %1193
  %v1196 = vadd.f32 %v1186, %v1194
  %v1197 = vtanh.pop %v1196
  %1199 = vrot.lane.b32.xlu0 %v1197, 64
  %v1200 = vpop.permute.xlu0 %1199
  %v1202 = vmul.f32 %v1184, %v1200
  %v1203 = vxor.u32 %v1165, 2147483648
  %v1204 = vmul.f32 %v1203, 1.442695
  %v1205 = vpow.pop %v1204
  %v1206 = vadd.f32 %v1205, 1.0
  %v1207 = vrcp.pop %v1206
  %v1208 = vmul.f32 %v1206, %v1207
  %v1209 = vsub.f32 1.0, %v1208
  %v1210 = vmul.f32 %v1207, %v1209
  %v1211 = vadd.f32 %v1207, %v1210
  %vm1212 = vweird.f32 %v1206
  %vm1213 = vweird.f32 %v1207
  %vm1214 = vmor %vm1212, %vm1213
  %v1215 = vsel %vm1214, %v1207, %v1211
  %v1216 = vand.u32 2147483647, %v1206
  %vm1217 = vcmp.eq.f32.partialorder %v1216, 8.507059e+37
  %v1218 = vand.u32 %v1206, 2147483648
  %v1219 = vor.u32 1.1754944e-38, %v1218
  %v1220 = vsel %vm1217, %v1219, %v1215
  %v1221 = vmul.f32 1.0, %v1220
  %v1222 = vtanh.pop %v1165
  %v1223 = vmul.f32 %v1221, %v1103
  %1225 = vrot.lane.b32.xlu0 %v1222, 64
  %v1226 = vpop.permute.xlu0 %1225
  %v1228 = vmul.f32 %v1221, %v1226
  %1230 = vrot.lane.b32.xlu0 %v1228, 32
  %v1231 = vpop.permute.xlu0 %1230
  %v1233 = vadd.f32 %v1223, %v1231
  %v1234 = vtanh.pop %v1233
  %1236 = vrot.lane.b32.xlu0 %v1234, 64
  %v1237 = vpop.permute.xlu0 %1236
  %v1239 = vmul.f32 %v1221, %v1237
  %1241 = vrot.lane.b32.xlu0 %v1202, 32
  %v1242 = vpop.permute.xlu0 %1241
  %s1244 = scalar_lea.vmem [#allocation3], 56
  %1245 = vst.msk [vmem:[%s1244] sm:$0xff] %vm187, %v1242
  %1247 = vrot.lane.b32.xlu0 %v1239, 32
  %v1248 = vpop.permute.xlu0 %1247
  %1250 = vst.msk [vmem:[#allocation4] sm:$0xff] %vm187, %v1248
  %v1251 = vld [vmem:[#allocation3] sm:$0xff]
  %v1252 = vld [vmem:[#allocation3 + $0x8] sm:$0xff]
  %v1253 = vld [vmem:[#allocation3 + $0x10] sm:$0xff]
  %v1254 = vld [vmem:[#allocation3 + $0x18] sm:$0xff]
  %v1255 = vld [vmem:[#allocation3 + $0x20] sm:$0xff]
  %v1256 = vld [vmem:[#allocation3 + $0x28] sm:$0xff]
  %v1257 = vld [vmem:[#allocation3 + $0x30] sm:$0xff]
  %v1258 = vld [vmem:[#allocation3 + $0x38] sm:$0xff]
  %v1259 = vpack.c.bf16 %v1252, %v1251
  %v1260 = vpack.c.bf16 %v1254, %v1253
  %v1261 = vpack.c.bf16 %v1256, %v1255
  %v1262 = vpack.c.bf16 %v1258, %v1257
  %v1263 = vld [vmem:[%s5] sm:$0xff]
  %v1264 = vld [vmem:[%s5 + $0x8] sm:$0xff]
  %v1265 = vld [vmem:[%s5 + $0x10] sm:$0xff]
  %v1266 = vld [vmem:[%s5 + $0x18] sm:$0xff]
  %v1267 = vld [vmem:[#allocation4] sm:$0xff]
  %v1268 = vld [vmem:[#allocation4 + $0x8] sm:$0xff]
  %v1269 = vld [vmem:[#allocation4 + $0x10] sm:$0xff]
  %v1270 = vld [vmem:[#allocation4 + $0x18] sm:$0xff]
  %v1271 = vld [vmem:[#allocation4 + $0x20] sm:$0xff]
  %v1272 = vld [vmem:[#allocation4 + $0x28] sm:$0xff]
  %v1273 = vld [vmem:[#allocation4 + $0x30] sm:$0xff]
  %v1274 = vld [vmem:[#allocation4 + $0x38] sm:$0xff]
  %v1275 = vpack.c.bf16 %v1268, %v1267
  %v1276 = vpack.c.bf16 %v1270, %v1269
  %v1277 = vpack.c.bf16 %v1272, %v1271
  %v1278 = vpack.c.bf16 %v1274, %v1273
  %v1279 = vld [vmem:[%s5 + $0x20] sm:$0xff]
  %v1280 = vld [vmem:[%s5 + $0x28] sm:$0xff]
  %v1281 = vld [vmem:[%s5 + $0x30] sm:$0xff]
  %v1282 = vld [vmem:[%s5 + $0x38] sm:$0xff]
  %v1287 = vunpack.c.l.b16 %v1279
  %v1288 = vunpack.c.h.b16 %v1279
  %v1289 = vunpack.c.l.b16 %v1280
  %v1290 = vunpack.c.h.b16 %v1280
  %v1291 = vunpack.c.l.b16 %v1281
  %v1292 = vunpack.c.h.b16 %v1281
  %v1293 = vunpack.c.l.b16 %v1282
  %v1294 = vunpack.c.h.b16 %v1282
  %v1295 = vpack.c.b16 %v1289, %v1287
  %v1296 = vpack.c.b16 %v1290, %v1288
  %v1297 = vpack.c.b16 %v1293, %v1291
  %v1298 = vpack.c.b16 %v1294, %v1292
  %v1304 = vsel %vm187, %v1275, 0
  %v1307 = vsel %vm187, %v1276, 0
  %v1310 = vsel %vm187, %v1277, 0
  %v1313 = vsel %vm187, %v1278, 0
  %1315 = vmatpush.bf16.msra.mxu0 0
  %1316 = vmatpush.bf16.msra.mxu0 0
  %1317 = vmatpush.bf16.msra.mxu0 0
  %1318 = vmatpush.bf16.msra.mxu0 0
  %1319 = vmatpush.bf16.msra.mxu0 0
  %1320 = vmatpush.bf16.msra.mxu0 0
  %1321 = vmatpush.bf16.msra.mxu0 %v1297
  %1322 = vmatpush.bf16.msra.mxu0 %v1295
  %1323 = vmatmul.bf16.gmra.mxu0 %v1304
  %v1324 = vpop.f32.mrf.mxu0
  %v1325 = vadd.f32 0.0, %v1324
  %v1326 = vpop.f32.mrf.mxu0
  %v1327 = vadd.f32 0.0, %v1326
  %1328 = vmatmul.bf16.gmra.mxu0 %v1307
  %v1329 = vpop.f32.mrf.mxu0
  %v1330 = vadd.f32 0.0, %v1329
  %v1331 = vpop.f32.mrf.mxu0
  %v1332 = vadd.f32 0.0, %v1331
  %1333 = vmatmul.bf16.gmra.mxu0 %v1310
  %v1334 = vpop.f32.mrf.mxu0
  %v1335 = vadd.f32 0.0, %v1334
  %v1336 = vpop.f32.mrf.mxu0
  %v1337 = vadd.f32 0.0, %v1336
  %1338 = vmatmul.bf16.gmra.mxu0 %v1313
  %v1339 = vpop.f32.mrf.mxu0
  %v1340 = vadd.f32 0.0, %v1339
  %v1341 = vpop.f32.mrf.mxu0
  %v1342 = vadd.f32 0.0, %v1341
  %1343 = vdwg.mxu0
  %1344 = vmatpush.bf16.msra.mxu0 0
  %1345 = vmatpush.bf16.msra.mxu0 0
  %1346 = vmatpush.bf16.msra.mxu0 0
  %1347 = vmatpush.bf16.msra.mxu0 0
  %1348 = vmatpush.bf16.msra.mxu0 0
  %1349 = vmatpush.bf16.msra.mxu0 0
  %1350 = vmatpush.bf16.msra.mxu0 %v1298
  %1351 = vmatpush.bf16.msra.mxu0 %v1296
  %1352 = vmatmul.bf16.gmra.mxu0 %v1304
  %v1353 = vpop.f32.mrf.mxu0
  %v1354 = vadd.f32 0.0, %v1353
  %v1355 = vpop.f32.mrf.mxu0
  %v1356 = vadd.f32 0.0, %v1355
  %1357 = vmatmul.bf16.gmra.mxu0 %v1307
  %v1358 = vpop.f32.mrf.mxu0
  %v1359 = vadd.f32 0.0, %v1358
  %v1360 = vpop.f32.mrf.mxu0
  %v1361 = vadd.f32 0.0, %v1360
  %1362 = vmatmul.bf16.gmra.mxu0 %v1310
  %v1363 = vpop.f32.mrf.mxu0
  %v1364 = vadd.f32 0.0, %v1363
  %v1365 = vpop.f32.mrf.mxu0
  %v1366 = vadd.f32 0.0, %v1365
  %1367 = vmatmul.bf16.gmra.mxu0 %v1313
  %v1368 = vpop.f32.mrf.mxu0
  %v1369 = vadd.f32 0.0, %v1368
  %v1370 = vpop.f32.mrf.mxu0
  %v1371 = vadd.f32 0.0, %v1370
  %1372 = vdwg.mxu0
  %v1377 = vunpack.c.l.b16 %v1263
  %v1378 = vunpack.c.h.b16 %v1263
  %v1379 = vunpack.c.l.b16 %v1264
  %v1380 = vunpack.c.h.b16 %v1264
  %v1381 = vunpack.c.l.b16 %v1265
  %v1382 = vunpack.c.h.b16 %v1265
  %v1383 = vunpack.c.l.b16 %v1266
  %v1384 = vunpack.c.h.b16 %v1266
  %v1385 = vpack.c.b16 %v1379, %v1377
  %v1386 = vpack.c.b16 %v1380, %v1378
  %v1387 = vpack.c.b16 %v1383, %v1381
  %v1388 = vpack.c.b16 %v1384, %v1382
  %v1394 = vsel %vm187, %v1259, 0
  %v1397 = vsel %vm187, %v1260, 0
  %v1400 = vsel %vm187, %v1261, 0
  %v1403 = vsel %vm187, %v1262, 0
  %1405 = vmatpush.bf16.msra.mxu0 0
  %1406 = vmatpush.bf16.msra.mxu0 0
  %1407 = vmatpush.bf16.msra.mxu0 0
  %1408 = vmatpush.bf16.msra.mxu0 0
  %1409 = vmatpush.bf16.msra.mxu0 0
  %1410 = vmatpush.bf16.msra.mxu0 0
  %1411 = vmatpush.bf16.msra.mxu0 %v1387
  %1412 = vmatpush.bf16.msra.mxu0 %v1385
  %1413 = vmatmul.bf16.gmra.mxu0 %v1394
  %v1414 = vpop.f32.mrf.mxu0
  %v1415 = vadd.f32 %v1325, %v1414
  %v1416 = vpop.f32.mrf.mxu0
  %v1417 = vadd.f32 %v1327, %v1416
  %1418 = vmatmul.bf16.gmra.mxu0 %v1397
  %v1419 = vpop.f32.mrf.mxu0
  %v1420 = vadd.f32 %v1330, %v1419
  %v1421 = vpop.f32.mrf.mxu0
  %v1422 = vadd.f32 %v1332, %v1421
  %1423 = vmatmul.bf16.gmra.mxu0 %v1400
  %v1424 = vpop.f32.mrf.mxu0
  %v1425 = vadd.f32 %v1335, %v1424
  %v1426 = vpop.f32.mrf.mxu0
  %v1427 = vadd.f32 %v1337, %v1426
  %1428 = vmatmul.bf16.gmra.mxu0 %v1403
  %v1429 = vpop.f32.mrf.mxu0
  %v1430 = vadd.f32 %v1340, %v1429
  %v1431 = vpop.f32.mrf.mxu0
  %v1432 = vadd.f32 %v1342, %v1431
  %1433 = vdwg.mxu0
  %1434 = vmatpush.bf16.msra.mxu0 0
  %1435 = vmatpush.bf16.msra.mxu0 0
  %1436 = vmatpush.bf16.msra.mxu0 0
  %1437 = vmatpush.bf16.msra.mxu0 0
  %1438 = vmatpush.bf16.msra.mxu0 0
  %1439 = vmatpush.bf16.msra.mxu0 0
  %1440 = vmatpush.bf16.msra.mxu0 %v1388
  %1441 = vmatpush.bf16.msra.mxu0 %v1386
  %1442 = vmatmul.bf16.gmra.mxu0 %v1394
  %v1443 = vpop.f32.mrf.mxu0
  %v1444 = vadd.f32 %v1354, %v1443
  %v1445 = vpop.f32.mrf.mxu0
  %v1446 = vadd.f32 %v1356, %v1445
  %1447 = vmatmul.bf16.gmra.mxu0 %v1397
  %v1448 = vpop.f32.mrf.mxu0
  %v1449 = vadd.f32 %v1359, %v1448
  %v1450 = vpop.f32.mrf.mxu0
  %v1451 = vadd.f32 %v1361, %v1450
  %1452 = vmatmul.bf16.gmra.mxu0 %v1400
  %v1453 = vpop.f32.mrf.mxu0
  %v1454 = vadd.f32 %v1364, %v1453
  %v1455 = vpop.f32.mrf.mxu0
  %v1456 = vadd.f32 %v1366, %v1455
  %1457 = vmatmul.bf16.gmra.mxu0 %v1403
  %v1458 = vpop.f32.mrf.mxu0
  %v1459 = vadd.f32 %v1369, %v1458
  %v1460 = vpop.f32.mrf.mxu0
  %v1461 = vadd.f32 %v1371, %v1460
  %1462 = vdwg.mxu0
  %v1463 = vld [vmem:[%s8] sm:$0x3]
  %v1465 = vperm.slane %v1463, 0
  %v1466 = vperm.slane %v1463, 1
  %v1469 = vadd.f32 %v1415, %v1465
  %v1470 = vadd.f32 %v1444, %v1466
  %v1471 = vadd.f32 %v1417, %v1465
  %v1472 = vadd.f32 %v1446, %v1466
  %v1473 = vadd.f32 %v1420, %v1465
  %v1474 = vadd.f32 %v1449, %v1466
  %v1475 = vadd.f32 %v1422, %v1465
  %v1476 = vadd.f32 %v1451, %v1466
  %v1477 = vadd.f32 %v1425, %v1465
  %v1478 = vadd.f32 %v1454, %v1466
  %v1479 = vadd.f32 %v1427, %v1465
  %v1480 = vadd.f32 %v1456, %v1466
  %v1481 = vadd.f32 %v1430, %v1465
  %v1482 = vadd.f32 %v1459, %v1466
  %v1483 = vadd.f32 %v1432, %v1465
  %v1484 = vadd.f32 %v1461, %v1466
  %1485 = vst [vmem:[#allocation2] sm:$0xff] %v1469
  %1486 = vst [vmem:[#allocation2 + $0x8] sm:$0xff] %v1470
  %1487 = vst [vmem:[#allocation2 + $0x10] sm:$0xff] %v1471
  %1488 = vst [vmem:[#allocation2 + $0x18] sm:$0xff] %v1472
  %1489 = vst [vmem:[#allocation2 + $0x20] sm:$0xff] %v1473
  %1490 = vst [vmem:[#allocation2 + $0x28] sm:$0xff] %v1474
  %1491 = vst [vmem:[#allocation2 + $0x30] sm:$0xff] %v1475
  %1492 = vst [vmem:[#allocation2 + $0x38] sm:$0xff] %v1476
  %1493 = vst [vmem:[#allocation2 + $0x40] sm:$0xff] %v1477
  %1494 = vst [vmem:[#allocation2 + $0x48] sm:$0xff] %v1478
  %1495 = vst [vmem:[#allocation2 + $0x50] sm:$0xff] %v1479
  %1496 = vst [vmem:[#allocation2 + $0x58] sm:$0xff] %v1480
  %1497 = vst [vmem:[#allocation2 + $0x60] sm:$0xff] %v1481
  %1498 = vst [vmem:[#allocation2 + $0x68] sm:$0xff] %v1482
  %1499 = vst [vmem:[#allocation2 + $0x70] sm:$0xff] %v1483
  %1500 = vst [vmem:[#allocation2 + $0x78] sm:$0xff] %v1484
  %v1501 = vld [vmem:[%s6] sm:$0xf]
  %v1502 = vld [vmem:[%s6 + $0x4] sm:$0xf]
  %v1503 = vld [vmem:[%s6 + $0x8] sm:$0xf]
  %v1504 = vld [vmem:[%s6 + $0xc] sm:$0xf]
  %v1505 = vld [vmem:[%s7] sm:$0xf]
  %v1506 = vld [vmem:[%s7 + $0x4] sm:$0xf]
  %v1507 = vld [vmem:[%s7 + $0x8] sm:$0xf]
  %v1508 = vld [vmem:[%s7 + $0xc] sm:$0xf]
  %v1513 = vunpack.c.l.b16 %v1501
  %v1514 = vunpack.c.l.b16 %v1502
  %v1515 = vunpack.c.l.b16 %v1503
  %v1516 = vunpack.c.l.b16 %v1504
  %v1517 = vpack.c.b16 %v1514, %v1513
  %v1518 = vpack.c.b16 %v1516, %v1515
  %1521 = vmatpush.bf16.msra.mxu0 0
  %1522 = vmatpush.bf16.msra.mxu0 0
  %1523 = vmatpush.bf16.msra.mxu0 0
  %1524 = vmatpush.bf16.msra.mxu0 0
  %1525 = vmatpush.bf16.msra.mxu0 0
  %1526 = vmatpush.bf16.msra.mxu0 0
  %1527 = vmatpush.bf16.msra.mxu0 %v1518
  %1528 = vmatpush.bf16.msra.mxu0 %v1517
  %1529 = vmatmul.bf16.gmra.mxu0 %v189
  %v1530 = vpop.f32.mrf.mxu0
  %v1531 = vadd.f32 0.0, %v1530
  %v1532 = vpop.f32.mrf.mxu0
  %1533 = vdwg.mxu0
  %v1538 = vunpack.c.l.b16 %v1505
  %v1539 = vunpack.c.l.b16 %v1506
  %v1540 = vunpack.c.l.b16 %v1507
  %v1541 = vunpack.c.l.b16 %v1508
  %v1542 = vpack.c.b16 %v1539, %v1538
  %v1543 = vpack.c.b16 %v1541, %v1540
  %1546 = vmatpush.bf16.msra.mxu0 0
  %1547 = vmatpush.bf16.msra.mxu0 0
  %1548 = vmatpush.bf16.msra.mxu0 0
  %1549 = vmatpush.bf16.msra.mxu0 0
  %1550 = vmatpush.bf16.msra.mxu0 0
  %1551 = vmatpush.bf16.msra.mxu0 0
  %1552 = vmatpush.bf16.msra.mxu0 %v1543
  %1553 = vmatpush.bf16.msra.mxu0 %v1542
  %1554 = vmatmul.bf16.gmra.mxu0 %v189
  %v1555 = vpop.f32.mrf.mxu0
  %v1556 = vadd.f32 0.0, %v1555
  %v1557 = vpop.f32.mrf.mxu0
  %1558 = vdwg.mxu0
  %v1559 = vld [vmem:[%s231] sm:$0xff]
  %v1560 = vadd.f32 %v1559, %v1531
  %v1561 = vld [vmem:[%s236 + $0x8] sm:$0xff]
  %v1562 = vadd.f32 %v1561, %v1556
  %v1563 = vxor.u32 %v1560, 2147483648
  %v1564 = vmul.f32 %v1563, 1.442695
  %v1565 = vpow.pop %v1564
  %v1566 = vadd.f32 %v1565, 1.0
  %v1567 = vrcp.pop %v1566
  %v1568 = vmul.f32 %v1566, %v1567
  %v1569 = vsub.f32 1.0, %v1568
  %v1570 = vmul.f32 %v1567, %v1569
  %v1571 = vadd.f32 %v1567, %v1570
  %vm1572 = vweird.f32 %v1566
  %vm1573 = vweird.f32 %v1567
  %vm1574 = vmor %vm1572, %vm1573
  %v1575 = vsel %vm1574, %v1567, %v1571
  %v1576 = vand.u32 2147483647, %v1566
  %vm1577 = vcmp.eq.f32.partialorder %v1576, 8.507059e+37
  %v1578 = vand.u32 %v1566, 2147483648
  %v1579 = vor.u32 1.1754944e-38, %v1578
  %v1580 = vsel %vm1577, %v1579, %v1575
  %v1581 = vmul.f32 1.0, %v1580
  %v1582 = vtanh.pop %v1560
  %v1583 = vmul.f32 %v1581, 0.0
  %1585 = vrot.lane.b32.xlu0 %v1582, 64
  %v1586 = vpop.permute.xlu0 %1585
  %v1588 = vmul.f32 %v1581, %v1586
  %1590 = vrot.lane.b32.xlu0 %v1588, 32
  %v1591 = vpop.permute.xlu0 %1590
  %v1593 = vadd.f32 %v1583, %v1591
  %v1594 = vtanh.pop %v1593
  %1596 = vrot.lane.b32.xlu0 %v1594, 64
  %v1597 = vpop.permute.xlu0 %1596
  %v1599 = vmul.f32 %v1581, %v1597
  %v1600 = vxor.u32 %v1562, 2147483648
  %v1601 = vmul.f32 %v1600, 1.442695
  %v1602 = vpow.pop %v1601
  %v1603 = vadd.f32 %v1602, 1.0
  %v1604 = vrcp.pop %v1603
  %v1605 = vmul.f32 %v1603, %v1604
  %v1606 = vsub.f32 1.0, %v1605
  %v1607 = vmul.f32 %v1604, %v1606
  %v1608 = vadd.f32 %v1604, %v1607
  %vm1609 = vweird.f32 %v1603
  %vm1610 = vweird.f32 %v1604
  %vm1611 = vmor %vm1609, %vm1610
  %v1612 = vsel %vm1611, %v1604, %v1608
  %v1613 = vand.u32 2147483647, %v1603
  %vm1614 = vcmp.eq.f32.partialorder %v1613, 8.507059e+37
  %v1615 = vand.u32 %v1603, 2147483648
  %v1616 = vor.u32 1.1754944e-38, %v1615
  %v1617 = vsel %vm1614, %v1616, %v1612
  %v1618 = vmul.f32 1.0, %v1617
  %v1619 = vtanh.pop %v1562
  %v1620 = vmul.f32 %v1618, 0.0
  %1622 = vrot.lane.b32.xlu0 %v1619, 64
  %v1623 = vpop.permute.xlu0 %1622
  %v1625 = vmul.f32 %v1618, %v1623
  %1627 = vrot.lane.b32.xlu0 %v1625, 32
  %v1628 = vpop.permute.xlu0 %1627
  %v1630 = vadd.f32 %v1620, %v1628
  %v1631 = vtanh.pop %v1630
  %1633 = vrot.lane.b32.xlu0 %v1631, 64
  %v1634 = vpop.permute.xlu0 %1633
  %v1636 = vmul.f32 %v1618, %v1634
  %1638 = vrot.lane.b32.xlu0 %v1599, 32
  %v1639 = vpop.permute.xlu0 %1638
  %1641 = vst.msk [vmem:[#allocation3] sm:$0xff] %vm187, %v1639
  %1643 = vrot.lane.b32.xlu0 %v1636, 32
  %v1644 = vpop.permute.xlu0 %1643
  %1646 = vst.msk [vmem:[%s322] sm:$0xff] %vm187, %v1644
  %v1647 = vpack.c.bf16 %v1599, %v1599
  %1649 = vrot.lane.b32.xlu0 %v1647, 32
  %v1650 = vpop.permute.xlu0 %1649
  %v1652 = vsel %vm187, %v1650, 0
  %1654 = vmatpush.bf16.msra.mxu0 0
  %1655 = vmatpush.bf16.msra.mxu0 0
  %1656 = vmatpush.bf16.msra.mxu0 0
  %1657 = vmatpush.bf16.msra.mxu0 0
  %1658 = vmatpush.bf16.msra.mxu0 0
  %1659 = vmatpush.bf16.msra.mxu0 0
  %1660 = vmatpush.bf16.msra.mxu0 %v1518
  %1661 = vmatpush.bf16.msra.mxu0 %v1517
  %1662 = vmatmul.bf16.gmra.mxu0 %v1652
  %v1663 = vpop.f32.mrf.mxu0
  %v1664 = vadd.f32 0.0, %v1663
  %v1665 = vpop.f32.mrf.mxu0
  %1666 = vdwg.mxu0
  %v1667 = vpack.c.bf16 %v1636, %v1636
  %1669 = vrot.lane.b32.xlu0 %v1667, 32
  %v1670 = vpop.permute.xlu0 %1669
  %v1672 = vsel %vm187, %v1670, 0
  %1674 = vmatpush.bf16.msra.mxu0 0
  %1675 = vmatpush.bf16.msra.mxu0 0
  %1676 = vmatpush.bf16.msra.mxu0 0
  %1677 = vmatpush.bf16.msra.mxu0 0
  %1678 = vmatpush.bf16.msra.mxu0 0
  %1679 = vmatpush.bf16.msra.mxu0 0
  %1680 = vmatpush.bf16.msra.mxu0 %v1543
  %1681 = vmatpush.bf16.msra.mxu0 %v1542
  %1682 = vmatmul.bf16.gmra.mxu0 %v1672
  %v1683 = vpop.f32.mrf.mxu0
  %v1684 = vadd.f32 0.0, %v1683
  %v1685 = vpop.f32.mrf.mxu0
  %1686 = vdwg.mxu0
  %v1687 = vld [vmem:[%s366] sm:$0xff]
  %v1688 = vadd.f32 %v1687, %v1664
  %v1689 = vld [vmem:[%s371 + $0x8] sm:$0xff]
  %v1690 = vadd.f32 %v1689, %v1684
  %v1691 = vxor.u32 %v1688, 2147483648
  %v1692 = vmul.f32 %v1691, 1.442695
  %v1693 = vpow.pop %v1692
  %v1694 = vadd.f32 %v1693, 1.0
  %v1695 = vrcp.pop %v1694
  %v1696 = vmul.f32 %v1694, %v1695
  %v1697 = vsub.f32 1.0, %v1696
  %v1698 = vmul.f32 %v1695, %v1697
  %v1699 = vadd.f32 %v1695, %v1698
  %vm1700 = vweird.f32 %v1694
  %vm1701 = vweird.f32 %v1695
  %vm1702 = vmor %vm1700, %vm1701
  %v1703 = vsel %vm1702, %v1695, %v1699
  %v1704 = vand.u32 2147483647, %v1694
  %vm1705 = vcmp.eq.f32.partialorder %v1704, 8.507059e+37
  %v1706 = vand.u32 %v1694, 2147483648
  %v1707 = vor.u32 1.1754944e-38, %v1706
  %v1708 = vsel %vm1705, %v1707, %v1703
  %v1709 = vmul.f32 1.0, %v1708
  %v1710 = vtanh.pop %v1688
  %v1711 = vmul.f32 %v1709, %v1593
  %1713 = vrot.lane.b32.xlu0 %v1710, 64
  %v1714 = vpop.permute.xlu0 %1713
  %v1716 = vmul.f32 %v1709, %v1714
  %1718 = vrot.lane.b32.xlu0 %v1716, 32
  %v1719 = vpop.permute.xlu0 %1718
  %v1721 = vadd.f32 %v1711, %v1719
  %v1722 = vtanh.pop %v1721
  %1724 = vrot.lane.b32.xlu0 %v1722, 64
  %v1725 = vpop.permute.xlu0 %1724
  %v1727 = vmul.f32 %v1709, %v1725
  %v1728 = vxor.u32 %v1690, 2147483648
  %v1729 = vmul.f32 %v1728, 1.442695
  %v1730 = vpow.pop %v1729
  %v1731 = vadd.f32 %v1730, 1.0
  %v1732 = vrcp.pop %v1731
  %v1733 = vmul.f32 %v1731, %v1732
  %v1734 = vsub.f32 1.0, %v1733
  %v1735 = vmul.f32 %v1732, %v1734
  %v1736 = vadd.f32 %v1732, %v1735
  %vm1737 = vweird.f32 %v1731
  %vm1738 = vweird.f32 %v1732
  %vm1739 = vmor %vm1737, %vm1738
  %v1740 = vsel %vm1739, %v1732, %v1736
  %v1741 = vand.u32 2147483647, %v1731
  %vm1742 = vcmp.eq.f32.partialorder %v1741, 8.507059e+37
  %v1743 = vand.u32 %v1731, 2147483648
  %v1744 = vor.u32 1.1754944e-38, %v1743
  %v1745 = vsel %vm1742, %v1744, %v1740
  %v1746 = vmul.f32 1.0, %v1745
  %v1747 = vtanh.pop %v1690
  %v1748 = vmul.f32 %v1746, %v1630
  %1750 = vrot.lane.b32.xlu0 %v1747, 64
  %v1751 = vpop.permute.xlu0 %1750
  %v1753 = vmul.f32 %v1746, %v1751
  %1755 = vrot.lane.b32.xlu0 %v1753, 32
  %v1756 = vpop.permute.xlu0 %1755
  %v1758 = vadd.f32 %v1748, %v1756
  %v1759 = vtanh.pop %v1758
  %1761 = vrot.lane.b32.xlu0 %v1759, 64
  %v1762 = vpop.permute.xlu0 %1761
  %v1764 = vmul.f32 %v1746, %v1762
  %1766 = vrot.lane.b32.xlu0 %v1727, 32
  %v1767 = vpop.permute.xlu0 %1766
  %1769 = vst.msk [vmem:[%s452] sm:$0xff] %vm187, %v1767
  %1771 = vrot.lane.b32.xlu0 %v1764, 32
  %v1772 = vpop.permute.xlu0 %1771
  %1774 = vst.msk [vmem:[%s458] sm:$0xff] %vm187, %v1772
  %v1775 = vpack.c.bf16 %v1727, %v1727
  %1777 = vrot.lane.b32.xlu0 %v1775, 32
  %v1778 = vpop.permute.xlu0 %1777
  %v1780 = vsel %vm187, %v1778, 0
  %1782 = vmatpush.bf16.msra.mxu0 0
  %1783 = vmatpush.bf16.msra.mxu0 0
  %1784 = vmatpush.bf16.msra.mxu0 0
  %1785 = vmatpush.bf16.msra.mxu0 0
  %1786 = vmatpush.bf16.msra.mxu0 0
  %1787 = vmatpush.bf16.msra.mxu0 0
  %1788 = vmatpush.bf16.msra.mxu0 %v1518
  %1789 = vmatpush.bf16.msra.mxu0 %v1517
  %1790 = vmatmul.bf16.gmra.mxu0 %v1780
  %v1791 = vpop.f32.mrf.mxu0
  %v1792 = vadd.f32 0.0, %v1791
  %v1793 = vpop.f32.mrf.mxu0
  %1794 = vdwg.mxu0
  %v1795 = vpack.c.bf16 %v1764, %v1764
  %1797 = vrot.lane.b32.xlu0 %v1795, 32
  %v1798 = vpop.permute.xlu0 %1797
  %v1800 = vsel %vm187, %v1798, 0
  %1802 = vmatpush.bf16.msra.mxu0 0
  %1803 = vmatpush.bf16.msra.mxu0 0
  %1804 = vmatpush.bf16.msra.mxu0 0
  %1805 = vmatpush.bf16.msra.mxu0 0
  %1806 = vmatpush.bf16.msra.mxu0 0
  %1807 = vmatpush.bf16.msra.mxu0 0
  %1808 = vmatpush.bf16.msra.mxu0 %v1543
  %1809 = vmatpush.bf16.msra.mxu0 %v1542
  %1810 = vmatmul.bf16.gmra.mxu0 %v1800
  %v1811 = vpop.f32.mrf.mxu0
  %v1812 = vadd.f32 0.0, %v1811
  %v1813 = vpop.f32.mrf.mxu0
  %1814 = vdwg.mxu0
  %v1815 = vld [vmem:[%s502] sm:$0xff]
  %v1816 = vadd.f32 %v1815, %v1792
  %v1817 = vld [vmem:[%s507 + $0x8] sm:$0xff]
  %v1818 = vadd.f32 %v1817, %v1812
  %v1819 = vxor.u32 %v1816, 2147483648
  %v1820 = vmul.f32 %v1819, 1.442695
  %v1821 = vpow.pop %v1820
  %v1822 = vadd.f32 %v1821, 1.0
  %v1823 = vrcp.pop %v1822
  %v1824 = vmul.f32 %v1822, %v1823
  %v1825 = vsub.f32 1.0, %v1824
  %v1826 = vmul.f32 %v1823, %v1825
  %v1827 = vadd.f32 %v1823, %v1826
  %vm1828 = vweird.f32 %v1822
  %vm1829 = vweird.f32 %v1823
  %vm1830 = vmor %vm1828, %vm1829
  %v1831 = vsel %vm1830, %v1823, %v1827
  %v1832 = vand.u32 2147483647, %v1822
  %vm1833 = vcmp.eq.f32.partialorder %v1832, 8.507059e+37
  %v1834 = vand.u32 %v1822, 2147483648
  %v1835 = vor.u32 1.1754944e-38, %v1834
  %v1836 = vsel %vm1833, %v1835, %v1831
  %v1837 = vmul.f32 1.0, %v1836
  %v1838 = vtanh.pop %v1816
  %v1839 = vmul.f32 %v1837, %v1721
  %1841 = vrot.lane.b32.xlu0 %v1838, 64
  %v1842 = vpop.permute.xlu0 %1841
  %v1844 = vmul.f32 %v1837, %v1842
  %1846 = vrot.lane.b32.xlu0 %v1844, 32
  %v1847 = vpop.permute.xlu0 %1846
  %v1849 = vadd.f32 %v1839, %v1847
  %v1850 = vtanh.pop %v1849
  %1852 = vrot.lane.b32.xlu0 %v1850, 64
  %v1853 = vpop.permute.xlu0 %1852
  %v1855 = vmul.f32 %v1837, %v1853
  %v1856 = vxor.u32 %v1818, 2147483648
  %v1857 = vmul.f32 %v1856, 1.442695
  %v1858 = vpow.pop %v1857
  %v1859 = vadd.f32 %v1858, 1.0
  %v1860 = vrcp.pop %v1859
  %v1861 = vmul.f32 %v1859, %v1860
  %v1862 = vsub.f32 1.0, %v1861
  %v1863 = vmul.f32 %v1860, %v1862
  %v1864 = vadd.f32 %v1860, %v1863
  %vm1865 = vweird.f32 %v1859
  %vm1866 = vweird.f32 %v1860
  %vm1867 = vmor %vm1865, %vm1866
  %v1868 = vsel %vm1867, %v1860, %v1864
  %v1869 = vand.u32 2147483647, %v1859
  %vm1870 = vcmp.eq.f32.partialorder %v1869, 8.507059e+37
  %v1871 = vand.u32 %v1859, 2147483648
  %v1872 = vor.u32 1.1754944e-38, %v1871
  %v1873 = vsel %vm1870, %v1872, %v1868
  %v1874 = vmul.f32 1.0, %v1873
  %v1875 = vtanh.pop %v1818
  %v1876 = vmul.f32 %v1874, %v1758
  %1878 = vrot.lane.b32.xlu0 %v1875, 64
  %v1879 = vpop.permute.xlu0 %1878
  %v1881 = vmul.f32 %v1874, %v1879
  %1883 = vrot.lane.b32.xlu0 %v1881, 32
  %v1884 = vpop.permute.xlu0 %1883
  %v1886 = vadd.f32 %v1876, %v1884
  %v1887 = vtanh.pop %v1886
  %1889 = vrot.lane.b32.xlu0 %v1887, 64
  %v1890 = vpop.permute.xlu0 %1889
  %v1892 = vmul.f32 %v1874, %v1890
  %1894 = vrot.lane.b32.xlu0 %v1855, 32
  %v1895 = vpop.permute.xlu0 %1894
  %1897 = vst.msk [vmem:[%s588] sm:$0xff] %vm187, %v1895
  %1899 = vrot.lane.b32.xlu0 %v1892, 32
  %v1900 = vpop.permute.xlu0 %1899
  %1902 = vst.msk [vmem:[%s594] sm:$0xff] %vm187, %v1900
  %v1903 = vpack.c.bf16 %v1855, %v1855
  %1905 = vrot.lane.b32.xlu0 %v1903, 32
  %v1906 = vpop.permute.xlu0 %1905
  %v1908 = vsel %vm187, %v1906, 0
  %1910 = vmatpush.bf16.msra.mxu0 0
  %1911 = vmatpush.bf16.msra.mxu0 0
  %1912 = vmatpush.bf16.msra.mxu0 0
  %1913 = vmatpush.bf16.msra.mxu0 0
  %1914 = vmatpush.bf16.msra.mxu0 0
  %1915 = vmatpush.bf16.msra.mxu0 0
  %1916 = vmatpush.bf16.msra.mxu0 %v1518
  %1917 = vmatpush.bf16.msra.mxu0 %v1517
  %1918 = vmatmul.bf16.gmra.mxu0 %v1908
  %v1919 = vpop.f32.mrf.mxu0
  %v1920 = vadd.f32 0.0, %v1919
  %v1921 = vpop.f32.mrf.mxu0
  %1922 = vdwg.mxu0
  %v1923 = vpack.c.bf16 %v1892, %v1892
  %1925 = vrot.lane.b32.xlu0 %v1923, 32
  %v1926 = vpop.permute.xlu0 %1925
  %v1928 = vsel %vm187, %v1926, 0
  %1930 = vmatpush.bf16.msra.mxu0 0
  %1931 = vmatpush.bf16.msra.mxu0 0
  %1932 = vmatpush.bf16.msra.mxu0 0
  %1933 = vmatpush.bf16.msra.mxu0 0
  %1934 = vmatpush.bf16.msra.mxu0 0
  %1935 = vmatpush.bf16.msra.mxu0 0
  %1936 = vmatpush.bf16.msra.mxu0 %v1543
  %1937 = vmatpush.bf16.msra.mxu0 %v1542
  %1938 = vmatmul.bf16.gmra.mxu0 %v1928
  %v1939 = vpop.f32.mrf.mxu0
  %v1940 = vadd.f32 0.0, %v1939
  %v1941 = vpop.f32.mrf.mxu0
  %1942 = vdwg.mxu0
  %v1943 = vld [vmem:[%s638] sm:$0xff]
  %v1944 = vadd.f32 %v1943, %v1920
  %v1945 = vld [vmem:[%s643 + $0x8] sm:$0xff]
  %v1946 = vadd.f32 %v1945, %v1940
  %v1947 = vxor.u32 %v1944, 2147483648
  %v1948 = vmul.f32 %v1947, 1.442695
  %v1949 = vpow.pop %v1948
  %v1950 = vadd.f32 %v1949, 1.0
  %v1951 = vrcp.pop %v1950
  %v1952 = vmul.f32 %v1950, %v1951
  %v1953 = vsub.f32 1.0, %v1952
  %v1954 = vmul.f32 %v1951, %v1953
  %v1955 = vadd.f32 %v1951, %v1954
  %vm1956 = vweird.f32 %v1950
  %vm1957 = vweird.f32 %v1951
  %vm1958 = vmor %vm1956, %vm1957
  %v1959 = vsel %vm1958, %v1951, %v1955
  %v1960 = vand.u32 2147483647, %v1950
  %vm1961 = vcmp.eq.f32.partialorder %v1960, 8.507059e+37
  %v1962 = vand.u32 %v1950, 2147483648
  %v1963 = vor.u32 1.1754944e-38, %v1962
  %v1964 = vsel %vm1961, %v1963, %v1959
  %v1965 = vmul.f32 1.0, %v1964
  %v1966 = vtanh.pop %v1944
  %v1967 = vmul.f32 %v1965, %v1849
  %1969 = vrot.lane.b32.xlu0 %v1966, 64
  %v1970 = vpop.permute.xlu0 %1969
  %v1972 = vmul.f32 %v1965, %v1970
  %1974 = vrot.lane.b32.xlu0 %v1972, 32
  %v1975 = vpop.permute.xlu0 %1974
  %v1977 = vadd.f32 %v1967, %v1975
  %v1978 = vtanh.pop %v1977
  %1980 = vrot.lane.b32.xlu0 %v1978, 64
  %v1981 = vpop.permute.xlu0 %1980
  %v1983 = vmul.f32 %v1965, %v1981
  %v1984 = vxor.u32 %v1946, 2147483648
  %v1985 = vmul.f32 %v1984, 1.442695
  %v1986 = vpow.pop %v1985
  %v1987 = vadd.f32 %v1986, 1.0
  %v1988 = vrcp.pop %v1987
  %v1989 = vmul.f32 %v1987, %v1988
  %v1990 = vsub.f32 1.0, %v1989
  %v1991 = vmul.f32 %v1988, %v1990
  %v1992 = vadd.f32 %v1988, %v1991
  %vm1993 = vweird.f32 %v1987
  %vm1994 = vweird.f32 %v1988
  %vm1995 = vmor %vm1993, %vm1994
  %v1996 = vsel %vm1995, %v1988, %v1992
  %v1997 = vand.u32 2147483647, %v1987
  %vm1998 = vcmp.eq.f32.partialorder %v1997, 8.507059e+37
  %v1999 = vand.u32 %v1987, 2147483648
  %v2000 = vor.u32 1.1754944e-38, %v1999
  %v2001 = vsel %vm1998, %v2000, %v1996
  %v2002 = vmul.f32 1.0, %v2001
  %v2003 = vtanh.pop %v1946
  %v2004 = vmul.f32 %v2002, %v1886
  %2006 = vrot.lane.b32.xlu0 %v2003, 64
  %v2007 = vpop.permute.xlu0 %2006
  %v2009 = vmul.f32 %v2002, %v2007
  %2011 = vrot.lane.b32.xlu0 %v2009, 32
  %v2012 = vpop.permute.xlu0 %2011
  %v2014 = vadd.f32 %v2004, %v2012
  %v2015 = vtanh.pop %v2014
  %2017 = vrot.lane.b32.xlu0 %v2015, 64
  %v2018 = vpop.permute.xlu0 %2017
  %v2020 = vmul.f32 %v2002, %v2018
  %2022 = vrot.lane.b32.xlu0 %v1983, 32
  %v2023 = vpop.permute.xlu0 %2022
  %2025 = vst.msk [vmem:[%s724] sm:$0xff] %vm187, %v2023
  %2027 = vrot.lane.b32.xlu0 %v2020, 32
  %v2028 = vpop.permute.xlu0 %2027
  %2030 = vst.msk [vmem:[%s730] sm:$0xff] %vm187, %v2028
  %v2031 = vpack.c.bf16 %v1983, %v1983
  %2033 = vrot.lane.b32.xlu0 %v2031, 32
  %v2034 = vpop.permute.xlu0 %2033
  %v2036 = vsel %vm187, %v2034, 0
  %2038 = vmatpush.bf16.msra.mxu0 0
  %2039 = vmatpush.bf16.msra.mxu0 0
  %2040 = vmatpush.bf16.msra.mxu0 0
  %2041 = vmatpush.bf16.msra.mxu0 0
  %2042 = vmatpush.bf16.msra.mxu0 0
  %2043 = vmatpush.bf16.msra.mxu0 0
  %2044 = vmatpush.bf16.msra.mxu0 %v1518
  %2045 = vmatpush.bf16.msra.mxu0 %v1517
  %2046 = vmatmul.bf16.gmra.mxu0 %v2036
  %v2047 = vpop.f32.mrf.mxu0
  %v2048 = vadd.f32 0.0, %v2047
  %v2049 = vpop.f32.mrf.mxu0
  %2050 = vdwg.mxu0
  %v2051 = vpack.c.bf16 %v2020, %v2020
  %2053 = vrot.lane.b32.xlu0 %v2051, 32
  %v2054 = vpop.permute.xlu0 %2053
  %v2056 = vsel %vm187, %v2054, 0
  %2058 = vmatpush.bf16.msra.mxu0 0
  %2059 = vmatpush.bf16.msra.mxu0 0
  %2060 = vmatpush.bf16.msra.mxu0 0
  %2061 = vmatpush.bf16.msra.mxu0 0
  %2062 = vmatpush.bf16.msra.mxu0 0
  %2063 = vmatpush.bf16.msra.mxu0 0
  %2064 = vmatpush.bf16.msra.mxu0 %v1543
  %2065 = vmatpush.bf16.msra.mxu0 %v1542
  %2066 = vmatmul.bf16.gmra.mxu0 %v2056
  %v2067 = vpop.f32.mrf.mxu0
  %v2068 = vadd.f32 0.0, %v2067
  %v2069 = vpop.f32.mrf.mxu0
  %2070 = vdwg.mxu0
  %v2071 = vld [vmem:[%s643] sm:$0xff]
  %v2072 = vadd.f32 %v2071, %v2048
  %v2073 = vld [vmem:[%s638 + $0x8] sm:$0xff]
  %v2074 = vadd.f32 %v2073, %v2068
  %v2075 = vxor.u32 %v2072, 2147483648
  %v2076 = vmul.f32 %v2075, 1.442695
  %v2077 = vpow.pop %v2076
  %v2078 = vadd.f32 %v2077, 1.0
  %v2079 = vrcp.pop %v2078
  %v2080 = vmul.f32 %v2078, %v2079
  %v2081 = vsub.f32 1.0, %v2080
  %v2082 = vmul.f32 %v2079, %v2081
  %v2083 = vadd.f32 %v2079, %v2082
  %vm2084 = vweird.f32 %v2078
  %vm2085 = vweird.f32 %v2079
  %vm2086 = vmor %vm2084, %vm2085
  %v2087 = vsel %vm2086, %v2079, %v2083
  %v2088 = vand.u32 2147483647, %v2078
  %vm2089 = vcmp.eq.f32.partialorder %v2088, 8.507059e+37
  %v2090 = vand.u32 %v2078, 2147483648
  %v2091 = vor.u32 1.1754944e-38, %v2090
  %v2092 = vsel %vm2089, %v2091, %v2087
  %v2093 = vmul.f32 1.0, %v2092
  %v2094 = vtanh.pop %v2072
  %v2095 = vmul.f32 %v2093, %v1977
  %2097 = vrot.lane.b32.xlu0 %v2094, 64
  %v2098 = vpop.permute.xlu0 %2097
  %v2100 = vmul.f32 %v2093, %v2098
  %2102 = vrot.lane.b32.xlu0 %v2100, 32
  %v2103 = vpop.permute.xlu0 %2102
  %v2105 = vadd.f32 %v2095, %v2103
  %v2106 = vtanh.pop %v2105
  %2108 = vrot.lane.b32.xlu0 %v2106, 64
  %v2109 = vpop.permute.xlu0 %2108
  %v2111 = vmul.f32 %v2093, %v2109
  %v2112 = vxor.u32 %v2074, 2147483648
  %v2113 = vmul.f32 %v2112, 1.442695
  %v2114 = vpow.pop %v2113
  %v2115 = vadd.f32 %v2114, 1.0
  %v2116 = vrcp.pop %v2115
  %v2117 = vmul.f32 %v2115, %v2116
  %v2118 = vsub.f32 1.0, %v2117
  %v2119 = vmul.f32 %v2116, %v2118
  %v2120 = vadd.f32 %v2116, %v2119
  %vm2121 = vweird.f32 %v2115
  %vm2122 = vweird.f32 %v2116
  %vm2123 = vmor %vm2121, %vm2122
  %v2124 = vsel %vm2123, %v2116, %v2120
  %v2125 = vand.u32 2147483647, %v2115
  %vm2126 = vcmp.eq.f32.partialorder %v2125, 8.507059e+37
  %v2127 = vand.u32 %v2115, 2147483648
  %v2128 = vor.u32 1.1754944e-38, %v2127
  %v2129 = vsel %vm2126, %v2128, %v2124
  %v2130 = vmul.f32 1.0, %v2129
  %v2131 = vtanh.pop %v2074
  %v2132 = vmul.f32 %v2130, %v2014
  %2134 = vrot.lane.b32.xlu0 %v2131, 64
  %v2135 = vpop.permute.xlu0 %2134
  %v2137 = vmul.f32 %v2130, %v2135
  %2139 = vrot.lane.b32.xlu0 %v2137, 32
  %v2140 = vpop.permute.xlu0 %2139
  %v2142 = vadd.f32 %v2132, %v2140
  %v2143 = vtanh.pop %v2142
  %2145 = vrot.lane.b32.xlu0 %v2143, 64
  %v2146 = vpop.permute.xlu0 %2145
  %v2148 = vmul.f32 %v2130, %v2146
  %2150 = vrot.lane.b32.xlu0 %v2111, 32
  %v2151 = vpop.permute.xlu0 %2150
  %2153 = vst.msk [vmem:[%s854] sm:$0xff] %vm187, %v2151
  %2155 = vrot.lane.b32.xlu0 %v2148, 32
  %v2156 = vpop.permute.xlu0 %2155
  %2158 = vst.msk [vmem:[%s860] sm:$0xff] %vm187, %v2156
  %v2159 = vpack.c.bf16 %v2111, %v2111
  %2161 = vrot.lane.b32.xlu0 %v2159, 32
  %v2162 = vpop.permute.xlu0 %2161
  %v2164 = vsel %vm187, %v2162, 0
  %2166 = vmatpush.bf16.msra.mxu0 0
  %2167 = vmatpush.bf16.msra.mxu0 0
  %2168 = vmatpush.bf16.msra.mxu0 0
  %2169 = vmatpush.bf16.msra.mxu0 0
  %2170 = vmatpush.bf16.msra.mxu0 0
  %2171 = vmatpush.bf16.msra.mxu0 0
  %2172 = vmatpush.bf16.msra.mxu0 %v1518
  %2173 = vmatpush.bf16.msra.mxu0 %v1517
  %2174 = vmatmul.bf16.gmra.mxu0 %v2164
  %v2175 = vpop.f32.mrf.mxu0
  %v2176 = vadd.f32 0.0, %v2175
  %v2177 = vpop.f32.mrf.mxu0
  %2178 = vdwg.mxu0
  %v2179 = vpack.c.bf16 %v2148, %v2148
  %2181 = vrot.lane.b32.xlu0 %v2179, 32
  %v2182 = vpop.permute.xlu0 %2181
  %v2184 = vsel %vm187, %v2182, 0
  %2186 = vmatpush.bf16.msra.mxu0 0
  %2187 = vmatpush.bf16.msra.mxu0 0
  %2188 = vmatpush.bf16.msra.mxu0 0
  %2189 = vmatpush.bf16.msra.mxu0 0
  %2190 = vmatpush.bf16.msra.mxu0 0
  %2191 = vmatpush.bf16.msra.mxu0 0
  %2192 = vmatpush.bf16.msra.mxu0 %v1543
  %2193 = vmatpush.bf16.msra.mxu0 %v1542
  %2194 = vmatmul.bf16.gmra.mxu0 %v2184
  %v2195 = vpop.f32.mrf.mxu0
  %v2196 = vadd.f32 0.0, %v2195
  %v2197 = vpop.f32.mrf.mxu0
  %2198 = vdwg.mxu0
  %v2199 = vld [vmem:[%s507] sm:$0xff]
  %v2200 = vadd.f32 %v2199, %v2176
  %v2201 = vld [vmem:[%s502 + $0x8] sm:$0xff]
  %v2202 = vadd.f32 %v2201, %v2196
  %v2203 = vxor.u32 %v2200, 2147483648
  %v2204 = vmul.f32 %v2203, 1.442695
  %v2205 = vpow.pop %v2204
  %v2206 = vadd.f32 %v2205, 1.0
  %v2207 = vrcp.pop %v2206
  %v2208 = vmul.f32 %v2206, %v2207
  %v2209 = vsub.f32 1.0, %v2208
  %v2210 = vmul.f32 %v2207, %v2209
  %v2211 = vadd.f32 %v2207, %v2210
  %vm2212 = vweird.f32 %v2206
  %vm2213 = vweird.f32 %v2207
  %vm2214 = vmor %vm2212, %vm2213
  %v2215 = vsel %vm2214, %v2207, %v2211
  %v2216 = vand.u32 2147483647, %v2206
  %vm2217 = vcmp.eq.f32.partialorder %v2216, 8.507059e+37
  %v2218 = vand.u32 %v2206, 2147483648
  %v2219 = vor.u32 1.1754944e-38, %v2218
  %v2220 = vsel %vm2217, %v2219, %v2215
  %v2221 = vmul.f32 1.0, %v2220
  %v2222 = vtanh.pop %v2200
  %v2223 = vmul.f32 %v2221, %v2105
  %2225 = vrot.lane.b32.xlu0 %v2222, 64
  %v2226 = vpop.permute.xlu0 %2225
  %v2228 = vmul.f32 %v2221, %v2226
  %2230 = vrot.lane.b32.xlu0 %v2228, 32
  %v2231 = vpop.permute.xlu0 %2230
  %v2233 = vadd.f32 %v2223, %v2231
  %v2234 = vtanh.pop %v2233
  %2236 = vrot.lane.b32.xlu0 %v2234, 64
  %v2237 = vpop.permute.xlu0 %2236
  %v2239 = vmul.f32 %v2221, %v2237
  %v2240 = vxor.u32 %v2202, 2147483648
  %v2241 = vmul.f32 %v2240, 1.442695
  %v2242 = vpow.pop %v2241
  %v2243 = vadd.f32 %v2242, 1.0
  %v2244 = vrcp.pop %v2243
  %v2245 = vmul.f32 %v2243, %v2244
  %v2246 = vsub.f32 1.0, %v2245
  %v2247 = vmul.f32 %v2244, %v2246
  %v2248 = vadd.f32 %v2244, %v2247
  %vm2249 = vweird.f32 %v2243
  %vm2250 = vweird.f32 %v2244
  %vm2251 = vmor %vm2249, %vm2250
  %v2252 = vsel %vm2251, %v2244, %v2248
  %v2253 = vand.u32 2147483647, %v2243
  %vm2254 = vcmp.eq.f32.partialorder %v2253, 8.507059e+37
  %v2255 = vand.u32 %v2243, 2147483648
  %v2256 = vor.u32 1.1754944e-38, %v2255
  %v2257 = vsel %vm2254, %v2256, %v2252
  %v2258 = vmul.f32 1.0, %v2257
  %v2259 = vtanh.pop %v2202
  %v2260 = vmul.f32 %v2258, %v2142
  %2262 = vrot.lane.b32.xlu0 %v2259, 64
  %v2263 = vpop.permute.xlu0 %2262
  %v2265 = vmul.f32 %v2258, %v2263
  %2267 = vrot.lane.b32.xlu0 %v2265, 32
  %v2268 = vpop.permute.xlu0 %2267
  %v2270 = vadd.f32 %v2260, %v2268
  %v2271 = vtanh.pop %v2270
  %2273 = vrot.lane.b32.xlu0 %v2271, 64
  %v2274 = vpop.permute.xlu0 %2273
  %v2276 = vmul.f32 %v2258, %v2274
  %2278 = vrot.lane.b32.xlu0 %v2239, 32
  %v2279 = vpop.permute.xlu0 %2278
  %2281 = vst.msk [vmem:[%s984] sm:$0xff] %vm187, %v2279
  %2283 = vrot.lane.b32.xlu0 %v2276, 32
  %v2284 = vpop.permute.xlu0 %2283
  %2286 = vst.msk [vmem:[%s990] sm:$0xff] %vm187, %v2284
  %v2287 = vpack.c.bf16 %v2239, %v2239
  %2289 = vrot.lane.b32.xlu0 %v2287, 32
  %v2290 = vpop.permute.xlu0 %2289
  %v2292 = vsel %vm187, %v2290, 0
  %2294 = vmatpush.bf16.msra.mxu0 0
  %2295 = vmatpush.bf16.msra.mxu0 0
  %2296 = vmatpush.bf16.msra.mxu0 0
  %2297 = vmatpush.bf16.msra.mxu0 0
  %2298 = vmatpush.bf16.msra.mxu0 0
  %2299 = vmatpush.bf16.msra.mxu0 0
  %2300 = vmatpush.bf16.msra.mxu0 %v1518
  %2301 = vmatpush.bf16.msra.mxu0 %v1517
  %2302 = vmatmul.bf16.gmra.mxu0 %v2292
  %v2303 = vpop.f32.mrf.mxu0
  %v2304 = vadd.f32 0.0, %v2303
  %v2305 = vpop.f32.mrf.mxu0
  %2306 = vdwg.mxu0
  %v2307 = vpack.c.bf16 %v2276, %v2276
  %2309 = vrot.lane.b32.xlu0 %v2307, 32
  %v2310 = vpop.permute.xlu0 %2309
  %v2312 = vsel %vm187, %v2310, 0
  %2314 = vmatpush.bf16.msra.mxu0 0
  %2315 = vmatpush.bf16.msra.mxu0 0
  %2316 = vmatpush.bf16.msra.mxu0 0
  %2317 = vmatpush.bf16.msra.mxu0 0
  %2318 = vmatpush.bf16.msra.mxu0 0
  %2319 = vmatpush.bf16.msra.mxu0 0
  %2320 = vmatpush.bf16.msra.mxu0 %v1543
  %2321 = vmatpush.bf16.msra.mxu0 %v1542
  %2322 = vmatmul.bf16.gmra.mxu0 %v2312
  %v2323 = vpop.f32.mrf.mxu0
  %v2324 = vadd.f32 0.0, %v2323
  %v2325 = vpop.f32.mrf.mxu0
  %2326 = vdwg.mxu0
  %v2327 = vld [vmem:[%s371] sm:$0xff]
  %v2328 = vadd.f32 %v2327, %v2304
  %v2329 = vld [vmem:[%s366 + $0x8] sm:$0xff]
  %v2330 = vadd.f32 %v2329, %v2324
  %v2331 = vxor.u32 %v2328, 2147483648
  %v2332 = vmul.f32 %v2331, 1.442695
  %v2333 = vpow.pop %v2332
  %v2334 = vadd.f32 %v2333, 1.0
  %v2335 = vrcp.pop %v2334
  %v2336 = vmul.f32 %v2334, %v2335
  %v2337 = vsub.f32 1.0, %v2336
  %v2338 = vmul.f32 %v2335, %v2337
  %v2339 = vadd.f32 %v2335, %v2338
  %vm2340 = vweird.f32 %v2334
  %vm2341 = vweird.f32 %v2335
  %vm2342 = vmor %vm2340, %vm2341
  %v2343 = vsel %vm2342, %v2335, %v2339
  %v2344 = vand.u32 2147483647, %v2334
  %vm2345 = vcmp.eq.f32.partialorder %v2344, 8.507059e+37
  %v2346 = vand.u32 %v2334, 2147483648
  %v2347 = vor.u32 1.1754944e-38, %v2346
  %v2348 = vsel %vm2345, %v2347, %v2343
  %v2349 = vmul.f32 1.0, %v2348
  %v2350 = vtanh.pop %v2328
  %v2351 = vmul.f32 %v2349, %v2233
  %2353 = vrot.lane.b32.xlu0 %v2350, 64
  %v2354 = vpop.permute.xlu0 %2353
  %v2356 = vmul.f32 %v2349, %v2354
  %2358 = vrot.lane.b32.xlu0 %v2356, 32
  %v2359 = vpop.permute.xlu0 %2358
  %v2361 = vadd.f32 %v2351, %v2359
  %v2362 = vtanh.pop %v2361
  %2364 = vrot.lane.b32.xlu0 %v2362, 64
  %v2365 = vpop.permute.xlu0 %2364
  %v2367 = vmul.f32 %v2349, %v2365
  %v2368 = vxor.u32 %v2330, 2147483648
  %v2369 = vmul.f32 %v2368, 1.442695
  %v2370 = vpow.pop %v2369
  %v2371 = vadd.f32 %v2370, 1.0
  %v2372 = vrcp.pop %v2371
  %v2373 = vmul.f32 %v2371, %v2372
  %v2374 = vsub.f32 1.0, %v2373
  %v2375 = vmul.f32 %v2372, %v2374
  %v2376 = vadd.f32 %v2372, %v2375
  %vm2377 = vweird.f32 %v2371
  %vm2378 = vweird.f32 %v2372
  %vm2379 = vmor %vm2377, %vm2378
  %v2380 = vsel %vm2379, %v2372, %v2376
  %v2381 = vand.u32 2147483647, %v2371
  %vm2382 = vcmp.eq.f32.partialorder %v2381, 8.507059e+37
  %v2383 = vand.u32 %v2371, 2147483648
  %v2384 = vor.u32 1.1754944e-38, %v2383
  %v2385 = vsel %vm2382, %v2384, %v2380
  %v2386 = vmul.f32 1.0, %v2385
  %v2387 = vtanh.pop %v2330
  %v2388 = vmul.f32 %v2386, %v2270
  %2390 = vrot.lane.b32.xlu0 %v2387, 64
  %v2391 = vpop.permute.xlu0 %2390
  %v2393 = vmul.f32 %v2386, %v2391
  %2395 = vrot.lane.b32.xlu0 %v2393, 32
  %v2396 = vpop.permute.xlu0 %2395
  %v2398 = vadd.f32 %v2388, %v2396
  %v2399 = vtanh.pop %v2398
  %2401 = vrot.lane.b32.xlu0 %v2399, 64
  %v2402 = vpop.permute.xlu0 %2401
  %v2404 = vmul.f32 %v2386, %v2402
  %2406 = vrot.lane.b32.xlu0 %v2367, 32
  %v2407 = vpop.permute.xlu0 %2406
  %2409 = vst.msk [vmem:[%s1114] sm:$0xff] %vm187, %v2407
  %2411 = vrot.lane.b32.xlu0 %v2404, 32
  %v2412 = vpop.permute.xlu0 %2411
  %2414 = vst.msk [vmem:[%s1120] sm:$0xff] %vm187, %v2412
  %v2415 = vpack.c.bf16 %v2367, %v2367
  %2417 = vrot.lane.b32.xlu0 %v2415, 32
  %v2418 = vpop.permute.xlu0 %2417
  %v2420 = vsel %vm187, %v2418, 0
  %2422 = vmatpush.bf16.msra.mxu0 0
  %2423 = vmatpush.bf16.msra.mxu0 0
  %2424 = vmatpush.bf16.msra.mxu0 0
  %2425 = vmatpush.bf16.msra.mxu0 0
  %2426 = vmatpush.bf16.msra.mxu0 0
  %2427 = vmatpush.bf16.msra.mxu0 0
  %2428 = vmatpush.bf16.msra.mxu0 %v1518
  %2429 = vmatpush.bf16.msra.mxu0 %v1517
  %2430 = vmatmul.bf16.gmra.mxu0 %v2420
  %v2431 = vpop.f32.mrf.mxu0
  %v2432 = vadd.f32 0.0, %v2431
  %v2433 = vpop.f32.mrf.mxu0
  %2434 = vdwg.mxu0
  %v2435 = vpack.c.bf16 %v2404, %v2404
  %2437 = vrot.lane.b32.xlu0 %v2435, 32
  %v2438 = vpop.permute.xlu0 %2437
  %v2440 = vsel %vm187, %v2438, 0
  %2442 = vmatpush.bf16.msra.mxu0 0
  %2443 = vmatpush.bf16.msra.mxu0 0
  %2444 = vmatpush.bf16.msra.mxu0 0
  %2445 = vmatpush.bf16.msra.mxu0 0
  %2446 = vmatpush.bf16.msra.mxu0 0
  %2447 = vmatpush.bf16.msra.mxu0 0
  %2448 = vmatpush.bf16.msra.mxu0 %v1543
  %2449 = vmatpush.bf16.msra.mxu0 %v1542
  %2450 = vmatmul.bf16.gmra.mxu0 %v2440
  %v2451 = vpop.f32.mrf.mxu0
  %v2452 = vadd.f32 0.0, %v2451
  %v2453 = vpop.f32.mrf.mxu0
  %2454 = vdwg.mxu0
  %v2455 = vld [vmem:[%s236] sm:$0xff]
  %v2456 = vadd.f32 %v2455, %v2432
  %v2457 = vld [vmem:[%s231 + $0x8] sm:$0xff]
  %v2458 = vadd.f32 %v2457, %v2452
  %v2459 = vxor.u32 %v2456, 2147483648
  %v2460 = vmul.f32 %v2459, 1.442695
  %v2461 = vpow.pop %v2460
  %v2462 = vadd.f32 %v2461, 1.0
  %v2463 = vrcp.pop %v2462
  %v2464 = vmul.f32 %v2462, %v2463
  %v2465 = vsub.f32 1.0, %v2464
  %v2466 = vmul.f32 %v2463, %v2465
  %v2467 = vadd.f32 %v2463, %v2466
  %vm2468 = vweird.f32 %v2462
  %vm2469 = vweird.f32 %v2463
  %vm2470 = vmor %vm2468, %vm2469
  %v2471 = vsel %vm2470, %v2463, %v2467
  %v2472 = vand.u32 2147483647, %v2462
  %vm2473 = vcmp.eq.f32.partialorder %v2472, 8.507059e+37
  %v2474 = vand.u32 %v2462, 2147483648
  %v2475 = vor.u32 1.1754944e-38, %v2474
  %v2476 = vsel %vm2473, %v2475, %v2471
  %v2477 = vmul.f32 1.0, %v2476
  %v2478 = vtanh.pop %v2456
  %v2479 = vmul.f32 %v2477, %v2361
  %2481 = vrot.lane.b32.xlu0 %v2478, 64
  %v2482 = vpop.permute.xlu0 %2481
  %v2484 = vmul.f32 %v2477, %v2482
  %2486 = vrot.lane.b32.xlu0 %v2484, 32
  %v2487 = vpop.permute.xlu0 %2486
  %v2489 = vadd.f32 %v2479, %v2487
  %v2490 = vtanh.pop %v2489
  %2492 = vrot.lane.b32.xlu0 %v2490, 64
  %v2493 = vpop.permute.xlu0 %2492
  %v2495 = vmul.f32 %v2477, %v2493
  %v2496 = vxor.u32 %v2458, 2147483648
  %v2497 = vmul.f32 %v2496, 1.442695
  %v2498 = vpow.pop %v2497
  %v2499 = vadd.f32 %v2498, 1.0
  %v2500 = vrcp.pop %v2499
  %v2501 = vmul.f32 %v2499, %v2500
  %v2502 = vsub.f32 1.0, %v2501
  %v2503 = vmul.f32 %v2500, %v2502
  %v2504 = vadd.f32 %v2500, %v2503
  %vm2505 = vweird.f32 %v2499
  %vm2506 = vweird.f32 %v2500
  %vm2507 = vmor %vm2505, %vm2506
  %v2508 = vsel %vm2507, %v2500, %v2504
  %v2509 = vand.u32 2147483647, %v2499
  %vm2510 = vcmp.eq.f32.partialorder %v2509, 8.507059e+37
  %v2511 = vand.u32 %v2499, 2147483648
  %v2512 = vor.u32 1.1754944e-38, %v2511
  %v2513 = vsel %vm2510, %v2512, %v2508
  %v2514 = vmul.f32 1.0, %v2513
  %v2515 = vtanh.pop %v2458
  %v2516 = vmul.f32 %v2514, %v2398
  %2518 = vrot.lane.b32.xlu0 %v2515, 64
  %v2519 = vpop.permute.xlu0 %2518
  %v2521 = vmul.f32 %v2514, %v2519
  %2523 = vrot.lane.b32.xlu0 %v2521, 32
  %v2524 = vpop.permute.xlu0 %2523
  %v2526 = vadd.f32 %v2516, %v2524
  %v2527 = vtanh.pop %v2526
  %2529 = vrot.lane.b32.xlu0 %v2527, 64
  %v2530 = vpop.permute.xlu0 %2529
  %v2532 = vmul.f32 %v2514, %v2530
  %2534 = vrot.lane.b32.xlu0 %v2495, 32
  %v2535 = vpop.permute.xlu0 %2534
  %2537 = vst.msk [vmem:[%s1244] sm:$0xff] %vm187, %v2535
  %2539 = vrot.lane.b32.xlu0 %v2532, 32
  %v2540 = vpop.permute.xlu0 %2539
  %2542 = vst.msk [vmem:[#allocation4] sm:$0xff] %vm187, %v2540
  %v2543 = vld [vmem:[#allocation3] sm:$0xff]
  %v2544 = vld [vmem:[#allocation3 + $0x8] sm:$0xff]
  %v2545 = vld [vmem:[#allocation3 + $0x10] sm:$0xff]
  %v2546 = vld [vmem:[#allocation3 + $0x18] sm:$0xff]
  %v2547 = vld [vmem:[#allocation3 + $0x20] sm:$0xff]
  %v2548 = vld [vmem:[#allocation3 + $0x28] sm:$0xff]
  %v2549 = vld [vmem:[#allocation3 + $0x30] sm:$0xff]
  %v2550 = vld [vmem:[#allocation3 + $0x38] sm:$0xff]
  %v2551 = vtanh.pop %v2543
  %v2552 = vtanh.pop %v2544
  %v2553 = vtanh.pop %v2545
  %v2554 = vtanh.pop %v2546
  %v2555 = vtanh.pop %v2547
  %v2556 = vtanh.pop %v2548
  %v2557 = vtanh.pop %v2549
  %v2558 = vtanh.pop %v2550
  %v2559 = vld [vmem:[%s9] sm:$0xff]
  %v2560 = vld [vmem:[%s9 + $0x8] sm:$0xff]
  %v2561 = vld [vmem:[%s9 + $0x10] sm:$0xff]
  %v2562 = vld [vmem:[%s9 + $0x18] sm:$0xff]
  %v2563 = vld [vmem:[#allocation4] sm:$0xff]
  %v2564 = vld [vmem:[#allocation4 + $0x8] sm:$0xff]
  %v2565 = vld [vmem:[#allocation4 + $0x10] sm:$0xff]
  %v2566 = vld [vmem:[#allocation4 + $0x18] sm:$0xff]
  %v2567 = vld [vmem:[#allocation4 + $0x20] sm:$0xff]
  %v2568 = vld [vmem:[#allocation4 + $0x28] sm:$0xff]
  %v2569 = vld [vmem:[#allocation4 + $0x30] sm:$0xff]
  %v2570 = vld [vmem:[#allocation4 + $0x38] sm:$0xff]
  %v2571 = vtanh.pop %v2563
  %v2572 = vtanh.pop %v2564
  %v2573 = vtanh.pop %v2565
  %v2574 = vtanh.pop %v2566
  %v2575 = vtanh.pop %v2567
  %v2576 = vtanh.pop %v2568
  %v2577 = vtanh.pop %v2569
  %v2578 = vtanh.pop %v2570
  %v2579 = vld [vmem:[%s9 + $0x20] sm:$0xff]
  %v2580 = vld [vmem:[%s9 + $0x28] sm:$0xff]
  %v2581 = vld [vmem:[%s9 + $0x30] sm:$0xff]
  %v2582 = vld [vmem:[%s9 + $0x38] sm:$0xff]
  %v2584 = vsel %vm187, %v2571, 0
  %v2587 = vsel %vm187, %v2572, 0
  %v2590 = vsel %vm187, %v2573, 0
  %v2593 = vsel %vm187, %v2574, 0
  %v2596 = vsel %vm187, %v2575, 0
  %v2599 = vsel %vm187, %v2576, 0
  %v2602 = vsel %vm187, %v2577, 0
  %v2605 = vsel %vm187, %v2578, 0
  %2607 = vmatpush.msra.mxu0 0.0
  %2608 = vmatpush.msra.mxu0 0.0
  %2609 = vmatpush.msra.mxu0 0.0
  %2610 = vmatpush.msra.mxu0 0.0
  %2611 = vmatpush.msra.mxu0 0.0
  %2612 = vmatpush.msra.mxu0 0.0
  %2613 = vmatpush.msra.mxu0 0.0
  %2614 = vmatpush.msra.mxu0 0.0
  %2615 = vmatpush.msra.mxu0 0.0
  %2616 = vmatpush.msra.mxu0 0.0
  %2617 = vmatpush.msra.mxu0 0.0
  %2618 = vmatpush.msra.mxu0 0.0
  %2619 = vmatpush.msra.mxu0 %v2582
  %2620 = vmatpush.msra.mxu0 %v2581
  %2621 = vmatpush.msra.mxu0 %v2580
  %2622 = vmatpush.msra.mxu0 %v2579
  %2623 = vmatmul.f32.gmra.mxu0 %v2584
  %v2624 = vpop.f32.mrf.mxu0
  %v2625 = vadd.f32 0.0, %v2624
  %2626 = vmatmul.f32.gmra.mxu0 %v2587
  %v2627 = vpop.f32.mrf.mxu0
  %v2628 = vadd.f32 0.0, %v2627
  %2629 = vmatmul.f32.gmra.mxu0 %v2590
  %v2630 = vpop.f32.mrf.mxu0
  %v2631 = vadd.f32 0.0, %v2630
  %2632 = vmatmul.f32.gmra.mxu0 %v2593
  %v2633 = vpop.f32.mrf.mxu0
  %v2634 = vadd.f32 0.0, %v2633
  %2635 = vmatmul.f32.gmra.mxu0 %v2596
  %v2636 = vpop.f32.mrf.mxu0
  %v2637 = vadd.f32 0.0, %v2636
  %2638 = vmatmul.f32.gmra.mxu0 %v2599
  %v2639 = vpop.f32.mrf.mxu0
  %v2640 = vadd.f32 0.0, %v2639
  %2641 = vmatmul.f32.gmra.mxu0 %v2602
  %v2642 = vpop.f32.mrf.mxu0
  %v2643 = vadd.f32 0.0, %v2642
  %2644 = vmatmul.f32.gmra.mxu0 %v2605
  %v2645 = vpop.f32.mrf.mxu0
  %v2646 = vadd.f32 0.0, %v2645
  %2647 = vdwg.mxu0
  %v2649 = vsel %vm187, %v2551, 0
  %v2652 = vsel %vm187, %v2552, 0
  %v2655 = vsel %vm187, %v2553, 0
  %v2658 = vsel %vm187, %v2554, 0
  %v2661 = vsel %vm187, %v2555, 0
  %v2664 = vsel %vm187, %v2556, 0
  %v2667 = vsel %vm187, %v2557, 0
  %v2670 = vsel %vm187, %v2558, 0
  %2672 = vmatpush.msra.mxu0 0.0
  %2673 = vmatpush.msra.mxu0 0.0
  %2674 = vmatpush.msra.mxu0 0.0
  %2675 = vmatpush.msra.mxu0 0.0
  %2676 = vmatpush.msra.mxu0 0.0
  %2677 = vmatpush.msra.mxu0 0.0
  %2678 = vmatpush.msra.mxu0 0.0
  %2679 = vmatpush.msra.mxu0 0.0
  %2680 = vmatpush.msra.mxu0 0.0
  %2681 = vmatpush.msra.mxu0 0.0
  %2682 = vmatpush.msra.mxu0 0.0
  %2683 = vmatpush.msra.mxu0 0.0
  %2684 = vmatpush.msra.mxu0 %v2562
  %2685 = vmatpush.msra.mxu0 %v2561
  %2686 = vmatpush.msra.mxu0 %v2560
  %2687 = vmatpush.msra.mxu0 %v2559
  %2688 = vmatmul.f32.gmra.mxu0 %v2649
  %v2689 = vpop.f32.mrf.mxu0
  %v2690 = vadd.f32 %v2625, %v2689
  %2691 = vmatmul.f32.gmra.mxu0 %v2652
  %v2692 = vpop.f32.mrf.mxu0
  %v2693 = vadd.f32 %v2628, %v2692
  %2694 = vmatmul.f32.gmra.mxu0 %v2655
  %v2695 = vpop.f32.mrf.mxu0
  %v2696 = vadd.f32 %v2631, %v2695
  %2697 = vmatmul.f32.gmra.mxu0 %v2658
  %v2698 = vpop.f32.mrf.mxu0
  %v2699 = vadd.f32 %v2634, %v2698
  %2700 = vmatmul.f32.gmra.mxu0 %v2661
  %v2701 = vpop.f32.mrf.mxu0
  %v2702 = vadd.f32 %v2637, %v2701
  %2703 = vmatmul.f32.gmra.mxu0 %v2664
  %v2704 = vpop.f32.mrf.mxu0
  %v2705 = vadd.f32 %v2640, %v2704
  %2706 = vmatmul.f32.gmra.mxu0 %v2667
  %v2707 = vpop.f32.mrf.mxu0
  %v2708 = vadd.f32 %v2643, %v2707
  %2709 = vmatmul.f32.gmra.mxu0 %v2670
  %v2710 = vpop.f32.mrf.mxu0
  %v2711 = vadd.f32 %v2646, %v2710
  %2712 = vdwg.mxu0
  %vm2713 = vcmask 7168
  %2714 = vst.msk [vmem:[#allocation5] sm:$0xff] %vm2713, %v2690
  %2715 = vst.msk [vmem:[#allocation5 + $0x8] sm:$0xff] %vm2713, %v2693
  %2716 = vst.msk [vmem:[#allocation5 + $0x10] sm:$0xff] %vm2713, %v2696
  %2717 = vst.msk [vmem:[#allocation5 + $0x18] sm:$0xff] %vm2713, %v2699
  %2718 = vst.msk [vmem:[#allocation5 + $0x20] sm:$0xff] %vm2713, %v2702
  %2719 = vst.msk [vmem:[#allocation5 + $0x28] sm:$0xff] %vm2713, %v2705
  %2720 = vst.msk [vmem:[#allocation5 + $0x30] sm:$0xff] %vm2713, %v2708
  %2721 = vst.msk [vmem:[#allocation5 + $0x38] sm:$0xff] %vm2713, %v2711
  %v2722 = vld [vmem:[#allocation5] sm:$0xff]
  %s2723 = scalar_lea.vmem [#allocation5], 8
  %v2724 = vld [vmem:[%s2723] sm:$0xff]
  %v2725 = vmax.f32 %v2722, %v2724
  %s2726 = scalar_lea.vmem [#allocation5], 16
  %v2727 = vld [vmem:[%s2726] sm:$0xff]
  %v2728 = vmax.f32 %v2725, %v2727
  %s2729 = scalar_lea.vmem [#allocation5], 24
  %v2730 = vld [vmem:[%s2729] sm:$0xff]
  %v2731 = vmax.f32 %v2728, %v2730
  %s2732 = scalar_lea.vmem [#allocation5], 32
  %v2733 = vld [vmem:[%s2732] sm:$0xff]
  %v2734 = vmax.f32 %v2731, %v2733
  %s2735 = scalar_lea.vmem [#allocation5], 40
  %v2736 = vld [vmem:[%s2735] sm:$0xff]
  %v2737 = vmax.f32 %v2734, %v2736
  %s2738 = scalar_lea.vmem [#allocation5], 48
  %v2739 = vld [vmem:[%s2738] sm:$0xff]
  %v2740 = vmax.f32 %v2737, %v2739
  %s2741 = scalar_lea.vmem [#allocation5], 56
  %v2742 = vld [vmem:[%s2741] sm:$0xff]
  %v2743 = vmax.f32 %v2740, %v2742
  %v2744 = vsub.f32 %v2722, %v2743
  %v2745 = vmul.f32 %v2744, 1.442695
  %v2746 = vpow.pop %v2745
  %v2747 = vld [vmem:[#allocation3] sm:$0xff]
  %2749 = vset.pattern.permute.xlu0 0
  %2750 = vperm.xlu0 %2749, %v2746
  %v2751 = vpop.permute.xlu0 %2750
  %v2753 = vmul.f32 %v2751, %v2747
  %v2754 = vadd.f32 %v2753, 0.0
  %v2755 = vld [vmem:[#allocation4] sm:$0xff]
  %v2756 = vmul.f32 %v2751, %v2755
  %v2757 = vadd.f32 %v2756, 0.0
  %v2758 = vadd.f32 %v2746, 0.0
  %v2759 = vsub.f32 %v2724, %v2743
  %v2760 = vmul.f32 %v2759, 1.442695
  %v2761 = vpow.pop %v2760
  %v2762 = vld [vmem:[%s452] sm:$0xff]
  %2764 = vset.pattern.permute.xlu0 0
  %2765 = vperm.xlu0 %2764, %v2761
  %v2766 = vpop.permute.xlu0 %2765
  %v2768 = vmul.f32 %v2766, %v2762
  %v2769 = vadd.f32 %v2754, %v2768
  %v2770 = vld [vmem:[%s1120] sm:$0xff]
  %v2771 = vmul.f32 %v2766, %v2770
  %v2772 = vadd.f32 %v2757, %v2771
  %v2773 = vadd.f32 %v2758, %v2761
  %v2774 = vsub.f32 %v2727, %v2743
  %v2775 = vmul.f32 %v2774, 1.442695
  %v2776 = vpow.pop %v2775
  %v2777 = vld [vmem:[%s588] sm:$0xff]
  %2779 = vset.pattern.permute.xlu0 0
  %2780 = vperm.xlu0 %2779, %v2776
  %v2781 = vpop.permute.xlu0 %2780
  %v2783 = vmul.f32 %v2781, %v2777
  %v2784 = vadd.f32 %v2769, %v2783
  %v2785 = vld [vmem:[%s990] sm:$0xff]
  %v2786 = vmul.f32 %v2781, %v2785
  %v2787 = vadd.f32 %v2772, %v2786
  %v2788 = vadd.f32 %v2773, %v2776
  %v2789 = vsub.f32 %v2730, %v2743
  %v2790 = vmul.f32 %v2789, 1.442695
  %v2791 = vpow.pop %v2790
  %v2792 = vld [vmem:[%s724] sm:$0xff]
  %2794 = vset.pattern.permute.xlu0 0
  %2795 = vperm.xlu0 %2794, %v2791
  %v2796 = vpop.permute.xlu0 %2795
  %v2798 = vmul.f32 %v2796, %v2792
  %v2799 = vadd.f32 %v2784, %v2798
  %v2800 = vld [vmem:[%s860] sm:$0xff]
  %v2801 = vmul.f32 %v2796, %v2800
  %v2802 = vadd.f32 %v2787, %v2801
  %v2803 = vadd.f32 %v2788, %v2791
  %v2804 = vsub.f32 %v2733, %v2743
  %v2805 = vmul.f32 %v2804, 1.442695
  %v2806 = vpow.pop %v2805
  %v2807 = vld [vmem:[%s854] sm:$0xff]
  %2809 = vset.pattern.permute.xlu0 0
  %2810 = vperm.xlu0 %2809, %v2806
  %v2811 = vpop.permute.xlu0 %2810
  %v2813 = vmul.f32 %v2811, %v2807
  %v2814 = vadd.f32 %v2799, %v2813
  %v2815 = vld [vmem:[%s730] sm:$0xff]
  %v2816 = vmul.f32 %v2811, %v2815
  %v2817 = vadd.f32 %v2802, %v2816
  %v2818 = vadd.f32 %v2803, %v2806
  %v2819 = vsub.f32 %v2736, %v2743
  %v2820 = vmul.f32 %v2819, 1.442695
  %v2821 = vpow.pop %v2820
  %v2822 = vld [vmem:[%s984] sm:$0xff]
  %2824 = vset.pattern.permute.xlu0 0
  %2825 = vperm.xlu0 %2824, %v2821
  %v2826 = vpop.permute.xlu0 %2825
  %v2828 = vmul.f32 %v2826, %v2822
  %v2829 = vadd.f32 %v2814, %v2828
  %v2830 = vld [vmem:[%s594] sm:$0xff]
  %v2831 = vmul.f32 %v2826, %v2830
  %v2832 = vadd.f32 %v2817, %v2831
  %v2833 = vadd.f32 %v2818, %v2821
  %v2834 = vsub.f32 %v2739, %v2743
  %v2835 = vmul.f32 %v2834, 1.442695
  %v2836 = vpow.pop %v2835
  %v2837 = vld [vmem:[%s1114] sm:$0xff]
  %2839 = vset.pattern.permute.xlu0 0
  %2840 = vperm.xlu0 %2839, %v2836
  %v2841 = vpop.permute.xlu0 %2840
  %v2843 = vmul.f32 %v2841, %v2837
  %v2844 = vadd.f32 %v2829, %v2843
  %v2845 = vld [vmem:[%s458] sm:$0xff]
  %v2846 = vmul.f32 %v2841, %v2845
  %v2847 = vadd.f32 %v2832, %v2846
  %v2848 = vadd.f32 %v2833, %v2836
  %v2849 = vsub.f32 %v2742, %v2743
  %v2850 = vmul.f32 %v2849, 1.442695
  %v2851 = vpow.pop %v2850
  %v2852 = vld [vmem:[%s1244] sm:$0xff]
  %2854 = vset.pattern.permute.xlu0 0
  %2855 = vperm.xlu0 %2854, %v2851
  %v2856 = vpop.permute.xlu0 %2855
  %v2858 = vmul.f32 %v2856, %v2852
  %v2859 = vadd.f32 %v2844, %v2858
  %v2860 = vld [vmem:[%s322] sm:$0xff]
  %v2861 = vmul.f32 %v2856, %v2860
  %v2862 = vadd.f32 %v2847, %v2861
  %v2863 = vadd.f32 %v2848, %v2851
  %v2864 = vrcp.pop %v2863
  %v2865 = vmul.f32 %v2863, %v2864
  %v2866 = vsub.f32 1.0, %v2865
  %v2867 = vmul.f32 %v2864, %v2866
  %v2868 = vadd.f32 %v2864, %v2867
  %vm2869 = vweird.f32 %v2863
  %vm2870 = vweird.f32 %v2864
  %vm2871 = vmor %vm2869, %vm2870
  %v2872 = vsel %vm2871, %v2864, %v2868
  %v2873 = vand.u32 2147483647, %v2863
  %vm2874 = vcmp.eq.f32.partialorder %v2873, 8.507059e+37
  %v2875 = vand.u32 %v2863, 2147483648
  %v2876 = vor.u32 1.1754944e-38, %v2875
  %v2877 = vsel %vm2874, %v2876, %v2872
  %v2878 = vmul.f32 1.0, %v2877
  %2880 = vset.pattern.permute.xlu0 0
  %2881 = vperm.xlu0 %2880, %v2878
  %v2882 = vpop.permute.xlu0 %2881
  %v2884 = vmul.f32 %v2859, %v2882
  %v2885 = vld [vmem:[%s10] sm:$0xff]
  %v2886 = vld [vmem:[%s10 + $0x8] sm:$0xff]
  %v2887 = vld [vmem:[%s10 + $0x10] sm:$0xff]
  %v2888 = vld [vmem:[%s10 + $0x18] sm:$0xff]
  %v2889 = vmul.f32 %v2862, %v2882
  %v2890 = vld [vmem:[%s10 + $0x20] sm:$0xff]
  %v2891 = vld [vmem:[%s10 + $0x28] sm:$0xff]
  %v2892 = vld [vmem:[%s10 + $0x30] sm:$0xff]
  %v2893 = vld [vmem:[%s10 + $0x38] sm:$0xff]
  %v2895 = vsel %vm187, %v2889, 0
  %2897 = vmatpush.msra.mxu0 0.0
  %2898 = vmatpush.msra.mxu0 0.0
  %2899 = vmatpush.msra.mxu0 0.0
  %2900 = vmatpush.msra.mxu0 0.0
  %2901 = vmatpush.msra.mxu0 0.0
  %2902 = vmatpush.msra.mxu0 0.0
  %2903 = vmatpush.msra.mxu0 0.0
  %2904 = vmatpush.msra.mxu0 0.0
  %2905 = vmatpush.msra.mxu0 0.0
  %2906 = vmatpush.msra.mxu0 0.0
  %2907 = vmatpush.msra.mxu0 0.0
  %2908 = vmatpush.msra.mxu0 0.0
  %2909 = vmatpush.msra.mxu0 %v2893
  %2910 = vmatpush.msra.mxu0 %v2892
  %2911 = vmatpush.msra.mxu0 %v2891
  %2912 = vmatpush.msra.mxu0 %v2890
  %2913 = vmatmul.f32.gmra.mxu0 %v2895
  %v2914 = vpop.f32.mrf.mxu0
  %v2915 = vadd.f32 0.0, %v2914
  %2916 = vdwg.mxu0
  %v2918 = vsel %vm187, %v2884, 0
  %2920 = vmatpush.msra.mxu0 0.0
  %2921 = vmatpush.msra.mxu0 0.0
  %2922 = vmatpush.msra.mxu0 0.0
  %2923 = vmatpush.msra.mxu0 0.0
  %2924 = vmatpush.msra.mxu0 0.0
  %2925 = vmatpush.msra.mxu0 0.0
  %2926 = vmatpush.msra.mxu0 0.0
  %2927 = vmatpush.msra.mxu0 0.0
  %2928 = vmatpush.msra.mxu0 0.0
  %2929 = vmatpush.msra.mxu0 0.0
  %2930 = vmatpush.msra.mxu0 0.0
  %2931 = vmatpush.msra.mxu0 0.0
  %2932 = vmatpush.msra.mxu0 %v2888
  %2933 = vmatpush.msra.mxu0 %v2887
  %2934 = vmatpush.msra.mxu0 %v2886
  %2935 = vmatpush.msra.mxu0 %v2885
  %2936 = vmatmul.f32.gmra.mxu0 %v2918
  %v2937 = vpop.f32.mrf.mxu0
  %v2938 = vadd.f32 %v2915, %v2937
  %2939 = vdwg.mxu0
  %v2940 = vld [vmem:[%s11] sm:$0x1]
  %v2942 = vperm.slane %v2940, 0
  %v2944 = vadd.f32 %v2938, %v2942
  %2945 = vst.msk [vmem:[%s12] sm:$0xff] %vm70, %v2944
  // Predicated region
  $region50: #{att_blstm_forward.1} parent=0 // pred_check
    _
  $region51: #{att_blstm_forward.1} parent=0 // pred_check_branch
    %2947 = sbr.rel (0) target = $region53
  $region52: #{att_blstm_forward.1} parent=0 // pred_region
    _
  $region53: #{att_blstm_forward.1} parent=0 // pred_fallthru
    _
  // Predicated region
  $region54: #{att_blstm_forward.1} parent=0 // pred_check
    _
  $region55: #{att_blstm_forward.1} parent=0 // pred_check_branch
    %2949 = sbr.rel (0) target = $region57
  $region56: #{att_blstm_forward.1} parent=0 // pred_region
    _
  $region57: #{att_blstm_forward.1} parent=0 // pred_fallthru
    _

</llo_original>
